<compile_context>
chip_gen: v7x
topology: tpu7x:2x2x1
jax: 0.10.0
libtpu: 0.0.40
codegen_flags: <defaults>
</compile_context>

<pallas_src>
import jax
import jax.numpy as jnp
from jax.experimental import pallas as pl
from jax.experimental.pallas import tpu as pltpu

KH = KW = 3
KK = KH * KW              # 9 kernel taps
PAD = 1                   # stride=1, dilation=1, padding=1 (as in the module)
BN_EPS = 1e-3
VMEM_LIMIT = 32 * 1024 * 1024


# --------------------------- Pallas kernels ---------------------------------

def _offset_conv_kernel(p_ref, w_ref, b_ref, oy_ref, ox_ref, om_ref):
    # Regular 3x3 offset/mask conv as a GEMM over bf16 im2col rows (f32 accumulate).
    # Weight columns were permuted at trace time to [y(9) | x(9) | mask(9)], so the
    # sigmoid touches only the trailing mask block (no iota/where, no strided slices).
    y = jnp.dot(p_ref[...].astype(jnp.float32), w_ref[...],
                preferred_element_type=jnp.float32) + b_ref[...]
    oy_ref[...] = y[:, 0:KK]
    ox_ref[...] = y[:, KK:2 * KK]
    om_ref[...] = jax.nn.sigmoid(y[:, 2 * KK:3 * KK])


def _dcn_bn_relu_kernel(v_ref, w_ref, e_ref, wt_ref, sh_ref, o_ref):
    # v_ref : (4, tm, 9*Cin) bf16  gathered bilinear corners
    # w_ref : (4, tm, 9)     f32   bilinear weights (mask + border validity folded in)
    # e_ref : (9, 9*Cin)     f32   0/1 expansion matrix: (w @ e)[m, k*Cin+c] == w[m, k]
    # wt_ref: (9*Cin, Cout)  f32   DCN weight with BN scale folded in
    # sh_ref: (1, Cout)      f32   conv bias * bn_scale + bn_shift, folded together
    def corner(c):
        # Expand the 9 per-tap weights across Cin with a tiny MXU matmul (VMEM-local,
        # so only (4, tm, 9) is streamed from HBM). Combine kept in f32 (v5e-safe).
        w_exp = jnp.dot(w_ref[c], e_ref[...], preferred_element_type=jnp.float32)
        return w_exp * v_ref[c].astype(jnp.float32)

    col = corner(0) + corner(1) + corner(2) + corner(3)               # (tm, 9*Cin) f32
    acc = jnp.dot(col, wt_ref[...], preferred_element_type=jnp.float32)
    o_ref[...] = jnp.maximum(acc + sh_ref[...], 0.0)                  # folded BN+bias, ReLU


# --------------------------- pallas_call wrappers ----------------------------

def _offset_conv_gemm(patches, w, b, tm):
    Mp, KC = patches.shape
    N = w.shape[1]
    return pl.pallas_call(
        _offset_conv_kernel,
        out_shape=(jax.ShapeDtypeStruct((Mp, KK), jnp.float32),
                   jax.ShapeDtypeStruct((Mp, KK), jnp.float32),
                   jax.ShapeDtypeStruct((Mp, KK), jnp.float32)),
        grid_spec=pltpu.PrefetchScalarGridSpec(
            num_scalar_prefetch=0, grid=(Mp // tm,),
            in_specs=[pl.BlockSpec((tm, KC), lambda i: (i, 0)),
                      pl.BlockSpec((KC, N), lambda i: (0, 0)),
                      pl.BlockSpec((1, N), lambda i: (0, 0))],
            out_specs=[pl.BlockSpec((tm, KK), lambda i: (i, 0)),
                       pl.BlockSpec((tm, KK), lambda i: (i, 0)),
                       pl.BlockSpec((tm, KK), lambda i: (i, 0))]),
        compiler_params=pltpu.CompilerParams(
            dimension_semantics=("parallel",),
            vmem_limit_bytes=VMEM_LIMIT),
    )(patches, w, b)


def _dcn_gemm(v4, w4, expand, wt, shift, tm):
    _, Mp, KC = v4.shape
    Cout = wt.shape[1]
    return pl.pallas_call(
        _dcn_bn_relu_kernel,
        out_shape=jax.ShapeDtypeStruct((Mp, Cout), jnp.float32),
        grid_spec=pltpu.PrefetchScalarGridSpec(
            num_scalar_prefetch=0, grid=(Mp // tm,),
            in_specs=[pl.BlockSpec((4, tm, KC), lambda i: (0, i, 0)),
                      pl.BlockSpec((4, tm, KK), lambda i: (0, i, 0)),
                      pl.BlockSpec((KK, KC), lambda i: (0, 0)),
                      pl.BlockSpec((KC, Cout), lambda i: (0, 0)),
                      pl.BlockSpec((1, Cout), lambda i: (0, 0))],
            out_specs=pl.BlockSpec((tm, Cout), lambda i: (i, 0))),
        compiler_params=pltpu.CompilerParams(
            dimension_semantics=("parallel",),
            vmem_limit_bytes=VMEM_LIMIT),
    )(v4, w4, expand, wt, shift)


# --------------------------- helpers ------------------------------------------

def _pick_tm(M, target=512, min_grid=2):
    # Big tiles amortize the ~0.35us per-grid-step overhead; keep at least
    # `min_grid` steps so dimension_semantics=("parallel",) can split work
    # across v7x's two TensorCores.
    tm = min(target, max(8, M // min_grid))
    tm = max(8, (tm // 8) * 8)
    return tm


def _pad_rows(a, Mp, axis):
    pad = Mp - a.shape[axis]
    if pad == 0:
        return a
    widths = [(0, 0)] * a.ndim
    widths[axis] = (0, pad)
    return jnp.pad(a, widths)


# --------------------------- forward pass ------------------------------------

def modulated_deform_conv_block(x_nchw, params, tm_target=512):
    B, Cin, H, W = x_nchw.shape
    Cout = params["w_dcn"].shape[0]
    KC = KK * Cin
    M = B * H * W
    tm = _pick_tm(M, tm_target)
    Mp = -(-M // tm) * tm                      # pad rows -> any B*H*W works

    x = jnp.transpose(x_nchw, (0, 2, 3, 1)).astype(jnp.float32)     # NHWC internally
    x_bf = x.astype(jnp.bfloat16)              # bf16 for the big HBM streams

    # ---- im2col for the regular 3x3 offset/mask conv (stride=1, pad=1) ----
    # NOTE(perf): still materialized as XLA glue (bf16 halves the bytes); removing it
    # entirely needs halo'd overlapping blocks / manual DMA for a direct-conv kernel.
    xp = jnp.pad(x_bf, ((0, 0), (PAD, PAD), (PAD, PAD), (0, 0)))
    patches = jnp.stack([xp[:, i:i + H, j:j + W, :]
                         for i in range(KH) for j in range(KW)], axis=3)  # (B,H,W,9,Cin)
    patches = _pad_rows(patches.reshape(M, KC), Mp, 0)

    # ---- offset/mask conv weight: permute output columns to [y | x | mask] ----
    # mmcv layout: offset channel 2k = y_k, 2k+1 = x_k (over cat(o1,o2)), mask = 18+k.
    perm = jnp.concatenate([jnp.arange(0, 2 * KK, 2),
                            jnp.arange(1, 2 * KK, 2),
                            jnp.arange(2 * KK, 3 * KK)])
    w_om = params["w_om"][perm]                                   # (27, Cin, 3, 3)
    b_om = params["b_om"][perm].reshape(1, 3 * KK)
    w_om = jnp.transpose(w_om, (2, 3, 1, 0)).reshape(KC, 3 * KK)  # rows: k-major, c-minor

    # ---- Pallas kernel 1: offset/mask conv GEMM (+sigmoid on mask block) ----
    oy, ox, om = _offset_conv_gemm(patches, w_om, b_om, tm)
    off_y = oy[:M].reshape(B, H, W, KK)
    off_x = ox[:M].reshape(B, H, W, KK)
    mask = om[:M].reshape(B, H, W, KK)         # sigmoid already applied in-kernel

    # ---- bilinear sampling positions ----
    hh = jnp.arange(H, dtype=jnp.float32)
    ww = jnp.arange(W, dtype=jnp.float32)
    ki = jnp.arange(KH, dtype=jnp.float32)
    kj = jnp.arange(KW, dtype=jnp.float32)
    base_y = (hh[:, None, None] - PAD + ki[None, :, None]
              + 0.0 * kj[None, None, :]).reshape(H, KK)
    base_x = (ww[:, None, None] - PAD + 0.0 * ki[None, :, None]
              + kj[None, None, :]).reshape(W, KK)
    py = base_y[None, :, None, :] + off_y                         # (B,H,W,9)
    px = base_x[None, None, :, :] + off_x

    y0 = jnp.floor(py)
    x0 = jnp.floor(px)
    ly = py - y0
    lx = px - x0
    y0i = y0.astype(jnp.int32)
    x0i = x0.astype(jnp.int32)
    y1i = y0i + 1
    x1i = x0i + 1

    # TODO(synk): the data-dependent corner gather has no clean Pallas/TPU
    # equivalent (would need per-element DMA or one-hot matmuls); it stays as XLA
    # glue, while the bilinear combine + modulation + GEMM + BN + ReLU are fused
    # in Pallas kernel 2.
    x_flat = x_bf.reshape(B, H * W, Cin)

    def gather(yi, xi):
        valid = ((yi >= 0) & (yi < H) & (xi >= 0) & (xi < W)).astype(jnp.float32)
        yc = jnp.clip(yi, 0, H - 1)
        xc = jnp.clip(xi, 0, W - 1)
        idx = (yc * W + xc).reshape(B, H * W * KK)
        vals = jnp.take_along_axis(x_flat, idx[:, :, None], axis=1)
        return vals.reshape(B, H, W, KK, Cin), valid

    v00, m00 = gather(y0i, x0i)
    v01, m01 = gather(y0i, x1i)
    v10, m10 = gather(y1i, x0i)
    v11, m11 = gather(y1i, x1i)

    # Bilinear weights with border validity AND the modulation mask folded in;
    # kept at (B,H,W,9) — broadcast over Cin happens inside kernel 2 (in VMEM).
    w00 = (1.0 - ly) * (1.0 - lx) * m00 * mask
    w01 = (1.0 - ly) * lx * m01 * mask
    w10 = ly * (1.0 - lx) * m10 * mask
    w11 = ly * lx * m11 * mask

    v4 = jnp.stack([v.reshape(M, KC) for v in (v00, v01, v10, v11)], axis=0)  # (4,M,KC) bf16
    w4 = jnp.stack([w.reshape(M, KK) for w in (w00, w01, w10, w11)], axis=0)  # (4,M,9)  f32
    v4 = _pad_rows(v4, Mp, 1)
    w4 = _pad_rows(w4, Mp, 1)

    # 0/1 expansion matrix: (w4 @ expand)[m, k*Cin + c] == w4[m, k]  (k-major, c-minor)
    expand = (jnp.arange(KC)[None, :] // Cin
              == jnp.arange(KK)[:, None]).astype(jnp.float32)                 # (9, 9*Cin)

    # ---- fold conv bias + BatchNorm(eval, eps=1e-3) into the GEMM weight/shift ----
    bn_scale = params["bn_gamma"] * jax.lax.rsqrt(params["bn_var"] + BN_EPS)
    wt = jnp.transpose(params["w_dcn"], (2, 3, 1, 0)).reshape(KC, Cout)
    wt = wt * bn_scale[None, :]
    shift = ((params["b_dcn"] - params["bn_mean"]) * bn_scale
             + params["bn_beta"]).reshape(1, Cout)

    # ---- Pallas kernel 2: bilinear combine + DCN GEMM + folded BN/bias + ReLU ----
    out = _dcn_gemm(v4, w4, expand, wt, shift, tm)

    out = out[:M].reshape(B, H, W, Cout)
    return jnp.transpose(out, (0, 3, 1, 2))    # back to NCHW


# --------------------------- main --------------------------------------------

if __name__ == "__main__":
    key = jax.random.PRNGKey(0)
    B, Cin, Cout, H, W = 2, 4, 8, 16, 16
    ks = jax.random.split(key, 8)

    x = jax.random.normal(ks[0], (B, Cin, H, W), jnp.float32)

    params = {
        # NOTE: init_offset() zeroes these in the module; small deterministic
        # non-zero values are used here so the deformable/bilinear path is
        # actually exercised (forward semantics are identical).
        "w_om": 0.05 * jax.random.normal(ks[1], (3 * KK, Cin, KH, KW), jnp.float32),
        "b_om": 0.05 * jax.random.normal(ks[2], (3 * KK,), jnp.float32),
        # ModulatedDeformConv2d weight/bias (bias=True default in mmcv).
        "w_dcn": 0.1 * jax.random.normal(ks[3], (Cout, Cin, KH, KW), jnp.float32),
        "b_dcn": 0.1 * jax.random.normal(ks[4], (Cout,), jnp.float32),
        # BatchNorm2d(eps=1e-3), inference mode (running stats).
        "bn_gamma": 1.0 + 0.1 * jax.random.normal(ks[5], (Cout,), jnp.float32),
        "bn_beta": 0.1 * jax.random.normal(ks[6], (Cout,), jnp.float32),
        "bn_mean": 0.1 * jax.random.normal(ks[7], (Cout,), jnp.float32),
        "bn_var": jnp.ones((Cout,), jnp.float32),
    }

    fwd = jax.jit(lambda a: modulated_deform_conv_block(a, params))
    out = fwd(x)
    jax.block_until_ready(out)

    assert out.shape == (B, Cout, H, W)
    assert bool(jnp.all(jnp.isfinite(out)))
    assert bool(jnp.all(out >= 0.0))  # ReLU output
    print("KERNEL_OK")
</pallas_src>

<mosaic_0001>
module attributes {stable_mosaic.version = 11 : i64} {
  func.func @_offset_conv_kernel(%arg0: i32, %arg1: memref<256x36xbf16, #tpu.memory_space<vmem>>, %arg2: memref<36x27xf32, #tpu.memory_space<vmem>>, %arg3: memref<1x27xf32, #tpu.memory_space<vmem>>, %arg4: memref<256x9xf32, #tpu.memory_space<vmem>>, %arg5: memref<256x9xf32, #tpu.memory_space<vmem>>, %arg6: memref<256x9xf32, #tpu.memory_space<vmem>>) attributes {dimension_semantics = [#tpu.dimension_semantics<parallel>], iteration_bounds = array<i64: 2>, scalar_prefetch = 0 : i64, scratch_operands = 0 : i64, tpu.core_type = #tpu.core_type<tc>, window_params = [{transform_indices = @transform_0, window_bounds = array<i64: 256, 36>}, {pipeline_mode = #tpu.pipeline_mode<synchronous>, transform_indices = @transform_1, window_bounds = array<i64: 36, 27>}, {pipeline_mode = #tpu.pipeline_mode<synchronous>, transform_indices = @transform_2, window_bounds = array<i64: 1, 27>}, {transform_indices = @transform_3, window_bounds = array<i64: 256, 9>}, {transform_indices = @transform_4, window_bounds = array<i64: 256, 9>}, {transform_indices = @transform_5, window_bounds = array<i64: 256, 9>}]} {
    %c0 = arith.constant 0 : index
    %c0_0 = arith.constant 0 : index
    %0 = vector.load %arg1[%c0, %c0_0] : memref<256x36xbf16, #tpu.memory_space<vmem>>, vector<256x36xbf16>
    %1 = arith.extf %0 : vector<256x36xbf16> to vector<256x36xf32>
    %c0_1 = arith.constant 0 : index
    %c0_2 = arith.constant 0 : index
    %2 = vector.load %arg2[%c0_1, %c0_2] : memref<36x27xf32, #tpu.memory_space<vmem>>, vector<36x27xf32>
    %cst = arith.constant dense<0.000000e+00> : vector<256x27xf32>
    %3 = tpu.matmul %1, %2, %cst {dimension_numbers = #tpu.dot_dimension_numbers<[1], [0], [0], [1], [0, 0, 1, 1], [], []>} : vector<256x36xf32>, vector<36x27xf32>, vector<256x27xf32> -> vector<256x27xf32>
    %c0_3 = arith.constant 0 : index
    %c0_4 = arith.constant 0 : index
    %4 = vector.load %arg3[%c0_3, %c0_4] : memref<1x27xf32, #tpu.memory_space<vmem>>, vector<1x27xf32>
    %5 = vector.broadcast %4 : vector<1x27xf32> to vector<256x27xf32>
    %6 = arith.addf %3, %5 : vector<256x27xf32>
    %7 = vector.extract_strided_slice %6 {offsets = [0, 0], sizes = [256, 9], strides = [1, 1]} : vector<256x27xf32> to vector<256x9xf32>
    %c0_5 = arith.constant 0 : index
    %c0_6 = arith.constant 0 : index
    %8 = vector.load %arg4[%c0_5, %c0_6] : memref<256x9xf32, #tpu.memory_space<vmem>>, vector<256x9xf32>
    tpu.vector_store %arg4[%c0_5, %c0_6], %7 {strides = array<i32>} : memref<256x9xf32, #tpu.memory_space<vmem>>, vector<256x9xf32>,
    %9 = vector.extract_strided_slice %6 {offsets = [0, 9], sizes = [256, 9], strides = [1, 1]} : vector<256x27xf32> to vector<256x9xf32>
    %c0_7 = arith.constant 0 : index
    %c0_8 = arith.constant 0 : index
    %10 = vector.load %arg5[%c0_7, %c0_8] : memref<256x9xf32, #tpu.memory_space<vmem>>, vector<256x9xf32>
    tpu.vector_store %arg5[%c0_7, %c0_8], %9 {strides = array<i32>} : memref<256x9xf32, #tpu.memory_space<vmem>>, vector<256x9xf32>,
    %11 = vector.extract_strided_slice %6 {offsets = [0, 18], sizes = [256, 9], strides = [1, 1]} : vector<256x27xf32> to vector<256x9xf32>
    %12 = arith.negf %11 : vector<256x9xf32>
    %13 = math.exp %12 : vector<256x9xf32>
    %cst_9 = arith.constant 1.000000e+00 : f32
    %14 = vector.broadcast %cst_9 : f32 to vector<256x9xf32>
    %15 = arith.addf %14, %13 : vector<256x9xf32>
    %16 = arith.divf %14, %15 : vector<256x9xf32>
    %c0_10 = arith.constant 0 : index
    %c0_11 = arith.constant 0 : index
    %17 = vector.load %arg6[%c0_10, %c0_11] : memref<256x9xf32, #tpu.memory_space<vmem>>, vector<256x9xf32>
    tpu.vector_store %arg6[%c0_10, %c0_11], %16 {strides = array<i32>} : memref<256x9xf32, #tpu.memory_space<vmem>>, vector<256x9xf32>,
    return
  }
  func.func @transform_0(%arg0: i32) -> (i32, i32) {
    %c0_i32 = arith.constant 0 : i32
    %c0_i32_0 = arith.constant 0 : i32
    return %arg0, %c0_i32 : i32, i32
  }
  func.func @transform_1(%arg0: i32) -> (i32, i32) {
    %c0_i32 = arith.constant 0 : i32
    %c0_i32_0 = arith.constant 0 : i32
    %c0_i32_1 = arith.constant 0 : i32
    return %c0_i32, %c0_i32_0 : i32, i32
  }
  func.func @transform_2(%arg0: i32) -> (i32, i32) {
    %c0_i32 = arith.constant 0 : i32
    %c0_i32_0 = arith.constant 0 : i32
    %c0_i32_1 = arith.constant 0 : i32
    return %c0_i32, %c0_i32_0 : i32, i32
  }
  func.func @transform_3(%arg0: i32) -> (i32, i32) {
    %c0_i32 = arith.constant 0 : i32
    %c0_i32_0 = arith.constant 0 : i32
    return %arg0, %c0_i32 : i32, i32
  }
  func.func @transform_4(%arg0: i32) -> (i32, i32) {
    %c0_i32 = arith.constant 0 : i32
    %c0_i32_0 = arith.constant 0 : i32
    return %arg0, %c0_i32 : i32, i32
  }
  func.func @transform_5(%arg0: i32) -> (i32, i32) {
    %c0_i32 = arith.constant 0 : i32
    %c0_i32_0 = arith.constant 0 : i32
    return %arg0, %c0_i32 : i32, i32
  }
}

module attributes {stable_mosaic.version = 11 : i64} {
  func.func @_dcn_bn_relu_kernel(%arg0: i32, %arg1: memref<4x256x36xbf16, #tpu.memory_space<vmem>>, %arg2: memref<4x256x9xf32, #tpu.memory_space<vmem>>, %arg3: memref<9x36xf32, #tpu.memory_space<vmem>>, %arg4: memref<36x8xf32, #tpu.memory_space<vmem>>, %arg5: memref<1x8xf32, #tpu.memory_space<vmem>>, %arg6: memref<256x8xf32, #tpu.memory_space<vmem>>) attributes {dimension_semantics = [#tpu.dimension_semantics<parallel>], iteration_bounds = array<i64: 2>, scalar_prefetch = 0 : i64, scratch_operands = 0 : i64, tpu.core_type = #tpu.core_type<tc>, window_params = [{transform_indices = @transform_0, window_bounds = array<i64: 4, 256, 36>}, {transform_indices = @transform_1, window_bounds = array<i64: 4, 256, 9>}, {pipeline_mode = #tpu.pipeline_mode<synchronous>, transform_indices = @transform_2, window_bounds = array<i64: 9, 36>}, {pipeline_mode = #tpu.pipeline_mode<synchronous>, transform_indices = @transform_3, window_bounds = array<i64: 36, 8>}, {pipeline_mode = #tpu.pipeline_mode<synchronous>, transform_indices = @transform_4, window_bounds = array<i64: 1, 8>}, {transform_indices = @transform_5, window_bounds = array<i64: 256, 8>}]} {
    %c0 = arith.constant 0 : index
    %c0_0 = arith.constant 0 : index
    %c0_1 = arith.constant 0 : index
    %0 = vector.load %arg2[%c0, %c0_0, %c0_1] : memref<4x256x9xf32, #tpu.memory_space<vmem>>, vector<1x256x9xf32>
    %1 = vector.shape_cast %0 : vector<1x256x9xf32> to vector<256x9xf32>
    %c0_2 = arith.constant 0 : index
    %c0_3 = arith.constant 0 : index
    %2 = vector.load %arg3[%c0_2, %c0_3] : memref<9x36xf32, #tpu.memory_space<vmem>>, vector<9x36xf32>
    %cst = arith.constant dense<0.000000e+00> : vector<256x36xf32>
    %3 = tpu.matmul %1, %2, %cst {dimension_numbers = #tpu.dot_dimension_numbers<[1], [0], [0], [1], [0, 0, 1, 1], [], []>} : vector<256x9xf32>, vector<9x36xf32>, vector<256x36xf32> -> vector<256x36xf32>
    %c0_4 = arith.constant 0 : index
    %c0_5 = arith.constant 0 : index
    %c0_6 = arith.constant 0 : index
    %4 = vector.load %arg1[%c0_4, %c0_5, %c0_6] : memref<4x256x36xbf16, #tpu.memory_space<vmem>>, vector<1x256x36xbf16>
    %5 = vector.shape_cast %4 : vector<1x256x36xbf16> to vector<256x36xbf16>
    %6 = arith.extf %5 : vector<256x36xbf16> to vector<256x36xf32>
    %7 = arith.mulf %3, %6 : vector<256x36xf32>
    %c1 = arith.constant 1 : index
    %c0_7 = arith.constant 0 : index
    %c0_8 = arith.constant 0 : index
    %8 = vector.load %arg2[%c1, %c0_7, %c0_8] : memref<4x256x9xf32, #tpu.memory_space<vmem>>, vector<1x256x9xf32>
    %9 = vector.shape_cast %8 : vector<1x256x9xf32> to vector<256x9xf32>
    %c0_9 = arith.constant 0 : index
    %c0_10 = arith.constant 0 : index
    %10 = vector.load %arg3[%c0_9, %c0_10] : memref<9x36xf32, #tpu.memory_space<vmem>>, vector<9x36xf32>
    %cst_11 = arith.constant dense<0.000000e+00> : vector<256x36xf32>
    %11 = tpu.matmul %9, %10, %cst_11 {dimension_numbers = #tpu.dot_dimension_numbers<[1], [0], [0], [1], [0, 0, 1, 1], [], []>} : vector<256x9xf32>, vector<9x36xf32>, vector<256x36xf32> -> vector<256x36xf32>
    %c1_12 = arith.constant 1 : index
    %c0_13 = arith.constant 0 : index
    %c0_14 = arith.constant 0 : index
    %12 = vector.load %arg1[%c1_12, %c0_13, %c0_14] : memref<4x256x36xbf16, #tpu.memory_space<vmem>>, vector<1x256x36xbf16>
    %13 = vector.shape_cast %12 : vector<1x256x36xbf16> to vector<256x36xbf16>
    %14 = arith.extf %13 : vector<256x36xbf16> to vector<256x36xf32>
    %15 = arith.mulf %11, %14 : vector<256x36xf32>
    %16 = arith.addf %7, %15 : vector<256x36xf32>
    %c2 = arith.constant 2 : index
    %c0_15 = arith.constant 0 : index
    %c0_16 = arith.constant 0 : index
    %17 = vector.load %arg2[%c2, %c0_15, %c0_16] : memref<4x256x9xf32, #tpu.memory_space<vmem>>, vector<1x256x9xf32>
    %18 = vector.shape_cast %17 : vector<1x256x9xf32> to vector<256x9xf32>
    %c0_17 = arith.constant 0 : index
    %c0_18 = arith.constant 0 : index
    %19 = vector.load %arg3[%c0_17, %c0_18] : memref<9x36xf32, #tpu.memory_space<vmem>>, vector<9x36xf32>
    %cst_19 = arith.constant dense<0.000000e+00> : vector<256x36xf32>
    %20 = tpu.matmul %18, %19, %cst_19 {dimension_numbers = #tpu.dot_dimension_numbers<[1], [0], [0], [1], [0, 0, 1, 1], [], []>} : vector<256x9xf32>, vector<9x36xf32>, vector<256x36xf32> -> vector<256x36xf32>
    %c2_20 = arith.constant 2 : index
    %c0_21 = arith.constant 0 : index
    %c0_22 = arith.constant 0 : index
    %21 = vector.load %arg1[%c2_20, %c0_21, %c0_22] : memref<4x256x36xbf16, #tpu.memory_space<vmem>>, vector<1x256x36xbf16>
    %22 = vector.shape_cast %21 : vector<1x256x36xbf16> to vector<256x36xbf16>
    %23 = arith.extf %22 : vector<256x36xbf16> to vector<256x36xf32>
    %24 = arith.mulf %20, %23 : vector<256x36xf32>
    %25 = arith.addf %16, %24 : vector<256x36xf32>
    %c3 = arith.constant 3 : index
    %c0_23 = arith.constant 0 : index
    %c0_24 = arith.constant 0 : index
    %26 = vector.load %arg2[%c3, %c0_23, %c0_24] : memref<4x256x9xf32, #tpu.memory_space<vmem>>, vector<1x256x9xf32>
    %27 = vector.shape_cast %26 : vector<1x256x9xf32> to vector<256x9xf32>
    %c0_25 = arith.constant 0 : index
    %c0_26 = arith.constant 0 : index
    %28 = vector.load %arg3[%c0_25, %c0_26] : memref<9x36xf32, #tpu.memory_space<vmem>>, vector<9x36xf32>
    %cst_27 = arith.constant dense<0.000000e+00> : vector<256x36xf32>
    %29 = tpu.matmul %27, %28, %cst_27 {dimension_numbers = #tpu.dot_dimension_numbers<[1], [0], [0], [1], [0, 0, 1, 1], [], []>} : vector<256x9xf32>, vector<9x36xf32>, vector<256x36xf32> -> vector<256x36xf32>
    %c3_28 = arith.constant 3 : index
    %c0_29 = arith.constant 0 : index
    %c0_30 = arith.constant 0 : index
    %30 = vector.load %arg1[%c3_28, %c0_29, %c0_30] : memref<4x256x36xbf16, #tpu.memory_space<vmem>>, vector<1x256x36xbf16>
    %31 = vector.shape_cast %30 : vector<1x256x36xbf16> to vector<256x36xbf16>
    %32 = arith.extf %31 : vector<256x36xbf16> to vector<256x36xf32>
    %33 = arith.mulf %29, %32 : vector<256x36xf32>
    %34 = arith.addf %25, %33 : vector<256x36xf32>
    %c0_31 = arith.constant 0 : index
    %c0_32 = arith.constant 0 : index
    %35 = vector.load %arg4[%c0_31, %c0_32] : memref<36x8xf32, #tpu.memory_space<vmem>>, vector<36x8xf32>
    %cst_33 = arith.constant dense<0.000000e+00> : vector<256x8xf32>
    %36 = tpu.matmul %34, %35, %cst_33 {dimension_numbers = #tpu.dot_dimension_numbers<[1], [0], [0], [1], [0, 0, 1, 1], [], []>} : vector<256x36xf32>, vector<36x8xf32>, vector<256x8xf32> -> vector<256x8xf32>
    %c0_34 = arith.constant 0 : index
    %c0_35 = arith.constant 0 : index
    %37 = vector.load %arg5[%c0_34, %c0_35] : memref<1x8xf32, #tpu.memory_space<vmem>>, vector<1x8xf32>
    %38 = vector.broadcast %37 : vector<1x8xf32> to vector<256x8xf32>
    %39 = arith.addf %36, %38 : vector<256x8xf32>
    %cst_36 = arith.constant 0.000000e+00 : f32
    %40 = vector.broadcast %cst_36 : f32 to vector<256x8xf32>
    %41 = arith.maximumf %39, %40 : vector<256x8xf32>
    %c0_37 = arith.constant 0 : index
    %c0_38 = arith.constant 0 : index
    %42 = vector.load %arg6[%c0_37, %c0_38] : memref<256x8xf32, #tpu.memory_space<vmem>>, vector<256x8xf32>
    tpu.vector_store %arg6[%c0_37, %c0_38], %41 {strides = array<i32>} : memref<256x8xf32, #tpu.memory_space<vmem>>, vector<256x8xf32>,
    return
  }
  func.func @transform_0(%arg0: i32) -> (i32, i32, i32) {
    %c0_i32 = arith.constant 0 : i32
    %c0_i32_0 = arith.constant 0 : i32
    %c0_i32_1 = arith.constant 0 : i32
    return %c0_i32, %arg0, %c0_i32_0 : i32, i32, i32
  }
  func.func @transform_1(%arg0: i32) -> (i32, i32, i32) {
    %c0_i32 = arith.constant 0 : i32
    %c0_i32_0 = arith.constant 0 : i32
    %c0_i32_1 = arith.constant 0 : i32
    return %c0_i32, %arg0, %c0_i32_0 : i32, i32, i32
  }
  func.func @transform_2(%arg0: i32) -> (i32, i32) {
    %c0_i32 = arith.constant 0 : i32
    %c0_i32_0 = arith.constant 0 : i32
    %c0_i32_1 = arith.constant 0 : i32
    return %c0_i32, %c0_i32_0 : i32, i32
  }
  func.func @transform_3(%arg0: i32) -> (i32, i32) {
    %c0_i32 = arith.constant 0 : i32
    %c0_i32_0 = arith.constant 0 : i32
    %c0_i32_1 = arith.constant 0 : i32
    return %c0_i32, %c0_i32_0 : i32, i32
  }
  func.func @transform_4(%arg0: i32) -> (i32, i32) {
    %c0_i32 = arith.constant 0 : i32
    %c0_i32_0 = arith.constant 0 : i32
    %c0_i32_1 = arith.constant 0 : i32
    return %c0_i32, %c0_i32_0 : i32, i32
  }
  func.func @transform_5(%arg0: i32) -> (i32, i32) {
    %c0_i32 = arith.constant 0 : i32
    %c0_i32_0 = arith.constant 0 : i32
    return %arg0, %c0_i32 : i32, i32
  }
}

</mosaic_0001>

<llo_original>
// kernel: _lambda_.2
$region0: #{_lambda_.2}
  #allocation0 [shape = 'u32[]', space=smem, size = 0x4, offset = 0x4, fixed_abs, tag = 'smem constant byte address 0x4 - core index']
  #allocation1 [shape = 'u32[144,128]{1,0:T(1,128)}', space=vmem, size = 0x12000, scoped, tag = 'internal scratch']
  %s0 = inlined_call_operand.vmem [shape: bf16[512,36], index: 0, kind: input, shape index: {}]
  %s1 = inlined_call_operand.vmem [shape: f32[36,27], index: 1, kind: input, shape index: {}]
  %s2 = inlined_call_operand.vmem [shape: f32[1,27], index: 2, kind: input, shape index: {}]
  %s3 = inlined_call_operand.vmem [shape: f32[512,9], index: 3, kind: output, shape index: {0}]
  %s4 = inlined_call_operand.vmem [shape: f32[512,9], index: 4, kind: output, shape index: {1}]
  %s5 = inlined_call_operand.vmem [shape: f32[512,9], index: 5, kind: output, shape index: {2}]
  %6 = xla_tuple %s3, %s4, %s5
  %s7 = sld [smem:[#allocation0]]
  $region61: #{_lambda_.2} parent=0
    _
  %s9 = ssub.s32 1, %s7
  %s10 = scalar_select 0, %s9, %s7
  loop: start=0, step=1, limit=4
  $region2: #{_lambda_.2} parent=0 // loop_pre_header
    _
  $region3: #{_lambda_.2} parent=0 // loop_header
    %s12 = sphi 0, %s16
    %p13 = scmp.ge.s32.totalorder %s12, 4
    %s22 = sphi 0, %s24
    %s25 = sphi 0, %s22
    %s26 = sphi 0, %s25
    %s42 = sphi 0, %s26
    %s46 = sphi 0, %s46
    %s48 = sphi 0, %s46
    %s49 = sphi 0, %s48
    %s63 = sphi 0, %s49
    %s67 = sphi 0, %s67
    %s69 = sphi 0, %s67
    %s70 = sphi 0, %s69
    %s84 = sphi 0, %s70
    %s90 = sphi 0, %s92
    %s93 = sphi 0, %s90
    %s94 = sphi 0, %s93
    %s110 = sphi 0, %s94
    %s116 = sphi 0, %s118
    %s119 = sphi 0, %s116
    %s120 = sphi 0, %s119
    %s136 = sphi 0, %s120
    %s142 = sphi 0, %s144
    %s145 = sphi 0, %s142
    %s146 = sphi 0, %s145
    %s162 = sphi 0, %s146
  $region4: #{_lambda_.2} parent=0 // loop_header_branch
    %15 = sbr.rel (%p13) target = $region8
  $region5: #{_lambda_.2} parent=0 // loop_body
    %s17 = ssub.s32 %s12, 1
    %s18 = ssub.s32 %s12, 2
    %s19 = sadd.s32 %s12, 1
    %s20 = ssub.s32 %s12, %s19
    %p21 = scmp.eq.s32.totalorder %s20, 0
    %s23 = sadd.s32 %s22, 1
    %s24 = scalar_select %p21, %s22, %s23
    %p27 = pneg %p21
    %p28 = scmp.eq.s32.totalorder %s12, 1
    %p29 = por %p27, %p28
    %p30 = scmp.ne.s32.totalorder %s22, %s25
    %p31 = scmp.eq.s32.totalorder %s12, 0
    %p32 = por %p30, %p31
    %p33 = scmp.ne.s32.totalorder %s22, %s25
    %p34 = scmp.eq.s32.totalorder %s17, 1
    %p35 = por %p33, %p34
    %p36 = scmp.ne.s32.totalorder %s25, %s26
    %p37 = scmp.eq.s32.totalorder %s17, 0
    %p38 = por %p36, %p37
    %p39 = scmp.ne.s32.totalorder %s25, %s26
    %p40 = scmp.eq.s32.totalorder %s18, 1
    %p41 = por %p39, %p40
    %p43 = scmp.ne.s32.totalorder %s26, %s42
    %p44 = scmp.eq.s32.totalorder %s18, 0
    %p45 = por %p43, %p44
    %s47 = sadd.s32 %s46, 1
    %p50 = scmp.eq.s32.totalorder %s12, 1
    %p51 = scmp.ne.s32.totalorder %s46, %s48
    %p52 = scmp.eq.s32.totalorder %s12, 0
    %p53 = por %p51, %p52
    %p54 = scmp.ne.s32.totalorder %s46, %s48
    %p55 = scmp.eq.s32.totalorder %s17, 1
    %p56 = por %p54, %p55
    %p57 = scmp.ne.s32.totalorder %s48, %s49
    %p58 = scmp.eq.s32.totalorder %s17, 0
    %p59 = por %p57, %p58
    %p60 = scmp.ne.s32.totalorder %s48, %s49
    %p61 = scmp.eq.s32.totalorder %s18, 1
    %p62 = por %p60, %p61
    %p64 = scmp.ne.s32.totalorder %s49, %s63
    %p65 = scmp.eq.s32.totalorder %s18, 0
    %p66 = por %p64, %p65
    %s68 = sadd.s32 %s67, 1
    %p71 = scmp.eq.s32.totalorder %s12, 1
    %p72 = scmp.ne.s32.totalorder %s67, %s69
    %p73 = scmp.eq.s32.totalorder %s12, 0
    %p74 = por %p72, %p73
    %p75 = scmp.ne.s32.totalorder %s67, %s69
    %p76 = scmp.eq.s32.totalorder %s17, 1
    %p77 = por %p75, %p76
    %p78 = scmp.ne.s32.totalorder %s69, %s70
    %p79 = scmp.eq.s32.totalorder %s17, 0
    %p80 = por %p78, %p79
    %p81 = scmp.ne.s32.totalorder %s69, %s70
    %p82 = scmp.eq.s32.totalorder %s18, 1
    %p83 = por %p81, %p82
    %p85 = scmp.ne.s32.totalorder %s70, %s84
    %p86 = scmp.eq.s32.totalorder %s18, 0
    %p87 = por %p85, %p86
    %s88 = ssub.s32 %s12, %s19
    %p89 = scmp.eq.s32.totalorder %s88, 0
    %s91 = sadd.s32 %s90, 1
    %s92 = scalar_select %p89, %s90, %s91
    %p95 = pneg %p89
    %p96 = scmp.eq.s32.totalorder %s12, 1
    %p97 = por %p95, %p96
    %p98 = scmp.ne.s32.totalorder %s90, %s93
    %p99 = scmp.eq.s32.totalorder %s12, 0
    %p100 = por %p98, %p99
    %p101 = scmp.ne.s32.totalorder %s90, %s93
    %p102 = scmp.eq.s32.totalorder %s17, 1
    %p103 = por %p101, %p102
    %p104 = scmp.ne.s32.totalorder %s93, %s94
    %p105 = scmp.eq.s32.totalorder %s17, 0
    %p106 = por %p104, %p105
    %p107 = scmp.ne.s32.totalorder %s93, %s94
    %p108 = scmp.eq.s32.totalorder %s18, 1
    %p109 = por %p107, %p108
    %p111 = scmp.ne.s32.totalorder %s94, %s110
    %p112 = scmp.eq.s32.totalorder %s18, 0
    %p113 = por %p111, %p112
    %s114 = ssub.s32 %s12, %s19
    %p115 = scmp.eq.s32.totalorder %s114, 0
    %s117 = sadd.s32 %s116, 1
    %s118 = scalar_select %p115, %s116, %s117
    %p121 = pneg %p115
    %p122 = scmp.eq.s32.totalorder %s12, 1
    %p123 = por %p121, %p122
    %p124 = scmp.ne.s32.totalorder %s116, %s119
    %p125 = scmp.eq.s32.totalorder %s12, 0
    %p126 = por %p124, %p125
    %p127 = scmp.ne.s32.totalorder %s116, %s119
    %p128 = scmp.eq.s32.totalorder %s17, 1
    %p129 = por %p127, %p128
    %p130 = scmp.ne.s32.totalorder %s119, %s120
    %p131 = scmp.eq.s32.totalorder %s17, 0
    %p132 = por %p130, %p131
    %p133 = scmp.ne.s32.totalorder %s119, %s120
    %p134 = scmp.eq.s32.totalorder %s18, 1
    %p135 = por %p133, %p134
    %p137 = scmp.ne.s32.totalorder %s120, %s136
    %p138 = scmp.eq.s32.totalorder %s18, 0
    %p139 = por %p137, %p138
    %s140 = ssub.s32 %s12, %s19
    %p141 = scmp.eq.s32.totalorder %s140, 0
    %s143 = sadd.s32 %s142, 1
    %s144 = scalar_select %p141, %s142, %s143
    %p147 = pneg %p141
    %p148 = scmp.eq.s32.totalorder %s12, 1
    %p149 = por %p147, %p148
    %p150 = scmp.ne.s32.totalorder %s142, %s145
    %p151 = scmp.eq.s32.totalorder %s12, 0
    %p152 = por %p150, %p151
    %p153 = scmp.ne.s32.totalorder %s142, %s145
    %p154 = scmp.eq.s32.totalorder %s17, 1
    %p155 = por %p153, %p154
    %p156 = scmp.ne.s32.totalorder %s145, %s146
    %p157 = scmp.eq.s32.totalorder %s17, 0
    %p158 = por %p156, %p157
    %p159 = scmp.ne.s32.totalorder %s145, %s146
    %p160 = scmp.eq.s32.totalorder %s18, 1
    %p161 = por %p159, %p160
    %p163 = scmp.ne.s32.totalorder %s146, %s162
    %p164 = scmp.eq.s32.totalorder %s18, 0
    %p165 = por %p163, %p164
    %p166 = scmp.le.s32.totalorder 1, %s12
    %p167 = scmp.lt.s32.totalorder %s12, 3
    %p168 = pnand %p166, %p167
    %p169 = pneg %p168
    // Predicated region
    $region9: #{_lambda_.2} parent=5 // pred_check
      _
    $region10: #{_lambda_.2} parent=5 // pred_check_branch
      %171 = sbr.rel (%p168) target = $region12
    $region11: #{_lambda_.2} parent=5 // pred_region
      %s172 = ssub.s32 %s12, 1
      // Predicated region
      $region13: #{_lambda_.2} parent=11 // pred_check
        %p173 = pneg %p59
      $region14: #{_lambda_.2} parent=11 // pred_check_branch
        %175 = sbr.rel (%p173) target = $region16
      $region15: #{_lambda_.2} parent=11 // pred_region
        _
      $region16: #{_lambda_.2} parent=11 // pred_fallthru
        _
      // Predicated region
      $region17: #{_lambda_.2} parent=11 // pred_check
        %p176 = pneg %p80
      $region18: #{_lambda_.2} parent=11 // pred_check_branch
        %178 = sbr.rel (%p176) target = $region20
      $region19: #{_lambda_.2} parent=11 // pred_region
        _
      $region20: #{_lambda_.2} parent=11 // pred_fallthru
        _
    $region12: #{_lambda_.2} parent=5 // pred_fallthru
      _
    %p179 = scmp.lt.s32.totalorder %s12, 2
    // Predicated region
    $region21: #{_lambda_.2} parent=5 // pred_check
      %p180 = pneg %p179
    $region22: #{_lambda_.2} parent=5 // pred_check_branch
      %182 = sbr.rel (%p180) target = $region24
    $region23: #{_lambda_.2} parent=5 // pred_region
      // Predicated region
      $region25: #{_lambda_.2} parent=23 // pred_check
        %p183 = pneg %p32
      $region26: #{_lambda_.2} parent=23 // pred_check_branch
        %185 = sbr.rel (%p183) target = $region28
      $region27: #{_lambda_.2} parent=23 // pred_region
        %s186 = smul.u32 32, %s12
        %p187 = scmp.lt.s32.totalorder %s186, 63
        %s188 = scalar_select %p187, %s186, 63
        %s189 = smul.addr %s188, 4
        %s190 = scalar_lea.vmem %s0, %s189
        %s191 = smul.u32 32, %s12
      $region28: #{_lambda_.2} parent=23 // pred_fallthru
        _
    $region24: #{_lambda_.2} parent=5 // pred_fallthru
      _
    %p192 = scmp.le.s32.totalorder 1, %s12
    %p193 = scmp.lt.s32.totalorder %s12, 3
    %p194 = pnand %p192, %p193
    %p195 = pneg %p194
    // Predicated region
    $region29: #{_lambda_.2} parent=5 // pred_check
      _
    $region30: #{_lambda_.2} parent=5 // pred_check_branch
      %197 = sbr.rel (%p194) target = $region32
    $region31: #{_lambda_.2} parent=5 // pred_region
      %s198 = ssub.s32 %s12, 1
      %s199 = smul.u32 32, %s17
      %p200 = scmp.lt.s32.totalorder %s199, 63
      %s201 = scalar_select %p200, %s199, 63
      %s202 = smul.addr %s201, 4
      %s203 = scalar_lea.vmem %s0, %s202
      %p204 = pneg %p38
      %p205 = pneg %p35
      %p206 = pneg %p59
      %p207 = pneg %p56
      %p208 = pneg %p80
      %p209 = pneg %p77
      %p210 = pneg %p106
      %p211 = pneg %p103
      %s212 = smul.u32 32, %s17
      %p213 = scmp.lt.s32.totalorder %s212, 63
      %s214 = scalar_select %p213, %s212, 63
      %s215 = smul.addr %s214, 8
      %s216 = scalar_lea.vmem %s3, %s215
      %p217 = pneg %p132
      %p218 = pneg %p129
      %s219 = smul.u32 32, %s17
      %p220 = scmp.lt.s32.totalorder %s219, 63
      %s221 = scalar_select %p220, %s219, 63
      %s222 = smul.addr %s221, 8
      %s223 = scalar_lea.vmem %s4, %s222
      %p224 = pneg %p158
      %p225 = pneg %p155
      %s226 = smul.u32 32, %s17
      %p227 = scmp.lt.s32.totalorder %s226, 63
      %s228 = scalar_select %p227, %s226, 63
      %s229 = smul.addr %s228, 8
      %s230 = scalar_lea.vmem %s5, %s229
      %s231 = smul.u32 32, %s17
      %p232 = scmp.lt.s32.totalorder %s231, 63
      %s233 = scalar_select %p232, %s231, 63
      %s234 = smul.addr %s233, 4
      %s235 = scalar_lea.vmem %s0, %s234
      %s236 = smul.u32 32, %s17
      %s237 = smul.u32 32, %s17
      %p238 = scmp.lt.s32.totalorder %s237, 63
      %s239 = scalar_select %p238, %s237, 63
      %s240 = smul.addr %s239, 8
      %s241 = scalar_lea.vmem %s3, %s240
      %s242 = smul.u32 32, %s17
      %s243 = smul.u32 32, %s17
      %p244 = scmp.lt.s32.totalorder %s243, 63
      %s245 = scalar_select %p244, %s243, 63
      %s246 = smul.addr %s245, 8
      %s247 = scalar_lea.vmem %s4, %s246
      %s248 = smul.u32 32, %s17
      %s249 = smul.u32 32, %s17
      %p250 = scmp.lt.s32.totalorder %s249, 63
      %s251 = scalar_select %p250, %s249, 63
      %s252 = smul.addr %s251, 8
      %s253 = scalar_lea.vmem %s5, %s252
      %s254 = smul.u32 32, %s17
      %v255 = vld [vmem:[%s235] sm:$0xf]
      %v256 = vld [vmem:[%s235 + $0x4] sm:$0xf]
      %v257 = vld [vmem:[%s235 + $0x8] sm:$0xf]
      %v258 = vld [vmem:[%s235 + $0xc] sm:$0xf]
      %v259 = vld [vmem:[%s235 + $0x10] sm:$0xf]
      %v260 = vld [vmem:[%s235 + $0x14] sm:$0xf]
      %v261 = vld [vmem:[%s235 + $0x18] sm:$0xf]
      %v262 = vld [vmem:[%s235 + $0x1c] sm:$0xf]
      %v263 = vld [vmem:[%s235 + $0x20] sm:$0xf]
      %v264 = vld [vmem:[%s235 + $0x24] sm:$0xf]
      %v265 = vld [vmem:[%s235 + $0x28] sm:$0xf]
      %v266 = vld [vmem:[%s235 + $0x2c] sm:$0xf]
      %v267 = vld [vmem:[%s235 + $0x30] sm:$0xf]
      %v268 = vld [vmem:[%s235 + $0x34] sm:$0xf]
      %v269 = vld [vmem:[%s235 + $0x38] sm:$0xf]
      %v270 = vld [vmem:[%s235 + $0x3c] sm:$0xf]
      %v271 = vld [vmem:[%s235 + $0x40] sm:$0xf]
      %v272 = vld [vmem:[%s235 + $0x44] sm:$0xf]
      %v273 = vld [vmem:[%s235 + $0x48] sm:$0xf]
      %v274 = vld [vmem:[%s235 + $0x4c] sm:$0xf]
      %v275 = vld [vmem:[%s235 + $0x50] sm:$0xf]
      %v276 = vld [vmem:[%s235 + $0x54] sm:$0xf]
      %v277 = vld [vmem:[%s235 + $0x58] sm:$0xf]
      %v278 = vld [vmem:[%s235 + $0x5c] sm:$0xf]
      %v279 = vld [vmem:[%s235 + $0x60] sm:$0xf]
      %v280 = vld [vmem:[%s235 + $0x64] sm:$0xf]
      %v281 = vld [vmem:[%s235 + $0x68] sm:$0xf]
      %v282 = vld [vmem:[%s235 + $0x6c] sm:$0xf]
      %v283 = vld [vmem:[%s235 + $0x70] sm:$0xf]
      %v284 = vld [vmem:[%s235 + $0x74] sm:$0xf]
      %v285 = vld [vmem:[%s235 + $0x78] sm:$0xf]
      %v286 = vld [vmem:[%s235 + $0x7c] sm:$0xf]
      %v287 = vunpack.c.l.bf16 %v255
      %v288 = vunpack.c.l.bf16 %v256
      %v289 = vunpack.c.l.bf16 %v257
      %v290 = vunpack.c.l.bf16 %v258
      %v291 = vunpack.c.l.bf16 %v259
      %v292 = vunpack.c.l.bf16 %v260
      %v293 = vunpack.c.l.bf16 %v261
      %v294 = vunpack.c.l.bf16 %v262
      %v295 = vunpack.c.l.bf16 %v263
      %v296 = vunpack.c.l.bf16 %v264
      %v297 = vunpack.c.l.bf16 %v265
      %v298 = vunpack.c.l.bf16 %v266
      %v299 = vunpack.c.l.bf16 %v267
      %v300 = vunpack.c.l.bf16 %v268
      %v301 = vunpack.c.l.bf16 %v269
      %v302 = vunpack.c.l.bf16 %v270
      %v303 = vunpack.c.l.bf16 %v271
      %v304 = vunpack.c.l.bf16 %v272
      %v305 = vunpack.c.l.bf16 %v273
      %v306 = vunpack.c.l.bf16 %v274
      %v307 = vunpack.c.l.bf16 %v275
      %v308 = vunpack.c.l.bf16 %v276
      %v309 = vunpack.c.l.bf16 %v277
      %v310 = vunpack.c.l.bf16 %v278
      %v311 = vunpack.c.l.bf16 %v279
      %v312 = vunpack.c.l.bf16 %v280
      %v313 = vunpack.c.l.bf16 %v281
      %v314 = vunpack.c.l.bf16 %v282
      %v315 = vunpack.c.l.bf16 %v283
      %v316 = vunpack.c.l.bf16 %v284
      %v317 = vunpack.c.l.bf16 %v285
      %v318 = vunpack.c.l.bf16 %v286
      %v319 = vld [vmem:[%s1] sm:$0xff]
      %v320 = vld [vmem:[%s1 + $0x8] sm:$0xff]
      %v321 = vld [vmem:[%s1 + $0x10] sm:$0xff]
      %v322 = vld [vmem:[%s1 + $0x18] sm:$0xff]
      %v323 = vld [vmem:[%s1 + $0x20] sm:$0xf]
      %v324 = vld [vmem:[%s2] sm:$0x1]
      %v326 = vlaneseq
      %v327 = vshrl.u32 %v326, 7
      %v328 = vsub.s32 0, %v327
      %v329 = vrot.slane %v324, %v328
      %vm331 = vcmask 293888
      %v333 = vsel %vm331, %v287, 0
      %v336 = vsel %vm331, %v288, 0
      %v339 = vsel %vm331, %v289, 0
      %v342 = vsel %vm331, %v290, 0
      %v345 = vsel %vm331, %v291, 0
      %v348 = vsel %vm331, %v292, 0
      %v351 = vsel %vm331, %v293, 0
      %v354 = vsel %vm331, %v294, 0
      %v357 = vsel %vm331, %v295, 0
      %v360 = vsel %vm331, %v296, 0
      %v363 = vsel %vm331, %v297, 0
      %v366 = vsel %vm331, %v298, 0
      %v369 = vsel %vm331, %v299, 0
      %v372 = vsel %vm331, %v300, 0
      %v375 = vsel %vm331, %v301, 0
      %v378 = vsel %vm331, %v302, 0
      %v381 = vsel %vm331, %v303, 0
      %v384 = vsel %vm331, %v304, 0
      %v387 = vsel %vm331, %v305, 0
      %v390 = vsel %vm331, %v306, 0
      %v393 = vsel %vm331, %v307, 0
      %v396 = vsel %vm331, %v308, 0
      %v399 = vsel %vm331, %v309, 0
      %v402 = vsel %vm331, %v310, 0
      %v405 = vsel %vm331, %v311, 0
      %v408 = vsel %vm331, %v312, 0
      %v411 = vsel %vm331, %v313, 0
      %v414 = vsel %vm331, %v314, 0
      %v417 = vsel %vm331, %v315, 0
      %v420 = vsel %vm331, %v316, 0
      %v423 = vsel %vm331, %v317, 0
      %v426 = vsel %vm331, %v318, 0
      %vm428 = vcmask 1043456
      %v430 = vsel %vm428, %v323, 0
      %432 = vmatprep.subr.mxu0 0.0
      %433 = vmatpush1.msra.mxu0 %v319
      %434 = vmatprep.subr.mxu0 0.0
      %435 = vmatpush1.msra.mxu0 %v320
      %436 = vmatprep.subr.mxu0 0.0
      %437 = vmatpush1.msra.mxu0 %v321
      %438 = vmatprep.subr.mxu0 0.0
      %439 = vmatpush1.msra.mxu0 %v322
      %440 = vmatprep.subr.mxu0 0.0
      %441 = vmatpush1.msra.mxu0 %v430
      %442 = vmatprep.subr.mxu0 0.0
      %443 = vmatpush1.msra.mxu0 0.0
      %444 = vmatprep.subr.mxu0 0.0
      %445 = vmatpush1.msra.mxu0 0.0
      %446 = vmatprep.subr.mxu0 0.0
      %447 = vmatpush1.msra.mxu0 0.0
      %448 = vmatprep.subr.mxu0 0.0
      %449 = vmatpush1.msra.mxu0 0.0
      %450 = vmatprep.subr.mxu0 0.0
      %451 = vmatpush1.msra.mxu0 0.0
      %452 = vmatprep.subr.mxu0 0.0
      %453 = vmatpush1.msra.mxu0 0.0
      %454 = vmatprep.subr.mxu0 0.0
      %455 = vmatpush1.msra.mxu0 0.0
      %456 = vmatprep.subr.mxu0 0.0
      %457 = vmatpush1.msra.mxu0 0.0
      %458 = vmatprep.subr.mxu0 0.0
      %459 = vmatpush1.msra.mxu0 0.0
      %460 = vmatprep.subr.mxu0 0.0
      %461 = vmatpush1.msra.mxu0 0.0
      %462 = vmatprep.subr.mxu0 0.0
      %463 = vmatpush1.msra.mxu0 0.0
      %464 = vmatprep.subr.mxu0 0.0
      %465 = vmatpush1.msra.mxu0 0.0
      %466 = vmatprep.subr.mxu0 0.0
      %467 = vmatpush1.msra.mxu0 0.0
      %468 = vmatprep.subr.mxu0 0.0
      %469 = vmatpush1.msra.mxu0 0.0
      %470 = vmatprep.subr.mxu0 0.0
      %471 = vmatpush1.msra.mxu0 0.0
      %472 = vmatprep.subr.mxu0 0.0
      %473 = vmatpush1.msra.mxu0 0.0
      %474 = vmatprep.subr.mxu0 0.0
      %475 = vmatpush1.msra.mxu0 0.0
      %476 = vmatprep.subr.mxu0 0.0
      %477 = vmatpush1.msra.mxu0 0.0
      %478 = vmatprep.subr.mxu0 0.0
      %479 = vmatpush1.msra.mxu0 0.0
      %480 = vmatprep.subr.mxu0 0.0
      %481 = vmatpush1.msra.mxu0 0.0
      %482 = vmatprep.subr.mxu0 0.0
      %483 = vmatpush1.msra.mxu0 0.0
      %484 = vmatprep.subr.mxu0 0.0
      %485 = vmatpush1.msra.mxu0 0.0
      %486 = vmatprep.subr.mxu0 0.0
      %487 = vmatpush1.msra.mxu0 0.0
      %488 = vmatprep.subr.mxu0 0.0
      %489 = vmatpush1.msra.mxu0 0.0
      %490 = vmatprep.subr.mxu0 0.0
      %491 = vmatpush1.msra.mxu0 0.0
      %492 = vmatprep.subr.mxu0 0.0
      %493 = vmatpush1.msra.mxu0 0.0
      %494 = vmatprep.subr.mxu0 0.0
      %495 = vmatpush1.msra.mxu0 0.0
      %496 = vmatprep.mubr.f32.mxu0 0.0
      %497 = vmatmul.mubr.f32.gmra.mrb[0].mxu0 %v333
      %v498 = vpop.f32.mrb[0].mxu0
      %v499 = vadd.f32 %v329, %v498
      %v500 = vpop.f32.mrb[0].mxu0
      %501 = vmatprep.mubr.f32.mxu0 0.0
      %502 = vmatmul.mubr.f32.gmra.mrb[0].mxu0 %v336
      %v503 = vpop.f32.mrb[0].mxu0
      %v504 = vadd.f32 %v329, %v503
      %v505 = vpop.f32.mrb[0].mxu0
      %506 = vmatprep.mubr.f32.mxu0 0.0
      %507 = vmatmul.mubr.f32.gmra.mrb[0].mxu0 %v339
      %v508 = vpop.f32.mrb[0].mxu0
      %v509 = vadd.f32 %v329, %v508
      %v510 = vpop.f32.mrb[0].mxu0
      %511 = vmatprep.mubr.f32.mxu0 0.0
      %512 = vmatmul.mubr.f32.gmra.mrb[0].mxu0 %v342
      %v513 = vpop.f32.mrb[0].mxu0
      %v514 = vadd.f32 %v329, %v513
      %v515 = vpop.f32.mrb[0].mxu0
      %516 = vmatprep.mubr.f32.mxu0 0.0
      %517 = vmatmul.mubr.f32.gmra.mrb[0].mxu0 %v345
      %v518 = vpop.f32.mrb[0].mxu0
      %v519 = vadd.f32 %v329, %v518
      %v520 = vpop.f32.mrb[0].mxu0
      %521 = vmatprep.mubr.f32.mxu0 0.0
      %522 = vmatmul.mubr.f32.gmra.mrb[0].mxu0 %v348
      %v523 = vpop.f32.mrb[0].mxu0
      %v524 = vadd.f32 %v329, %v523
      %v525 = vpop.f32.mrb[0].mxu0
      %526 = vmatprep.mubr.f32.mxu0 0.0
      %527 = vmatmul.mubr.f32.gmra.mrb[0].mxu0 %v351
      %v528 = vpop.f32.mrb[0].mxu0
      %v529 = vadd.f32 %v329, %v528
      %v530 = vpop.f32.mrb[0].mxu0
      %531 = vmatprep.mubr.f32.mxu0 0.0
      %532 = vmatmul.mubr.f32.gmra.mrb[0].mxu0 %v354
      %v533 = vpop.f32.mrb[0].mxu0
      %v534 = vadd.f32 %v329, %v533
      %v535 = vpop.f32.mrb[0].mxu0
      %536 = vmatprep.mubr.f32.mxu0 0.0
      %537 = vmatmul.mubr.f32.gmra.mrb[0].mxu0 %v357
      %v538 = vpop.f32.mrb[0].mxu0
      %v539 = vadd.f32 %v329, %v538
      %v540 = vpop.f32.mrb[0].mxu0
      %541 = vmatprep.mubr.f32.mxu0 0.0
      %542 = vmatmul.mubr.f32.gmra.mrb[0].mxu0 %v360
      %v543 = vpop.f32.mrb[0].mxu0
      %v544 = vadd.f32 %v329, %v543
      %v545 = vpop.f32.mrb[0].mxu0
      %546 = vmatprep.mubr.f32.mxu0 0.0
      %547 = vmatmul.mubr.f32.gmra.mrb[0].mxu0 %v363
      %v548 = vpop.f32.mrb[0].mxu0
      %v549 = vadd.f32 %v329, %v548
      %v550 = vpop.f32.mrb[0].mxu0
      %551 = vmatprep.mubr.f32.mxu0 0.0
      %552 = vmatmul.mubr.f32.gmra.mrb[0].mxu0 %v366
      %v553 = vpop.f32.mrb[0].mxu0
      %v554 = vadd.f32 %v329, %v553
      %v555 = vpop.f32.mrb[0].mxu0
      %556 = vmatprep.mubr.f32.mxu0 0.0
      %557 = vmatmul.mubr.f32.gmra.mrb[0].mxu0 %v369
      %v558 = vpop.f32.mrb[0].mxu0
      %v559 = vadd.f32 %v329, %v558
      %v560 = vpop.f32.mrb[0].mxu0
      %561 = vmatprep.mubr.f32.mxu0 0.0
      %562 = vmatmul.mubr.f32.gmra.mrb[0].mxu0 %v372
      %v563 = vpop.f32.mrb[0].mxu0
      %v564 = vadd.f32 %v329, %v563
      %v565 = vpop.f32.mrb[0].mxu0
      %566 = vmatprep.mubr.f32.mxu0 0.0
      %567 = vmatmul.mubr.f32.gmra.mrb[0].mxu0 %v375
      %v568 = vpop.f32.mrb[0].mxu0
      %v569 = vadd.f32 %v329, %v568
      %v570 = vpop.f32.mrb[0].mxu0
      %571 = vmatprep.mubr.f32.mxu0 0.0
      %572 = vmatmul.mubr.f32.gmra.mrb[0].mxu0 %v378
      %v573 = vpop.f32.mrb[0].mxu0
      %v574 = vadd.f32 %v329, %v573
      %v575 = vpop.f32.mrb[0].mxu0
      %576 = vmatprep.mubr.f32.mxu0 0.0
      %577 = vmatmul.mubr.f32.gmra.mrb[0].mxu0 %v381
      %v578 = vpop.f32.mrb[0].mxu0
      %v579 = vadd.f32 %v329, %v578
      %v580 = vpop.f32.mrb[0].mxu0
      %581 = vmatprep.mubr.f32.mxu0 0.0
      %582 = vmatmul.mubr.f32.gmra.mrb[0].mxu0 %v384
      %v583 = vpop.f32.mrb[0].mxu0
      %v584 = vadd.f32 %v329, %v583
      %v585 = vpop.f32.mrb[0].mxu0
      %586 = vmatprep.mubr.f32.mxu0 0.0
      %587 = vmatmul.mubr.f32.gmra.mrb[0].mxu0 %v387
      %v588 = vpop.f32.mrb[0].mxu0
      %v589 = vadd.f32 %v329, %v588
      %v590 = vpop.f32.mrb[0].mxu0
      %591 = vmatprep.mubr.f32.mxu0 0.0
      %592 = vmatmul.mubr.f32.gmra.mrb[0].mxu0 %v390
      %v593 = vpop.f32.mrb[0].mxu0
      %v594 = vadd.f32 %v329, %v593
      %v595 = vpop.f32.mrb[0].mxu0
      %596 = vmatprep.mubr.f32.mxu0 0.0
      %597 = vmatmul.mubr.f32.gmra.mrb[0].mxu0 %v393
      %v598 = vpop.f32.mrb[0].mxu0
      %v599 = vadd.f32 %v329, %v598
      %v600 = vpop.f32.mrb[0].mxu0
      %601 = vmatprep.mubr.f32.mxu0 0.0
      %602 = vmatmul.mubr.f32.gmra.mrb[0].mxu0 %v396
      %v603 = vpop.f32.mrb[0].mxu0
      %v604 = vadd.f32 %v329, %v603
      %v605 = vpop.f32.mrb[0].mxu0
      %606 = vmatprep.mubr.f32.mxu0 0.0
      %607 = vmatmul.mubr.f32.gmra.mrb[0].mxu0 %v399
      %v608 = vpop.f32.mrb[0].mxu0
      %v609 = vadd.f32 %v329, %v608
      %v610 = vpop.f32.mrb[0].mxu0
      %611 = vmatprep.mubr.f32.mxu0 0.0
      %612 = vmatmul.mubr.f32.gmra.mrb[0].mxu0 %v402
      %v613 = vpop.f32.mrb[0].mxu0
      %v614 = vadd.f32 %v329, %v613
      %v615 = vpop.f32.mrb[0].mxu0
      %616 = vmatprep.mubr.f32.mxu0 0.0
      %617 = vmatmul.mubr.f32.gmra.mrb[0].mxu0 %v405
      %v618 = vpop.f32.mrb[0].mxu0
      %v619 = vadd.f32 %v329, %v618
      %v620 = vpop.f32.mrb[0].mxu0
      %621 = vmatprep.mubr.f32.mxu0 0.0
      %622 = vmatmul.mubr.f32.gmra.mrb[0].mxu0 %v408
      %v623 = vpop.f32.mrb[0].mxu0
      %v624 = vadd.f32 %v329, %v623
      %v625 = vpop.f32.mrb[0].mxu0
      %626 = vmatprep.mubr.f32.mxu0 0.0
      %627 = vmatmul.mubr.f32.gmra.mrb[0].mxu0 %v411
      %v628 = vpop.f32.mrb[0].mxu0
      %v629 = vadd.f32 %v329, %v628
      %v630 = vpop.f32.mrb[0].mxu0
      %631 = vmatprep.mubr.f32.mxu0 0.0
      %632 = vmatmul.mubr.f32.gmra.mrb[0].mxu0 %v414
      %v633 = vpop.f32.mrb[0].mxu0
      %v634 = vadd.f32 %v329, %v633
      %v635 = vpop.f32.mrb[0].mxu0
      %636 = vmatprep.mubr.f32.mxu0 0.0
      %637 = vmatmul.mubr.f32.gmra.mrb[0].mxu0 %v417
      %v638 = vpop.f32.mrb[0].mxu0
      %v639 = vadd.f32 %v329, %v638
      %v640 = vpop.f32.mrb[0].mxu0
      %641 = vmatprep.mubr.f32.mxu0 0.0
      %642 = vmatmul.mubr.f32.gmra.mrb[0].mxu0 %v420
      %v643 = vpop.f32.mrb[0].mxu0
      %v644 = vadd.f32 %v329, %v643
      %v645 = vpop.f32.mrb[0].mxu0
      %646 = vmatprep.mubr.f32.mxu0 0.0
      %647 = vmatmul.mubr.f32.gmra.mrb[0].mxu0 %v423
      %v648 = vpop.f32.mrb[0].mxu0
      %v649 = vadd.f32 %v329, %v648
      %v650 = vpop.f32.mrb[0].mxu0
      %651 = vmatprep.mubr.f32.mxu0 0.0
      %652 = vmatmul.mubr.f32.gmra.mrb[0].mxu0 %v426
      %v653 = vpop.f32.mrb[0].mxu0
      %v654 = vadd.f32 %v329, %v653
      %v655 = vpop.f32.mrb[0].mxu0
      %656 = vdwg.mxu0
      %vm657 = vcmask 72704
      %658 = vst.msk [vmem:[%s241] sm:$0xff] %vm657, %v499
      %659 = vst.msk [vmem:[%s241 + $0x8] sm:$0xff] %vm657, %v504
      %660 = vst.msk [vmem:[%s241 + $0x10] sm:$0xff] %vm657, %v509
      %661 = vst.msk [vmem:[%s241 + $0x18] sm:$0xff] %vm657, %v514
      %662 = vst.msk [vmem:[%s241 + $0x20] sm:$0xff] %vm657, %v519
      %663 = vst.msk [vmem:[%s241 + $0x28] sm:$0xff] %vm657, %v524
      %664 = vst.msk [vmem:[%s241 + $0x30] sm:$0xff] %vm657, %v529
      %665 = vst.msk [vmem:[%s241 + $0x38] sm:$0xff] %vm657, %v534
      %666 = vst.msk [vmem:[%s241 + $0x40] sm:$0xff] %vm657, %v539
      %667 = vst.msk [vmem:[%s241 + $0x48] sm:$0xff] %vm657, %v544
      %668 = vst.msk [vmem:[%s241 + $0x50] sm:$0xff] %vm657, %v549
      %669 = vst.msk [vmem:[%s241 + $0x58] sm:$0xff] %vm657, %v554
      %670 = vst.msk [vmem:[%s241 + $0x60] sm:$0xff] %vm657, %v559
      %671 = vst.msk [vmem:[%s241 + $0x68] sm:$0xff] %vm657, %v564
      %672 = vst.msk [vmem:[%s241 + $0x70] sm:$0xff] %vm657, %v569
      %673 = vst.msk [vmem:[%s241 + $0x78] sm:$0xff] %vm657, %v574
      %674 = vst.msk [vmem:[%s241 + $0x80] sm:$0xff] %vm657, %v579
      %675 = vst.msk [vmem:[%s241 + $0x88] sm:$0xff] %vm657, %v584
      %676 = vst.msk [vmem:[%s241 + $0x90] sm:$0xff] %vm657, %v589
      %677 = vst.msk [vmem:[%s241 + $0x98] sm:$0xff] %vm657, %v594
      %678 = vst.msk [vmem:[%s241 + $0xa0] sm:$0xff] %vm657, %v599
      %679 = vst.msk [vmem:[%s241 + $0xa8] sm:$0xff] %vm657, %v604
      %680 = vst.msk [vmem:[%s241 + $0xb0] sm:$0xff] %vm657, %v609
      %681 = vst.msk [vmem:[%s241 + $0xb8] sm:$0xff] %vm657, %v614
      %682 = vst.msk [vmem:[%s241 + $0xc0] sm:$0xff] %vm657, %v619
      %683 = vst.msk [vmem:[%s241 + $0xc8] sm:$0xff] %vm657, %v624
      %684 = vst.msk [vmem:[%s241 + $0xd0] sm:$0xff] %vm657, %v629
      %685 = vst.msk [vmem:[%s241 + $0xd8] sm:$0xff] %vm657, %v634
      %686 = vst.msk [vmem:[%s241 + $0xe0] sm:$0xff] %vm657, %v639
      %687 = vst.msk [vmem:[%s241 + $0xe8] sm:$0xff] %vm657, %v644
      %688 = vst.msk [vmem:[%s241 + $0xf0] sm:$0xff] %vm657, %v649
      %689 = vst.msk [vmem:[%s241 + $0xf8] sm:$0xff] %vm657, %v654
      %722 = vrot.lane.b32.xlu0 %v499, 119
      %v723 = vpop.permute.xlu0 %722
      %724 = vrot.lane.b32.xlu0 %v504, 119
      %v725 = vpop.permute.xlu0 %724
      %726 = vrot.lane.b32.xlu0 %v509, 119
      %v727 = vpop.permute.xlu0 %726
      %728 = vrot.lane.b32.xlu0 %v514, 119
      %v729 = vpop.permute.xlu0 %728
      %730 = vrot.lane.b32.xlu0 %v519, 119
      %v731 = vpop.permute.xlu0 %730
      %732 = vrot.lane.b32.xlu0 %v524, 119
      %v733 = vpop.permute.xlu0 %732
      %734 = vrot.lane.b32.xlu0 %v529, 119
      %v735 = vpop.permute.xlu0 %734
      %736 = vrot.lane.b32.xlu0 %v534, 119
      %v737 = vpop.permute.xlu0 %736
      %738 = vrot.lane.b32.xlu0 %v539, 119
      %v739 = vpop.permute.xlu0 %738
      %740 = vrot.lane.b32.xlu0 %v544, 119
      %v741 = vpop.permute.xlu0 %740
      %742 = vrot.lane.b32.xlu0 %v549, 119
      %v743 = vpop.permute.xlu0 %742
      %744 = vrot.lane.b32.xlu0 %v554, 119
      %v745 = vpop.permute.xlu0 %744
      %746 = vrot.lane.b32.xlu0 %v559, 119
      %v747 = vpop.permute.xlu0 %746
      %748 = vrot.lane.b32.xlu0 %v564, 119
      %v749 = vpop.permute.xlu0 %748
      %750 = vrot.lane.b32.xlu0 %v569, 119
      %v751 = vpop.permute.xlu0 %750
      %752 = vrot.lane.b32.xlu0 %v574, 119
      %v753 = vpop.permute.xlu0 %752
      %754 = vrot.lane.b32.xlu0 %v579, 119
      %v755 = vpop.permute.xlu0 %754
      %756 = vrot.lane.b32.xlu0 %v584, 119
      %v757 = vpop.permute.xlu0 %756
      %758 = vrot.lane.b32.xlu0 %v589, 119
      %v759 = vpop.permute.xlu0 %758
      %760 = vrot.lane.b32.xlu0 %v594, 119
      %v761 = vpop.permute.xlu0 %760
      %762 = vrot.lane.b32.xlu0 %v599, 119
      %v763 = vpop.permute.xlu0 %762
      %764 = vrot.lane.b32.xlu0 %v604, 119
      %v765 = vpop.permute.xlu0 %764
      %766 = vrot.lane.b32.xlu0 %v609, 119
      %v767 = vpop.permute.xlu0 %766
      %768 = vrot.lane.b32.xlu0 %v614, 119
      %v769 = vpop.permute.xlu0 %768
      %770 = vrot.lane.b32.xlu0 %v619, 119
      %v771 = vpop.permute.xlu0 %770
      %772 = vrot.lane.b32.xlu0 %v624, 119
      %v773 = vpop.permute.xlu0 %772
      %774 = vrot.lane.b32.xlu0 %v629, 119
      %v775 = vpop.permute.xlu0 %774
      %776 = vrot.lane.b32.xlu0 %v634, 119
      %v777 = vpop.permute.xlu0 %776
      %778 = vrot.lane.b32.xlu0 %v639, 119
      %v779 = vpop.permute.xlu0 %778
      %780 = vrot.lane.b32.xlu0 %v644, 119
      %v781 = vpop.permute.xlu0 %780
      %782 = vrot.lane.b32.xlu0 %v649, 119
      %v783 = vpop.permute.xlu0 %782
      %784 = vrot.lane.b32.xlu0 %v654, 119
      %v785 = vpop.permute.xlu0 %784
      %818 = vst.msk [vmem:[%s247] sm:$0xff] %vm657, %v723
      %819 = vst.msk [vmem:[%s247 + $0x8] sm:$0xff] %vm657, %v725
      %820 = vst.msk [vmem:[%s247 + $0x10] sm:$0xff] %vm657, %v727
      %821 = vst.msk [vmem:[%s247 + $0x18] sm:$0xff] %vm657, %v729
      %822 = vst.msk [vmem:[%s247 + $0x20] sm:$0xff] %vm657, %v731
      %823 = vst.msk [vmem:[%s247 + $0x28] sm:$0xff] %vm657, %v733
      %824 = vst.msk [vmem:[%s247 + $0x30] sm:$0xff] %vm657, %v735
      %825 = vst.msk [vmem:[%s247 + $0x38] sm:$0xff] %vm657, %v737
      %826 = vst.msk [vmem:[%s247 + $0x40] sm:$0xff] %vm657, %v739
      %827 = vst.msk [vmem:[%s247 + $0x48] sm:$0xff] %vm657, %v741
      %828 = vst.msk [vmem:[%s247 + $0x50] sm:$0xff] %vm657, %v743
      %829 = vst.msk [vmem:[%s247 + $0x58] sm:$0xff] %vm657, %v745
      %830 = vst.msk [vmem:[%s247 + $0x60] sm:$0xff] %vm657, %v747
      %831 = vst.msk [vmem:[%s247 + $0x68] sm:$0xff] %vm657, %v749
      %832 = vst.msk [vmem:[%s247 + $0x70] sm:$0xff] %vm657, %v751
      %833 = vst.msk [vmem:[%s247 + $0x78] sm:$0xff] %vm657, %v753
      %834 = vst.msk [vmem:[%s247 + $0x80] sm:$0xff] %vm657, %v755
      %835 = vst.msk [vmem:[%s247 + $0x88] sm:$0xff] %vm657, %v757
      %836 = vst.msk [vmem:[%s247 + $0x90] sm:$0xff] %vm657, %v759
      %837 = vst.msk [vmem:[%s247 + $0x98] sm:$0xff] %vm657, %v761
      %838 = vst.msk [vmem:[%s247 + $0xa0] sm:$0xff] %vm657, %v763
      %839 = vst.msk [vmem:[%s247 + $0xa8] sm:$0xff] %vm657, %v765
      %840 = vst.msk [vmem:[%s247 + $0xb0] sm:$0xff] %vm657, %v767
      %841 = vst.msk [vmem:[%s247 + $0xb8] sm:$0xff] %vm657, %v769
      %842 = vst.msk [vmem:[%s247 + $0xc0] sm:$0xff] %vm657, %v771
      %843 = vst.msk [vmem:[%s247 + $0xc8] sm:$0xff] %vm657, %v773
      %844 = vst.msk [vmem:[%s247 + $0xd0] sm:$0xff] %vm657, %v775
      %845 = vst.msk [vmem:[%s247 + $0xd8] sm:$0xff] %vm657, %v777
      %846 = vst.msk [vmem:[%s247 + $0xe0] sm:$0xff] %vm657, %v779
      %847 = vst.msk [vmem:[%s247 + $0xe8] sm:$0xff] %vm657, %v781
      %848 = vst.msk [vmem:[%s247 + $0xf0] sm:$0xff] %vm657, %v783
      %849 = vst.msk [vmem:[%s247 + $0xf8] sm:$0xff] %vm657, %v785
      %v850 = vxor.u32 %v499, 2147483648
      %v851 = vxor.u32 %v504, 2147483648
      %v852 = vxor.u32 %v509, 2147483648
      %v853 = vxor.u32 %v514, 2147483648
      %v854 = vxor.u32 %v519, 2147483648
      %v855 = vxor.u32 %v524, 2147483648
      %v856 = vxor.u32 %v529, 2147483648
      %v857 = vxor.u32 %v534, 2147483648
      %v858 = vxor.u32 %v539, 2147483648
      %v859 = vxor.u32 %v544, 2147483648
      %v860 = vxor.u32 %v549, 2147483648
      %v861 = vxor.u32 %v554, 2147483648
      %v862 = vxor.u32 %v559, 2147483648
      %v863 = vxor.u32 %v564, 2147483648
      %v864 = vxor.u32 %v569, 2147483648
      %v865 = vxor.u32 %v574, 2147483648
      %v866 = vxor.u32 %v579, 2147483648
      %v867 = vxor.u32 %v584, 2147483648
      %v868 = vxor.u32 %v589, 2147483648
      %v869 = vxor.u32 %v594, 2147483648
      %v870 = vxor.u32 %v599, 2147483648
      %v871 = vxor.u32 %v604, 2147483648
      %v872 = vxor.u32 %v609, 2147483648
      %v873 = vxor.u32 %v614, 2147483648
      %v874 = vxor.u32 %v619, 2147483648
      %v875 = vxor.u32 %v624, 2147483648
      %v876 = vxor.u32 %v629, 2147483648
      %v877 = vxor.u32 %v634, 2147483648
      %v878 = vxor.u32 %v639, 2147483648
      %v879 = vxor.u32 %v644, 2147483648
      %v880 = vxor.u32 %v649, 2147483648
      %v881 = vxor.u32 %v654, 2147483648
      %v882 = vmul.f32 %v850, 1.442695
      %v883 = vpow.pop %v882
      %v884 = vmul.f32 %v851, 1.442695
      %v885 = vpow.pop %v884
      %v886 = vmul.f32 %v852, 1.442695
      %v887 = vpow.pop %v886
      %v888 = vmul.f32 %v853, 1.442695
      %v889 = vpow.pop %v888
      %v890 = vmul.f32 %v854, 1.442695
      %v891 = vpow.pop %v890
      %v892 = vmul.f32 %v855, 1.442695
      %v893 = vpow.pop %v892
      %v894 = vmul.f32 %v856, 1.442695
      %v895 = vpow.pop %v894
      %v896 = vmul.f32 %v857, 1.442695
      %v897 = vpow.pop %v896
      %v898 = vmul.f32 %v858, 1.442695
      %v899 = vpow.pop %v898
      %v900 = vmul.f32 %v859, 1.442695
      %v901 = vpow.pop %v900
      %v902 = vmul.f32 %v860, 1.442695
      %v903 = vpow.pop %v902
      %v904 = vmul.f32 %v861, 1.442695
      %v905 = vpow.pop %v904
      %v906 = vmul.f32 %v862, 1.442695
      %v907 = vpow.pop %v906
      %v908 = vmul.f32 %v863, 1.442695
      %v909 = vpow.pop %v908
      %v910 = vmul.f32 %v864, 1.442695
      %v911 = vpow.pop %v910
      %v912 = vmul.f32 %v865, 1.442695
      %v913 = vpow.pop %v912
      %v914 = vmul.f32 %v866, 1.442695
      %v915 = vpow.pop %v914
      %v916 = vmul.f32 %v867, 1.442695
      %v917 = vpow.pop %v916
      %v918 = vmul.f32 %v868, 1.442695
      %v919 = vpow.pop %v918
      %v920 = vmul.f32 %v869, 1.442695
      %v921 = vpow.pop %v920
      %v922 = vmul.f32 %v870, 1.442695
      %v923 = vpow.pop %v922
      %v924 = vmul.f32 %v871, 1.442695
      %v925 = vpow.pop %v924
      %v926 = vmul.f32 %v872, 1.442695
      %v927 = vpow.pop %v926
      %v928 = vmul.f32 %v873, 1.442695
      %v929 = vpow.pop %v928
      %v930 = vmul.f32 %v874, 1.442695
      %v931 = vpow.pop %v930
      %v932 = vmul.f32 %v875, 1.442695
      %v933 = vpow.pop %v932
      %v934 = vmul.f32 %v876, 1.442695
      %v935 = vpow.pop %v934
      %v936 = vmul.f32 %v877, 1.442695
      %v937 = vpow.pop %v936
      %v938 = vmul.f32 %v878, 1.442695
      %v939 = vpow.pop %v938
      %v940 = vmul.f32 %v879, 1.442695
      %v941 = vpow.pop %v940
      %v942 = vmul.f32 %v880, 1.442695
      %v943 = vpow.pop %v942
      %v944 = vmul.f32 %v881, 1.442695
      %v945 = vpow.pop %v944
      %v946 = vadd.f32 %v883, 1.0
      %v947 = vadd.f32 %v885, 1.0
      %v948 = vadd.f32 %v887, 1.0
      %v949 = vadd.f32 %v889, 1.0
      %v950 = vadd.f32 %v891, 1.0
      %v951 = vadd.f32 %v893, 1.0
      %v952 = vadd.f32 %v895, 1.0
      %v953 = vadd.f32 %v897, 1.0
      %v954 = vadd.f32 %v899, 1.0
      %v955 = vadd.f32 %v901, 1.0
      %v956 = vadd.f32 %v903, 1.0
      %v957 = vadd.f32 %v905, 1.0
      %v958 = vadd.f32 %v907, 1.0
      %v959 = vadd.f32 %v909, 1.0
      %v960 = vadd.f32 %v911, 1.0
      %v961 = vadd.f32 %v913, 1.0
      %v962 = vadd.f32 %v915, 1.0
      %v963 = vadd.f32 %v917, 1.0
      %v964 = vadd.f32 %v919, 1.0
      %v965 = vadd.f32 %v921, 1.0
      %v966 = vadd.f32 %v923, 1.0
      %v967 = vadd.f32 %v925, 1.0
      %v968 = vadd.f32 %v927, 1.0
      %v969 = vadd.f32 %v929, 1.0
      %v970 = vadd.f32 %v931, 1.0
      %v971 = vadd.f32 %v933, 1.0
      %v972 = vadd.f32 %v935, 1.0
      %v973 = vadd.f32 %v937, 1.0
      %v974 = vadd.f32 %v939, 1.0
      %v975 = vadd.f32 %v941, 1.0
      %v976 = vadd.f32 %v943, 1.0
      %v977 = vadd.f32 %v945, 1.0
      %v978 = vrcp.pop %v946
      %v979 = vmul.f32 1.0, %v978
      %v980 = vrcp.pop %v947
      %v981 = vmul.f32 1.0, %v980
      %v982 = vrcp.pop %v948
      %v983 = vmul.f32 1.0, %v982
      %v984 = vrcp.pop %v949
      %v985 = vmul.f32 1.0, %v984
      %v986 = vrcp.pop %v950
      %v987 = vmul.f32 1.0, %v986
      %v988 = vrcp.pop %v951
      %v989 = vmul.f32 1.0, %v988
      %v990 = vrcp.pop %v952
      %v991 = vmul.f32 1.0, %v990
      %v992 = vrcp.pop %v953
      %v993 = vmul.f32 1.0, %v992
      %v994 = vrcp.pop %v954
      %v995 = vmul.f32 1.0, %v994
      %v996 = vrcp.pop %v955
      %v997 = vmul.f32 1.0, %v996
      %v998 = vrcp.pop %v956
      %v999 = vmul.f32 1.0, %v998
      %v1000 = vrcp.pop %v957
      %v1001 = vmul.f32 1.0, %v1000
      %v1002 = vrcp.pop %v958
      %v1003 = vmul.f32 1.0, %v1002
      %v1004 = vrcp.pop %v959
      %v1005 = vmul.f32 1.0, %v1004
      %v1006 = vrcp.pop %v960
      %v1007 = vmul.f32 1.0, %v1006
      %v1008 = vrcp.pop %v961
      %v1009 = vmul.f32 1.0, %v1008
      %v1010 = vrcp.pop %v962
      %v1011 = vmul.f32 1.0, %v1010
      %v1012 = vrcp.pop %v963
      %v1013 = vmul.f32 1.0, %v1012
      %v1014 = vrcp.pop %v964
      %v1015 = vmul.f32 1.0, %v1014
      %v1016 = vrcp.pop %v965
      %v1017 = vmul.f32 1.0, %v1016
      %v1018 = vrcp.pop %v966
      %v1019 = vmul.f32 1.0, %v1018
      %v1020 = vrcp.pop %v967
      %v1021 = vmul.f32 1.0, %v1020
      %v1022 = vrcp.pop %v968
      %v1023 = vmul.f32 1.0, %v1022
      %v1024 = vrcp.pop %v969
      %v1025 = vmul.f32 1.0, %v1024
      %v1026 = vrcp.pop %v970
      %v1027 = vmul.f32 1.0, %v1026
      %v1028 = vrcp.pop %v971
      %v1029 = vmul.f32 1.0, %v1028
      %v1030 = vrcp.pop %v972
      %v1031 = vmul.f32 1.0, %v1030
      %v1032 = vrcp.pop %v973
      %v1033 = vmul.f32 1.0, %v1032
      %v1034 = vrcp.pop %v974
      %v1035 = vmul.f32 1.0, %v1034
      %v1036 = vrcp.pop %v975
      %v1037 = vmul.f32 1.0, %v1036
      %v1038 = vrcp.pop %v976
      %v1039 = vmul.f32 1.0, %v1038
      %v1040 = vrcp.pop %v977
      %v1041 = vmul.f32 1.0, %v1040
      %1074 = vrot.lane.b32.xlu0 %v979, 110
      %v1075 = vpop.permute.xlu0 %1074
      %1076 = vrot.lane.b32.xlu0 %v981, 110
      %v1077 = vpop.permute.xlu0 %1076
      %1078 = vrot.lane.b32.xlu0 %v983, 110
      %v1079 = vpop.permute.xlu0 %1078
      %1080 = vrot.lane.b32.xlu0 %v985, 110
      %v1081 = vpop.permute.xlu0 %1080
      %1082 = vrot.lane.b32.xlu0 %v987, 110
      %v1083 = vpop.permute.xlu0 %1082
      %1084 = vrot.lane.b32.xlu0 %v989, 110
      %v1085 = vpop.permute.xlu0 %1084
      %1086 = vrot.lane.b32.xlu0 %v991, 110
      %v1087 = vpop.permute.xlu0 %1086
      %1088 = vrot.lane.b32.xlu0 %v993, 110
      %v1089 = vpop.permute.xlu0 %1088
      %1090 = vrot.lane.b32.xlu0 %v995, 110
      %v1091 = vpop.permute.xlu0 %1090
      %1092 = vrot.lane.b32.xlu0 %v997, 110
      %v1093 = vpop.permute.xlu0 %1092
      %1094 = vrot.lane.b32.xlu0 %v999, 110
      %v1095 = vpop.permute.xlu0 %1094
      %1096 = vrot.lane.b32.xlu0 %v1001, 110
      %v1097 = vpop.permute.xlu0 %1096
      %1098 = vrot.lane.b32.xlu0 %v1003, 110
      %v1099 = vpop.permute.xlu0 %1098
      %1100 = vrot.lane.b32.xlu0 %v1005, 110
      %v1101 = vpop.permute.xlu0 %1100
      %1102 = vrot.lane.b32.xlu0 %v1007, 110
      %v1103 = vpop.permute.xlu0 %1102
      %1104 = vrot.lane.b32.xlu0 %v1009, 110
      %v1105 = vpop.permute.xlu0 %1104
      %1106 = vrot.lane.b32.xlu0 %v1011, 110
      %v1107 = vpop.permute.xlu0 %1106
      %1108 = vrot.lane.b32.xlu0 %v1013, 110
      %v1109 = vpop.permute.xlu0 %1108
      %1110 = vrot.lane.b32.xlu0 %v1015, 110
      %v1111 = vpop.permute.xlu0 %1110
      %1112 = vrot.lane.b32.xlu0 %v1017, 110
      %v1113 = vpop.permute.xlu0 %1112
      %1114 = vrot.lane.b32.xlu0 %v1019, 110
      %v1115 = vpop.permute.xlu0 %1114
      %1116 = vrot.lane.b32.xlu0 %v1021, 110
      %v1117 = vpop.permute.xlu0 %1116
      %1118 = vrot.lane.b32.xlu0 %v1023, 110
      %v1119 = vpop.permute.xlu0 %1118
      %1120 = vrot.lane.b32.xlu0 %v1025, 110
      %v1121 = vpop.permute.xlu0 %1120
      %1122 = vrot.lane.b32.xlu0 %v1027, 110
      %v1123 = vpop.permute.xlu0 %1122
      %1124 = vrot.lane.b32.xlu0 %v1029, 110
      %v1125 = vpop.permute.xlu0 %1124
      %1126 = vrot.lane.b32.xlu0 %v1031, 110
      %v1127 = vpop.permute.xlu0 %1126
      %1128 = vrot.lane.b32.xlu0 %v1033, 110
      %v1129 = vpop.permute.xlu0 %1128
      %1130 = vrot.lane.b32.xlu0 %v1035, 110
      %v1131 = vpop.permute.xlu0 %1130
      %1132 = vrot.lane.b32.xlu0 %v1037, 110
      %v1133 = vpop.permute.xlu0 %1132
      %1134 = vrot.lane.b32.xlu0 %v1039, 110
      %v1135 = vpop.permute.xlu0 %1134
      %1136 = vrot.lane.b32.xlu0 %v1041, 110
      %v1137 = vpop.permute.xlu0 %1136
      %1170 = vst.msk [vmem:[%s253] sm:$0xff] %vm657, %v1075
      %1171 = vst.msk [vmem:[%s253 + $0x8] sm:$0xff] %vm657, %v1077
      %1172 = vst.msk [vmem:[%s253 + $0x10] sm:$0xff] %vm657, %v1079
      %1173 = vst.msk [vmem:[%s253 + $0x18] sm:$0xff] %vm657, %v1081
      %1174 = vst.msk [vmem:[%s253 + $0x20] sm:$0xff] %vm657, %v1083
      %1175 = vst.msk [vmem:[%s253 + $0x28] sm:$0xff] %vm657, %v1085
      %1176 = vst.msk [vmem:[%s253 + $0x30] sm:$0xff] %vm657, %v1087
      %1177 = vst.msk [vmem:[%s253 + $0x38] sm:$0xff] %vm657, %v1089
      %1178 = vst.msk [vmem:[%s253 + $0x40] sm:$0xff] %vm657, %v1091
      %1179 = vst.msk [vmem:[%s253 + $0x48] sm:$0xff] %vm657, %v1093
      %1180 = vst.msk [vmem:[%s253 + $0x50] sm:$0xff] %vm657, %v1095
      %1181 = vst.msk [vmem:[%s253 + $0x58] sm:$0xff] %vm657, %v1097
      %1182 = vst.msk [vmem:[%s253 + $0x60] sm:$0xff] %vm657, %v1099
      %1183 = vst.msk [vmem:[%s253 + $0x68] sm:$0xff] %vm657, %v1101
      %1184 = vst.msk [vmem:[%s253 + $0x70] sm:$0xff] %vm657, %v1103
      %1185 = vst.msk [vmem:[%s253 + $0x78] sm:$0xff] %vm657, %v1105
      %1186 = vst.msk [vmem:[%s253 + $0x80] sm:$0xff] %vm657, %v1107
      %1187 = vst.msk [vmem:[%s253 + $0x88] sm:$0xff] %vm657, %v1109
      %1188 = vst.msk [vmem:[%s253 + $0x90] sm:$0xff] %vm657, %v1111
      %1189 = vst.msk [vmem:[%s253 + $0x98] sm:$0xff] %vm657, %v1113
      %1190 = vst.msk [vmem:[%s253 + $0xa0] sm:$0xff] %vm657, %v1115
      %1191 = vst.msk [vmem:[%s253 + $0xa8] sm:$0xff] %vm657, %v1117
      %1192 = vst.msk [vmem:[%s253 + $0xb0] sm:$0xff] %vm657, %v1119
      %1193 = vst.msk [vmem:[%s253 + $0xb8] sm:$0xff] %vm657, %v1121
      %1194 = vst.msk [vmem:[%s253 + $0xc0] sm:$0xff] %vm657, %v1123
      %1195 = vst.msk [vmem:[%s253 + $0xc8] sm:$0xff] %vm657, %v1125
      %1196 = vst.msk [vmem:[%s253 + $0xd0] sm:$0xff] %vm657, %v1127
      %1197 = vst.msk [vmem:[%s253 + $0xd8] sm:$0xff] %vm657, %v1129
      %1198 = vst.msk [vmem:[%s253 + $0xe0] sm:$0xff] %vm657, %v1131
      %1199 = vst.msk [vmem:[%s253 + $0xe8] sm:$0xff] %vm657, %v1133
      %1200 = vst.msk [vmem:[%s253 + $0xf0] sm:$0xff] %vm657, %v1135
      %1201 = vst.msk [vmem:[%s253 + $0xf8] sm:$0xff] %vm657, %v1137
      %s1202 = smul.u32 32, %s17
      %p1203 = scmp.lt.s32.totalorder %s1202, 63
      %s1204 = scalar_select %p1203, %s1202, 63
      %s1205 = smul.addr %s1204, 8
      %s1206 = scalar_lea.vmem %s3, %s1205
      %s1207 = smul.u32 32, %s17
      %p1208 = scmp.lt.s32.totalorder %s1207, 63
      %s1209 = scalar_select %p1208, %s1207, 63
      %s1210 = smul.addr %s1209, 8
      %s1211 = scalar_lea.vmem %s4, %s1210
      %s1212 = smul.u32 32, %s17
      %p1213 = scmp.lt.s32.totalorder %s1212, 63
      %s1214 = scalar_select %p1213, %s1212, 63
      %s1215 = smul.addr %s1214, 8
      %s1216 = scalar_lea.vmem %s5, %s1215
      // Predicated region
      $region33: #{_lambda_.2} parent=31 // pred_check
        %p1217 = pneg %p103
      $region34: #{_lambda_.2} parent=31 // pred_check_branch
        %1219 = sbr.rel (%p1217) target = $region36
      $region35: #{_lambda_.2} parent=31 // pred_region
        %s1220 = smul.u32 32, %s17
      $region36: #{_lambda_.2} parent=31 // pred_fallthru
        _
      // Predicated region
      $region37: #{_lambda_.2} parent=31 // pred_check
        %p1221 = pneg %p129
      $region38: #{_lambda_.2} parent=31 // pred_check_branch
        %1223 = sbr.rel (%p1221) target = $region40
      $region39: #{_lambda_.2} parent=31 // pred_region
        %s1224 = smul.u32 32, %s17
      $region40: #{_lambda_.2} parent=31 // pred_fallthru
        _
      // Predicated region
      $region41: #{_lambda_.2} parent=31 // pred_check
        %p1225 = pneg %p155
      $region42: #{_lambda_.2} parent=31 // pred_check_branch
        %1227 = sbr.rel (%p1225) target = $region44
      $region43: #{_lambda_.2} parent=31 // pred_region
        %s1228 = smul.u32 32, %s17
      $region44: #{_lambda_.2} parent=31 // pred_fallthru
        _
    $region32: #{_lambda_.2} parent=5 // pred_fallthru
      _
    %p1229 = scmp.le.s32.totalorder 2, %s12
    // Predicated region
    $region45: #{_lambda_.2} parent=5 // pred_check
      %p1230 = pneg %p1229
    $region46: #{_lambda_.2} parent=5 // pred_check_branch
      %1232 = sbr.rel (%p1230) target = $region48
    $region47: #{_lambda_.2} parent=5 // pred_region
      %s1233 = ssub.s32 %s12, 2
      // Predicated region
      $region49: #{_lambda_.2} parent=47 // pred_check
        %p1234 = pneg %p109
      $region50: #{_lambda_.2} parent=47 // pred_check_branch
        %1236 = sbr.rel (%p1234) target = $region52
      $region51: #{_lambda_.2} parent=47 // pred_region
        %s1237 = smul.u32 32, %s18
        %p1238 = scmp.lt.s32.totalorder %s1237, 63
        %s1239 = scalar_select %p1238, %s1237, 63
        %s1240 = smul.addr %s1239, 8
        %s1241 = scalar_lea.vmem %s3, %s1240
      $region52: #{_lambda_.2} parent=47 // pred_fallthru
        _
      // Predicated region
      $region53: #{_lambda_.2} parent=47 // pred_check
        %p1242 = pneg %p135
      $region54: #{_lambda_.2} parent=47 // pred_check_branch
        %1244 = sbr.rel (%p1242) target = $region56
      $region55: #{_lambda_.2} parent=47 // pred_region
        %s1245 = smul.u32 32, %s18
        %p1246 = scmp.lt.s32.totalorder %s1245, 63
        %s1247 = scalar_select %p1246, %s1245, 63
        %s1248 = smul.addr %s1247, 8
        %s1249 = scalar_lea.vmem %s4, %s1248
      $region56: #{_lambda_.2} parent=47 // pred_fallthru
        _
      // Predicated region
      $region57: #{_lambda_.2} parent=47 // pred_check
        %p1250 = pneg %p161
      $region58: #{_lambda_.2} parent=47 // pred_check_branch
        %1252 = sbr.rel (%p1250) target = $region60
      $region59: #{_lambda_.2} parent=47 // pred_region
        %s1253 = smul.u32 32, %s18
        %p1254 = scmp.lt.s32.totalorder %s1253, 63
        %s1255 = scalar_select %p1254, %s1253, 63
        %s1256 = smul.addr %s1255, 8
        %s1257 = scalar_lea.vmem %s5, %s1256
      $region60: #{_lambda_.2} parent=47 // pred_fallthru
        _
    $region48: #{_lambda_.2} parent=5 // pred_fallthru
      _
  $region6: #{_lambda_.2} parent=0 // loop_footer
    %s16 = sadd.s32 1, %s12
  $region7: #{_lambda_.2} parent=0 // loop_footer_branch
    %11 = sbr.rel target = $region3
  $region8: #{_lambda_.2} parent=0 // loop_exit
    _

// kernel: _lambda_.3
$region0: #{_lambda_.3}
  #allocation0 [shape = 'u32[]', space=smem, size = 0x4, offset = 0x4, fixed_abs, tag = 'smem constant byte address 0x4 - core index']
  #allocation1 [shape = 'u32[144,128]{1,0:T(1,128)}', space=vmem, size = 0x12000, scoped, tag = 'internal scratch']
  %s0 = inlined_call_operand.vmem [shape: bf16[4,512,36], index: 0, kind: input, shape index: {}]
  %s1 = inlined_call_operand.vmem [shape: f32[4,512,9], index: 1, kind: input, shape index: {}]
  %s2 = inlined_call_operand.vmem [shape: f32[9,36], index: 2, kind: input, shape index: {}]
  %s3 = inlined_call_operand.vmem [shape: f32[36,8], index: 3, kind: input, shape index: {}]
  %s4 = inlined_call_operand.vmem [shape: f32[1,8], index: 4, kind: input, shape index: {}]
  %s5 = inlined_call_operand.vmem [shape: f32[512,8], index: 5, kind: output, shape index: {}]
  %s6 = sld [smem:[#allocation0]]
  $region132: #{_lambda_.3} parent=0
    _
  %s8 = ssub.s32 1, %s6
  %s9 = scalar_select 0, %s8, %s6
  $region1: #{_lambda_.3} parent=0
    #allocation2 [shape = 'u8[524288]{0}', space=vmem, size = 0x80000, scoped, tag = 'input window, operand 0']
    #allocation3 [shape = 'u8[1048576]{0}', space=vmem, size = 0x100000, scoped, tag = 'input window, operand 1']
    loop: start=0, step=1, limit=4
    $region2: #{_lambda_.3} parent=1 // loop_pre_header
      _
    $region3: #{_lambda_.3} parent=1 // loop_header
      %s11 = sphi 0, %s15
      %p12 = scmp.ge.s32.totalorder %s11, 4
      %s21 = sphi 0, %s23
      %s24 = sphi 0, %s21
      %s25 = sphi 0, %s24
      %s41 = sphi 0, %s25
      %s47 = sphi 0, %s49
      %s50 = sphi 0, %s47
      %s51 = sphi 0, %s50
      %s67 = sphi 0, %s51
      %s71 = sphi 0, %s71
      %s73 = sphi 0, %s71
      %s74 = sphi 0, %s73
      %s88 = sphi 0, %s74
      %s92 = sphi 0, %s92
      %s94 = sphi 0, %s92
      %s95 = sphi 0, %s94
      %s109 = sphi 0, %s95
      %s113 = sphi 0, %s113
      %s115 = sphi 0, %s113
      %s116 = sphi 0, %s115
      %s130 = sphi 0, %s116
      %s136 = sphi 0, %s138
      %s139 = sphi 0, %s136
      %s140 = sphi 0, %s139
      %s156 = sphi 0, %s140
    $region4: #{_lambda_.3} parent=1 // loop_header_branch
      %14 = sbr.rel (%p12) target = $region8
    $region5: #{_lambda_.3} parent=1 // loop_body
      %s16 = ssub.s32 %s11, 1
      %s17 = ssub.s32 %s11, 2
      %s18 = sadd.s32 %s11, 1
      %s19 = ssub.s32 %s11, %s18
      %p20 = scmp.eq.s32.totalorder %s19, 0
      %s22 = sadd.s32 %s21, 1
      %s23 = scalar_select %p20, %s21, %s22
      %p26 = pneg %p20
      %p27 = scmp.eq.s32.totalorder %s11, 1
      %p28 = por %p26, %p27
      %p29 = scmp.ne.s32.totalorder %s21, %s24
      %p30 = scmp.eq.s32.totalorder %s11, 0
      %p31 = por %p29, %p30
      %p32 = scmp.ne.s32.totalorder %s21, %s24
      %p33 = scmp.eq.s32.totalorder %s16, 1
      %p34 = por %p32, %p33
      %p35 = scmp.ne.s32.totalorder %s24, %s25
      %p36 = scmp.eq.s32.totalorder %s16, 0
      %p37 = por %p35, %p36
      %p38 = scmp.ne.s32.totalorder %s24, %s25
      %p39 = scmp.eq.s32.totalorder %s17, 1
      %p40 = por %p38, %p39
      %p42 = scmp.ne.s32.totalorder %s25, %s41
      %p43 = scmp.eq.s32.totalorder %s17, 0
      %p44 = por %p42, %p43
      %s45 = ssub.s32 %s11, %s18
      %p46 = scmp.eq.s32.totalorder %s45, 0
      %s48 = sadd.s32 %s47, 1
      %s49 = scalar_select %p46, %s47, %s48
      %p52 = pneg %p46
      %p53 = scmp.eq.s32.totalorder %s11, 1
      %p54 = por %p52, %p53
      %p55 = scmp.ne.s32.totalorder %s47, %s50
      %p56 = scmp.eq.s32.totalorder %s11, 0
      %p57 = por %p55, %p56
      %p58 = scmp.ne.s32.totalorder %s47, %s50
      %p59 = scmp.eq.s32.totalorder %s16, 1
      %p60 = por %p58, %p59
      %p61 = scmp.ne.s32.totalorder %s50, %s51
      %p62 = scmp.eq.s32.totalorder %s16, 0
      %p63 = por %p61, %p62
      %p64 = scmp.ne.s32.totalorder %s50, %s51
      %p65 = scmp.eq.s32.totalorder %s17, 1
      %p66 = por %p64, %p65
      %p68 = scmp.ne.s32.totalorder %s51, %s67
      %p69 = scmp.eq.s32.totalorder %s17, 0
      %p70 = por %p68, %p69
      %s72 = sadd.s32 %s71, 1
      %p75 = scmp.eq.s32.totalorder %s11, 1
      %p76 = scmp.ne.s32.totalorder %s71, %s73
      %p77 = scmp.eq.s32.totalorder %s11, 0
      %p78 = por %p76, %p77
      %p79 = scmp.ne.s32.totalorder %s71, %s73
      %p80 = scmp.eq.s32.totalorder %s16, 1
      %p81 = por %p79, %p80
      %p82 = scmp.ne.s32.totalorder %s73, %s74
      %p83 = scmp.eq.s32.totalorder %s16, 0
      %p84 = por %p82, %p83
      %p85 = scmp.ne.s32.totalorder %s73, %s74
      %p86 = scmp.eq.s32.totalorder %s17, 1
      %p87 = por %p85, %p86
      %p89 = scmp.ne.s32.totalorder %s74, %s88
      %p90 = scmp.eq.s32.totalorder %s17, 0
      %p91 = por %p89, %p90
      %s93 = sadd.s32 %s92, 1
      %p96 = scmp.eq.s32.totalorder %s11, 1
      %p97 = scmp.ne.s32.totalorder %s92, %s94
      %p98 = scmp.eq.s32.totalorder %s11, 0
      %p99 = por %p97, %p98
      %p100 = scmp.ne.s32.totalorder %s92, %s94
      %p101 = scmp.eq.s32.totalorder %s16, 1
      %p102 = por %p100, %p101
      %p103 = scmp.ne.s32.totalorder %s94, %s95
      %p104 = scmp.eq.s32.totalorder %s16, 0
      %p105 = por %p103, %p104
      %p106 = scmp.ne.s32.totalorder %s94, %s95
      %p107 = scmp.eq.s32.totalorder %s17, 1
      %p108 = por %p106, %p107
      %p110 = scmp.ne.s32.totalorder %s95, %s109
      %p111 = scmp.eq.s32.totalorder %s17, 0
      %p112 = por %p110, %p111
      %s114 = sadd.s32 %s113, 1
      %p117 = scmp.eq.s32.totalorder %s11, 1
      %p118 = scmp.ne.s32.totalorder %s113, %s115
      %p119 = scmp.eq.s32.totalorder %s11, 0
      %p120 = por %p118, %p119
      %p121 = scmp.ne.s32.totalorder %s113, %s115
      %p122 = scmp.eq.s32.totalorder %s16, 1
      %p123 = por %p121, %p122
      %p124 = scmp.ne.s32.totalorder %s115, %s116
      %p125 = scmp.eq.s32.totalorder %s16, 0
      %p126 = por %p124, %p125
      %p127 = scmp.ne.s32.totalorder %s115, %s116
      %p128 = scmp.eq.s32.totalorder %s17, 1
      %p129 = por %p127, %p128
      %p131 = scmp.ne.s32.totalorder %s116, %s130
      %p132 = scmp.eq.s32.totalorder %s17, 0
      %p133 = por %p131, %p132
      %s134 = ssub.s32 %s11, %s18
      %p135 = scmp.eq.s32.totalorder %s134, 0
      %s137 = sadd.s32 %s136, 1
      %s138 = scalar_select %p135, %s136, %s137
      %p141 = pneg %p135
      %p142 = scmp.eq.s32.totalorder %s11, 1
      %p143 = por %p141, %p142
      %p144 = scmp.ne.s32.totalorder %s136, %s139
      %p145 = scmp.eq.s32.totalorder %s11, 0
      %p146 = por %p144, %p145
      %p147 = scmp.ne.s32.totalorder %s136, %s139
      %p148 = scmp.eq.s32.totalorder %s16, 1
      %p149 = por %p147, %p148
      %p150 = scmp.ne.s32.totalorder %s139, %s140
      %p151 = scmp.eq.s32.totalorder %s16, 0
      %p152 = por %p150, %p151
      %p153 = scmp.ne.s32.totalorder %s139, %s140
      %p154 = scmp.eq.s32.totalorder %s17, 1
      %p155 = por %p153, %p154
      %p157 = scmp.ne.s32.totalorder %s140, %s156
      %p158 = scmp.eq.s32.totalorder %s17, 0
      %p159 = por %p157, %p158
      %p160 = scmp.le.s32.totalorder 1, %s11
      %p161 = scmp.lt.s32.totalorder %s11, 3
      %p162 = pnand %p160, %p161
      %p163 = pneg %p162
      // Predicated region
      $region9: #{_lambda_.3} parent=5 // pred_check
        _
      $region10: #{_lambda_.3} parent=5 // pred_check_branch
        %165 = sbr.rel (%p162) target = $region12
      $region11: #{_lambda_.3} parent=5 // pred_region
        %s166 = ssub.s32 %s11, 1
        // Predicated region
        $region13: #{_lambda_.3} parent=11 // pred_check
          %p167 = pneg %p84
        $region14: #{_lambda_.3} parent=11 // pred_check_branch
          %169 = sbr.rel (%p167) target = $region16
        $region15: #{_lambda_.3} parent=11 // pred_region
          _
        $region16: #{_lambda_.3} parent=11 // pred_fallthru
          _
        // Predicated region
        $region17: #{_lambda_.3} parent=11 // pred_check
          %p170 = pneg %p105
        $region18: #{_lambda_.3} parent=11 // pred_check_branch
          %172 = sbr.rel (%p170) target = $region20
        $region19: #{_lambda_.3} parent=11 // pred_region
          _
        $region20: #{_lambda_.3} parent=11 // pred_fallthru
          _
        // Predicated region
        $region21: #{_lambda_.3} parent=11 // pred_check
          %p173 = pneg %p126
        $region22: #{_lambda_.3} parent=11 // pred_check_branch
          %175 = sbr.rel (%p173) target = $region24
        $region23: #{_lambda_.3} parent=11 // pred_region
          _
        $region24: #{_lambda_.3} parent=11 // pred_fallthru
          _
      $region12: #{_lambda_.3} parent=5 // pred_fallthru
        _
      %p176 = scmp.lt.s32.totalorder %s11, 2
      // Predicated region
      $region25: #{_lambda_.3} parent=5 // pred_check
        %p177 = pneg %p176
      $region26: #{_lambda_.3} parent=5 // pred_check_branch
        %179 = sbr.rel (%p177) target = $region28
      $region27: #{_lambda_.3} parent=5 // pred_region
        // Predicated region
        $region29: #{_lambda_.3} parent=27 // pred_check
          %p180 = pneg %p31
        $region30: #{_lambda_.3} parent=27 // pred_check_branch
          %182 = sbr.rel (%p180) target = $region32
        $region31: #{_lambda_.3} parent=27 // pred_region
          %s183 = sand.u32 %s21, 1
          %s184 = sand.u32 %s21, 1
          %s185 = smul.addr %s184, 512
          %s186 = scalar_lea.vmem [#allocation2], %s185
          %s187 = smul.u32 32, %s11
          %s188 = smul.addr %s187, 4
          %s189 = scalar_lea.vmem %s0, %s188
          // Predicated region
          $region33: #{_lambda_.3} parent=31 // pred_check
            _
          $region34: #{_lambda_.3} parent=31 // pred_check_branch
            %191 = sbr.rel (0) target = $region36
          $region35: #{_lambda_.3} parent=31 // pred_region
            // Predicated region
            $region37: #{_lambda_.3} parent=35 // pred_check
              _
            $region38: #{_lambda_.3} parent=35 // pred_check_branch
              %193 = sbr.rel target = $region40
            $region39: #{_lambda_.3} parent=35 // pred_region
              // Predicated region
              $region52: #{_lambda_.3} parent=39 // pred_check
                _
              $region53: #{_lambda_.3} parent=39 // pred_check_branch
                %462 = sbr.rel (0) target = $region55
              $region54: #{_lambda_.3} parent=39 // pred_region
                loop: start=0, step=1, limit=1
                $region56: #{_lambda_.3} parent=54 // loop_pre_header
                  _
                $region57: #{_lambda_.3} parent=54 // loop_header
                  %s464 = sphi 0, %s468
                  %p465 = scmp.ge.s32.totalorder %s464, 1
                  %s469 = sphi %s189, %s189
                  %s470 = sphi %s186, %s186
                $region58: #{_lambda_.3} parent=54 // loop_header_branch
                  %467 = sbr.rel (%p465) target = $region62
                $region59: #{_lambda_.3} parent=54 // loop_body
                  _
                $region60: #{_lambda_.3} parent=54 // loop_footer
                  %s468 = sadd.s32 1, %s464
                $region61: #{_lambda_.3} parent=54 // loop_footer_branch
                  %463 = sbr.rel target = $region57
                $region62: #{_lambda_.3} parent=54 // loop_exit
                  _
                loop: start=0, step=1, limit=1
                $region63: #{_lambda_.3} parent=54 // loop_pre_header
                  _
                $region64: #{_lambda_.3} parent=54 // loop_header
                  %s473 = sphi 0, %s477
                  %p474 = scmp.ge.s32.totalorder %s473, 1
                  %s478 = sphi %s189, %s189
                  %s479 = sphi %s186, %s186
                $region65: #{_lambda_.3} parent=54 // loop_header_branch
                  %476 = sbr.rel (%p474) target = $region69
                $region66: #{_lambda_.3} parent=54 // loop_body
                  %v480 = vld [vmem:[%s478] sm:$0xf]
                  %481 = vst [vmem:[%s479] sm:$0xf] %v480
                  %v482 = vld [vmem:[%s478 + $0x4] sm:$0xf]
                  %483 = vst [vmem:[%s479 + $0x4] sm:$0xf] %v482
                  %v484 = vld [vmem:[%s478 + $0x8] sm:$0xf]
                  %485 = vst [vmem:[%s479 + $0x8] sm:$0xf] %v484
                  %v486 = vld [vmem:[%s478 + $0xc] sm:$0xf]
                  %487 = vst [vmem:[%s479 + $0xc] sm:$0xf] %v486
                  %v488 = vld [vmem:[%s478 + $0x10] sm:$0xf]
                  %489 = vst [vmem:[%s479 + $0x10] sm:$0xf] %v488
                  %v490 = vld [vmem:[%s478 + $0x14] sm:$0xf]
                  %491 = vst [vmem:[%s479 + $0x14] sm:$0xf] %v490
                  %v492 = vld [vmem:[%s478 + $0x18] sm:$0xf]
                  %493 = vst [vmem:[%s479 + $0x18] sm:$0xf] %v492
                  %v494 = vld [vmem:[%s478 + $0x1c] sm:$0xf]
                  %495 = vst [vmem:[%s479 + $0x1c] sm:$0xf] %v494
                  %v496 = vld [vmem:[%s478 + $0x20] sm:$0xf]
                  %497 = vst [vmem:[%s479 + $0x20] sm:$0xf] %v496
                  %v498 = vld [vmem:[%s478 + $0x24] sm:$0xf]
                  %499 = vst [vmem:[%s479 + $0x24] sm:$0xf] %v498
                  %v500 = vld [vmem:[%s478 + $0x28] sm:$0xf]
                  %501 = vst [vmem:[%s479 + $0x28] sm:$0xf] %v500
                  %v502 = vld [vmem:[%s478 + $0x2c] sm:$0xf]
                  %503 = vst [vmem:[%s479 + $0x2c] sm:$0xf] %v502
                  %v504 = vld [vmem:[%s478 + $0x30] sm:$0xf]
                  %505 = vst [vmem:[%s479 + $0x30] sm:$0xf] %v504
                  %v506 = vld [vmem:[%s478 + $0x34] sm:$0xf]
                  %507 = vst [vmem:[%s479 + $0x34] sm:$0xf] %v506
                  %v508 = vld [vmem:[%s478 + $0x38] sm:$0xf]
                  %509 = vst [vmem:[%s479 + $0x38] sm:$0xf] %v508
                  %v510 = vld [vmem:[%s478 + $0x3c] sm:$0xf]
                  %511 = vst [vmem:[%s479 + $0x3c] sm:$0xf] %v510
                  %v512 = vld [vmem:[%s478 + $0x40] sm:$0xf]
                  %513 = vst [vmem:[%s479 + $0x40] sm:$0xf] %v512
                  %v514 = vld [vmem:[%s478 + $0x44] sm:$0xf]
                  %515 = vst [vmem:[%s479 + $0x44] sm:$0xf] %v514
                  %v516 = vld [vmem:[%s478 + $0x48] sm:$0xf]
                  %517 = vst [vmem:[%s479 + $0x48] sm:$0xf] %v516
                  %v518 = vld [vmem:[%s478 + $0x4c] sm:$0xf]
                  %519 = vst [vmem:[%s479 + $0x4c] sm:$0xf] %v518
                  %v520 = vld [vmem:[%s478 + $0x50] sm:$0xf]
                  %521 = vst [vmem:[%s479 + $0x50] sm:$0xf] %v520
                  %v522 = vld [vmem:[%s478 + $0x54] sm:$0xf]
                  %523 = vst [vmem:[%s479 + $0x54] sm:$0xf] %v522
                  %v524 = vld [vmem:[%s478 + $0x58] sm:$0xf]
                  %525 = vst [vmem:[%s479 + $0x58] sm:$0xf] %v524
                  %v526 = vld [vmem:[%s478 + $0x5c] sm:$0xf]
                  %527 = vst [vmem:[%s479 + $0x5c] sm:$0xf] %v526
                  %v528 = vld [vmem:[%s478 + $0x60] sm:$0xf]
                  %529 = vst [vmem:[%s479 + $0x60] sm:$0xf] %v528
                  %v530 = vld [vmem:[%s478 + $0x64] sm:$0xf]
                  %531 = vst [vmem:[%s479 + $0x64] sm:$0xf] %v530
                  %v532 = vld [vmem:[%s478 + $0x68] sm:$0xf]
                  %533 = vst [vmem:[%s479 + $0x68] sm:$0xf] %v532
                  %v534 = vld [vmem:[%s478 + $0x6c] sm:$0xf]
                  %535 = vst [vmem:[%s479 + $0x6c] sm:$0xf] %v534
                  %v536 = vld [vmem:[%s478 + $0x70] sm:$0xf]
                  %537 = vst [vmem:[%s479 + $0x70] sm:$0xf] %v536
                  %v538 = vld [vmem:[%s478 + $0x74] sm:$0xf]
                  %539 = vst [vmem:[%s479 + $0x74] sm:$0xf] %v538
                  %v540 = vld [vmem:[%s478 + $0x78] sm:$0xf]
                  %541 = vst [vmem:[%s479 + $0x78] sm:$0xf] %v540
                  %v542 = vld [vmem:[%s478 + $0x7c] sm:$0xf]
                  %543 = vst [vmem:[%s479 + $0x7c] sm:$0xf] %v542
                  %v544 = vld [vmem:[%s478 + $0x100] sm:$0xf]
                  %545 = vst [vmem:[%s479 + $0x80] sm:$0xf] %v544
                  %v546 = vld [vmem:[%s478 + $0x104] sm:$0xf]
                  %547 = vst [vmem:[%s479 + $0x84] sm:$0xf] %v546
                  %v548 = vld [vmem:[%s478 + $0x108] sm:$0xf]
                  %549 = vst [vmem:[%s479 + $0x88] sm:$0xf] %v548
                  %v550 = vld [vmem:[%s478 + $0x10c] sm:$0xf]
                  %551 = vst [vmem:[%s479 + $0x8c] sm:$0xf] %v550
                  %v552 = vld [vmem:[%s478 + $0x110] sm:$0xf]
                  %553 = vst [vmem:[%s479 + $0x90] sm:$0xf] %v552
                  %v554 = vld [vmem:[%s478 + $0x114] sm:$0xf]
                  %555 = vst [vmem:[%s479 + $0x94] sm:$0xf] %v554
                  %v556 = vld [vmem:[%s478 + $0x118] sm:$0xf]
                  %557 = vst [vmem:[%s479 + $0x98] sm:$0xf] %v556
                  %v558 = vld [vmem:[%s478 + $0x11c] sm:$0xf]
                  %559 = vst [vmem:[%s479 + $0x9c] sm:$0xf] %v558
                  %v560 = vld [vmem:[%s478 + $0x120] sm:$0xf]
                  %561 = vst [vmem:[%s479 + $0xa0] sm:$0xf] %v560
                  %v562 = vld [vmem:[%s478 + $0x124] sm:$0xf]
                  %563 = vst [vmem:[%s479 + $0xa4] sm:$0xf] %v562
                  %v564 = vld [vmem:[%s478 + $0x128] sm:$0xf]
                  %565 = vst [vmem:[%s479 + $0xa8] sm:$0xf] %v564
                  %v566 = vld [vmem:[%s478 + $0x12c] sm:$0xf]
                  %567 = vst [vmem:[%s479 + $0xac] sm:$0xf] %v566
                  %v568 = vld [vmem:[%s478 + $0x130] sm:$0xf]
                  %569 = vst [vmem:[%s479 + $0xb0] sm:$0xf] %v568
                  %v570 = vld [vmem:[%s478 + $0x134] sm:$0xf]
                  %571 = vst [vmem:[%s479 + $0xb4] sm:$0xf] %v570
                  %v572 = vld [vmem:[%s478 + $0x138] sm:$0xf]
                  %573 = vst [vmem:[%s479 + $0xb8] sm:$0xf] %v572
                  %v574 = vld [vmem:[%s478 + $0x13c] sm:$0xf]
                  %575 = vst [vmem:[%s479 + $0xbc] sm:$0xf] %v574
                  %v576 = vld [vmem:[%s478 + $0x140] sm:$0xf]
                  %577 = vst [vmem:[%s479 + $0xc0] sm:$0xf] %v576
                  %v578 = vld [vmem:[%s478 + $0x144] sm:$0xf]
                  %579 = vst [vmem:[%s479 + $0xc4] sm:$0xf] %v578
                  %v580 = vld [vmem:[%s478 + $0x148] sm:$0xf]
                  %581 = vst [vmem:[%s479 + $0xc8] sm:$0xf] %v580
                  %v582 = vld [vmem:[%s478 + $0x14c] sm:$0xf]
                  %583 = vst [vmem:[%s479 + $0xcc] sm:$0xf] %v582
                  %v584 = vld [vmem:[%s478 + $0x150] sm:$0xf]
                  %585 = vst [vmem:[%s479 + $0xd0] sm:$0xf] %v584
                  %v586 = vld [vmem:[%s478 + $0x154] sm:$0xf]
                  %587 = vst [vmem:[%s479 + $0xd4] sm:$0xf] %v586
                  %v588 = vld [vmem:[%s478 + $0x158] sm:$0xf]
                  %589 = vst [vmem:[%s479 + $0xd8] sm:$0xf] %v588
                  %v590 = vld [vmem:[%s478 + $0x15c] sm:$0xf]
                  %591 = vst [vmem:[%s479 + $0xdc] sm:$0xf] %v590
                  %v592 = vld [vmem:[%s478 + $0x160] sm:$0xf]
                  %593 = vst [vmem:[%s479 + $0xe0] sm:$0xf] %v592
                  %v594 = vld [vmem:[%s478 + $0x164] sm:$0xf]
                  %595 = vst [vmem:[%s479 + $0xe4] sm:$0xf] %v594
                  %v596 = vld [vmem:[%s478 + $0x168] sm:$0xf]
                  %597 = vst [vmem:[%s479 + $0xe8] sm:$0xf] %v596
                  %v598 = vld [vmem:[%s478 + $0x16c] sm:$0xf]
                  %599 = vst [vmem:[%s479 + $0xec] sm:$0xf] %v598
                  %v600 = vld [vmem:[%s478 + $0x170] sm:$0xf]
                  %601 = vst [vmem:[%s479 + $0xf0] sm:$0xf] %v600
                  %v602 = vld [vmem:[%s478 + $0x174] sm:$0xf]
                  %603 = vst [vmem:[%s479 + $0xf4] sm:$0xf] %v602
                  %v604 = vld [vmem:[%s478 + $0x178] sm:$0xf]
                  %605 = vst [vmem:[%s479 + $0xf8] sm:$0xf] %v604
                  %v606 = vld [vmem:[%s478 + $0x17c] sm:$0xf]
                  %607 = vst [vmem:[%s479 + $0xfc] sm:$0xf] %v606
                  %v608 = vld [vmem:[%s478 + $0x200] sm:$0xf]
                  %609 = vst [vmem:[%s479 + $0x100] sm:$0xf] %v608
                  %v610 = vld [vmem:[%s478 + $0x204] sm:$0xf]
                  %611 = vst [vmem:[%s479 + $0x104] sm:$0xf] %v610
                  %v612 = vld [vmem:[%s478 + $0x208] sm:$0xf]
                  %613 = vst [vmem:[%s479 + $0x108] sm:$0xf] %v612
                  %v614 = vld [vmem:[%s478 + $0x20c] sm:$0xf]
                  %615 = vst [vmem:[%s479 + $0x10c] sm:$0xf] %v614
                  %v616 = vld [vmem:[%s478 + $0x210] sm:$0xf]
                  %617 = vst [vmem:[%s479 + $0x110] sm:$0xf] %v616
                  %v618 = vld [vmem:[%s478 + $0x214] sm:$0xf]
                  %619 = vst [vmem:[%s479 + $0x114] sm:$0xf] %v618
                  %v620 = vld [vmem:[%s478 + $0x218] sm:$0xf]
                  %621 = vst [vmem:[%s479 + $0x118] sm:$0xf] %v620
                  %v622 = vld [vmem:[%s478 + $0x21c] sm:$0xf]
                  %623 = vst [vmem:[%s479 + $0x11c] sm:$0xf] %v622
                  %v624 = vld [vmem:[%s478 + $0x220] sm:$0xf]
                  %625 = vst [vmem:[%s479 + $0x120] sm:$0xf] %v624
                  %v626 = vld [vmem:[%s478 + $0x224] sm:$0xf]
                  %627 = vst [vmem:[%s479 + $0x124] sm:$0xf] %v626
                  %v628 = vld [vmem:[%s478 + $0x228] sm:$0xf]
                  %629 = vst [vmem:[%s479 + $0x128] sm:$0xf] %v628
                  %v630 = vld [vmem:[%s478 + $0x22c] sm:$0xf]
                  %631 = vst [vmem:[%s479 + $0x12c] sm:$0xf] %v630
                  %v632 = vld [vmem:[%s478 + $0x230] sm:$0xf]
                  %633 = vst [vmem:[%s479 + $0x130] sm:$0xf] %v632
                  %v634 = vld [vmem:[%s478 + $0x234] sm:$0xf]
                  %635 = vst [vmem:[%s479 + $0x134] sm:$0xf] %v634
                  %v636 = vld [vmem:[%s478 + $0x238] sm:$0xf]
                  %637 = vst [vmem:[%s479 + $0x138] sm:$0xf] %v636
                  %v638 = vld [vmem:[%s478 + $0x23c] sm:$0xf]
                  %639 = vst [vmem:[%s479 + $0x13c] sm:$0xf] %v638
                  %v640 = vld [vmem:[%s478 + $0x240] sm:$0xf]
                  %641 = vst [vmem:[%s479 + $0x140] sm:$0xf] %v640
                  %v642 = vld [vmem:[%s478 + $0x244] sm:$0xf]
                  %643 = vst [vmem:[%s479 + $0x144] sm:$0xf] %v642
                  %v644 = vld [vmem:[%s478 + $0x248] sm:$0xf]
                  %645 = vst [vmem:[%s479 + $0x148] sm:$0xf] %v644
                  %v646 = vld [vmem:[%s478 + $0x24c] sm:$0xf]
                  %647 = vst [vmem:[%s479 + $0x14c] sm:$0xf] %v646
                  %v648 = vld [vmem:[%s478 + $0x250] sm:$0xf]
                  %649 = vst [vmem:[%s479 + $0x150] sm:$0xf] %v648
                  %v650 = vld [vmem:[%s478 + $0x254] sm:$0xf]
                  %651 = vst [vmem:[%s479 + $0x154] sm:$0xf] %v650
                  %v652 = vld [vmem:[%s478 + $0x258] sm:$0xf]
                  %653 = vst [vmem:[%s479 + $0x158] sm:$0xf] %v652
                  %v654 = vld [vmem:[%s478 + $0x25c] sm:$0xf]
                  %655 = vst [vmem:[%s479 + $0x15c] sm:$0xf] %v654
                  %v656 = vld [vmem:[%s478 + $0x260] sm:$0xf]
                  %657 = vst [vmem:[%s479 + $0x160] sm:$0xf] %v656
                  %v658 = vld [vmem:[%s478 + $0x264] sm:$0xf]
                  %659 = vst [vmem:[%s479 + $0x164] sm:$0xf] %v658
                  %v660 = vld [vmem:[%s478 + $0x268] sm:$0xf]
                  %661 = vst [vmem:[%s479 + $0x168] sm:$0xf] %v660
                  %v662 = vld [vmem:[%s478 + $0x26c] sm:$0xf]
                  %663 = vst [vmem:[%s479 + $0x16c] sm:$0xf] %v662
                  %v664 = vld [vmem:[%s478 + $0x270] sm:$0xf]
                  %665 = vst [vmem:[%s479 + $0x170] sm:$0xf] %v664
                  %v666 = vld [vmem:[%s478 + $0x274] sm:$0xf]
                  %667 = vst [vmem:[%s479 + $0x174] sm:$0xf] %v666
                  %v668 = vld [vmem:[%s478 + $0x278] sm:$0xf]
                  %669 = vst [vmem:[%s479 + $0x178] sm:$0xf] %v668
                  %v670 = vld [vmem:[%s478 + $0x27c] sm:$0xf]
                  %671 = vst [vmem:[%s479 + $0x17c] sm:$0xf] %v670
                  %v672 = vld [vmem:[%s478 + $0x300] sm:$0xf]
                  %673 = vst [vmem:[%s479 + $0x180] sm:$0xf] %v672
                  %v674 = vld [vmem:[%s478 + $0x304] sm:$0xf]
                  %675 = vst [vmem:[%s479 + $0x184] sm:$0xf] %v674
                  %v676 = vld [vmem:[%s478 + $0x308] sm:$0xf]
                  %677 = vst [vmem:[%s479 + $0x188] sm:$0xf] %v676
                  %v678 = vld [vmem:[%s478 + $0x30c] sm:$0xf]
                  %679 = vst [vmem:[%s479 + $0x18c] sm:$0xf] %v678
                  %v680 = vld [vmem:[%s478 + $0x310] sm:$0xf]
                  %681 = vst [vmem:[%s479 + $0x190] sm:$0xf] %v680
                  %v682 = vld [vmem:[%s478 + $0x314] sm:$0xf]
                  %683 = vst [vmem:[%s479 + $0x194] sm:$0xf] %v682
                  %v684 = vld [vmem:[%s478 + $0x318] sm:$0xf]
                  %685 = vst [vmem:[%s479 + $0x198] sm:$0xf] %v684
                  %v686 = vld [vmem:[%s478 + $0x31c] sm:$0xf]
                  %687 = vst [vmem:[%s479 + $0x19c] sm:$0xf] %v686
                  %v688 = vld [vmem:[%s478 + $0x320] sm:$0xf]
                  %689 = vst [vmem:[%s479 + $0x1a0] sm:$0xf] %v688
                  %v690 = vld [vmem:[%s478 + $0x324] sm:$0xf]
                  %691 = vst [vmem:[%s479 + $0x1a4] sm:$0xf] %v690
                  %v692 = vld [vmem:[%s478 + $0x328] sm:$0xf]
                  %693 = vst [vmem:[%s479 + $0x1a8] sm:$0xf] %v692
                  %v694 = vld [vmem:[%s478 + $0x32c] sm:$0xf]
                  %695 = vst [vmem:[%s479 + $0x1ac] sm:$0xf] %v694
                  %v696 = vld [vmem:[%s478 + $0x330] sm:$0xf]
                  %697 = vst [vmem:[%s479 + $0x1b0] sm:$0xf] %v696
                  %v698 = vld [vmem:[%s478 + $0x334] sm:$0xf]
                  %699 = vst [vmem:[%s479 + $0x1b4] sm:$0xf] %v698
                  %v700 = vld [vmem:[%s478 + $0x338] sm:$0xf]
                  %701 = vst [vmem:[%s479 + $0x1b8] sm:$0xf] %v700
                  %v702 = vld [vmem:[%s478 + $0x33c] sm:$0xf]
                  %703 = vst [vmem:[%s479 + $0x1bc] sm:$0xf] %v702
                  %v704 = vld [vmem:[%s478 + $0x340] sm:$0xf]
                  %705 = vst [vmem:[%s479 + $0x1c0] sm:$0xf] %v704
                  %v706 = vld [vmem:[%s478 + $0x344] sm:$0xf]
                  %707 = vst [vmem:[%s479 + $0x1c4] sm:$0xf] %v706
                  %v708 = vld [vmem:[%s478 + $0x348] sm:$0xf]
                  %709 = vst [vmem:[%s479 + $0x1c8] sm:$0xf] %v708
                  %v710 = vld [vmem:[%s478 + $0x34c] sm:$0xf]
                  %711 = vst [vmem:[%s479 + $0x1cc] sm:$0xf] %v710
                  %v712 = vld [vmem:[%s478 + $0x350] sm:$0xf]
                  %713 = vst [vmem:[%s479 + $0x1d0] sm:$0xf] %v712
                  %v714 = vld [vmem:[%s478 + $0x354] sm:$0xf]
                  %715 = vst [vmem:[%s479 + $0x1d4] sm:$0xf] %v714
                  %v716 = vld [vmem:[%s478 + $0x358] sm:$0xf]
                  %717 = vst [vmem:[%s479 + $0x1d8] sm:$0xf] %v716
                  %v718 = vld [vmem:[%s478 + $0x35c] sm:$0xf]
                  %719 = vst [vmem:[%s479 + $0x1dc] sm:$0xf] %v718
                  %v720 = vld [vmem:[%s478 + $0x360] sm:$0xf]
                  %721 = vst [vmem:[%s479 + $0x1e0] sm:$0xf] %v720
                  %v722 = vld [vmem:[%s478 + $0x364] sm:$0xf]
                  %723 = vst [vmem:[%s479 + $0x1e4] sm:$0xf] %v722
                  %v724 = vld [vmem:[%s478 + $0x368] sm:$0xf]
                  %725 = vst [vmem:[%s479 + $0x1e8] sm:$0xf] %v724
                  %v726 = vld [vmem:[%s478 + $0x36c] sm:$0xf]
                  %727 = vst [vmem:[%s479 + $0x1ec] sm:$0xf] %v726
                  %v728 = vld [vmem:[%s478 + $0x370] sm:$0xf]
                  %729 = vst [vmem:[%s479 + $0x1f0] sm:$0xf] %v728
                  %v730 = vld [vmem:[%s478 + $0x374] sm:$0xf]
                  %731 = vst [vmem:[%s479 + $0x1f4] sm:$0xf] %v730
                  %v732 = vld [vmem:[%s478 + $0x378] sm:$0xf]
                  %733 = vst [vmem:[%s479 + $0x1f8] sm:$0xf] %v732
                  %v734 = vld [vmem:[%s478 + $0x37c] sm:$0xf]
                  %735 = vst [vmem:[%s479 + $0x1fc] sm:$0xf] %v734
                $region67: #{_lambda_.3} parent=54 // loop_footer
                  %s477 = sadd.s32 1, %s473
                $region68: #{_lambda_.3} parent=54 // loop_footer_branch
                  %472 = sbr.rel target = $region64
                $region69: #{_lambda_.3} parent=54 // loop_exit
                  _
              $region55: #{_lambda_.3} parent=39 // pred_fallthru
                _
            $region40: #{_lambda_.3} parent=35 // pred_fallthru
              _
            // Predicated region
            $region41: #{_lambda_.3} parent=35 // pred_check
              _
            $region42: #{_lambda_.3} parent=35 // pred_check_branch
              %195 = sbr.rel (0) target = $region44
            $region43: #{_lambda_.3} parent=35 // pred_region
              loop: start=0, step=1, limit=1
              $region45: #{_lambda_.3} parent=43 // loop_pre_header
                _
              $region46: #{_lambda_.3} parent=43 // loop_header
                %s198 = sphi 0, %s202
                %p199 = scmp.ge.s32.totalorder %s198, 1
                %s203 = sphi %s189, %s189
                %s204 = sphi %s186, %s186
              $region47: #{_lambda_.3} parent=43 // loop_header_branch
                %201 = sbr.rel (%p199) target = $region51
              $region48: #{_lambda_.3} parent=43 // loop_body
                %v205 = vld [vmem:[%s203] sm:$0xf]
                %206 = vst [vmem:[%s204] sm:$0xf] %v205
                %v207 = vld [vmem:[%s203 + $0x4] sm:$0xf]
                %208 = vst [vmem:[%s204 + $0x4] sm:$0xf] %v207
                %v209 = vld [vmem:[%s203 + $0x8] sm:$0xf]
                %210 = vst [vmem:[%s204 + $0x8] sm:$0xf] %v209
                %v211 = vld [vmem:[%s203 + $0xc] sm:$0xf]
                %212 = vst [vmem:[%s204 + $0xc] sm:$0xf] %v211
                %v213 = vld [vmem:[%s203 + $0x10] sm:$0xf]
                %214 = vst [vmem:[%s204 + $0x10] sm:$0xf] %v213
                %v215 = vld [vmem:[%s203 + $0x14] sm:$0xf]
                %216 = vst [vmem:[%s204 + $0x14] sm:$0xf] %v215
                %v217 = vld [vmem:[%s203 + $0x18] sm:$0xf]
                %218 = vst [vmem:[%s204 + $0x18] sm:$0xf] %v217
                %v219 = vld [vmem:[%s203 + $0x1c] sm:$0xf]
                %220 = vst [vmem:[%s204 + $0x1c] sm:$0xf] %v219
                %v221 = vld [vmem:[%s203 + $0x20] sm:$0xf]
                %222 = vst [vmem:[%s204 + $0x20] sm:$0xf] %v221
                %v223 = vld [vmem:[%s203 + $0x24] sm:$0xf]
                %224 = vst [vmem:[%s204 + $0x24] sm:$0xf] %v223
                %v225 = vld [vmem:[%s203 + $0x28] sm:$0xf]
                %226 = vst [vmem:[%s204 + $0x28] sm:$0xf] %v225
                %v227 = vld [vmem:[%s203 + $0x2c] sm:$0xf]
                %228 = vst [vmem:[%s204 + $0x2c] sm:$0xf] %v227
                %v229 = vld [vmem:[%s203 + $0x30] sm:$0xf]
                %230 = vst [vmem:[%s204 + $0x30] sm:$0xf] %v229
                %v231 = vld [vmem:[%s203 + $0x34] sm:$0xf]
                %232 = vst [vmem:[%s204 + $0x34] sm:$0xf] %v231
                %v233 = vld [vmem:[%s203 + $0x38] sm:$0xf]
                %234 = vst [vmem:[%s204 + $0x38] sm:$0xf] %v233
                %v235 = vld [vmem:[%s203 + $0x3c] sm:$0xf]
                %236 = vst [vmem:[%s204 + $0x3c] sm:$0xf] %v235
                %v237 = vld [vmem:[%s203 + $0x40] sm:$0xf]
                %238 = vst [vmem:[%s204 + $0x40] sm:$0xf] %v237
                %v239 = vld [vmem:[%s203 + $0x44] sm:$0xf]
                %240 = vst [vmem:[%s204 + $0x44] sm:$0xf] %v239
                %v241 = vld [vmem:[%s203 + $0x48] sm:$0xf]
                %242 = vst [vmem:[%s204 + $0x48] sm:$0xf] %v241
                %v243 = vld [vmem:[%s203 + $0x4c] sm:$0xf]
                %244 = vst [vmem:[%s204 + $0x4c] sm:$0xf] %v243
                %v245 = vld [vmem:[%s203 + $0x50] sm:$0xf]
                %246 = vst [vmem:[%s204 + $0x50] sm:$0xf] %v245
                %v247 = vld [vmem:[%s203 + $0x54] sm:$0xf]
                %248 = vst [vmem:[%s204 + $0x54] sm:$0xf] %v247
                %v249 = vld [vmem:[%s203 + $0x58] sm:$0xf]
                %250 = vst [vmem:[%s204 + $0x58] sm:$0xf] %v249
                %v251 = vld [vmem:[%s203 + $0x5c] sm:$0xf]
                %252 = vst [vmem:[%s204 + $0x5c] sm:$0xf] %v251
                %v253 = vld [vmem:[%s203 + $0x60] sm:$0xf]
                %254 = vst [vmem:[%s204 + $0x60] sm:$0xf] %v253
                %v255 = vld [vmem:[%s203 + $0x64] sm:$0xf]
                %256 = vst [vmem:[%s204 + $0x64] sm:$0xf] %v255
                %v257 = vld [vmem:[%s203 + $0x68] sm:$0xf]
                %258 = vst [vmem:[%s204 + $0x68] sm:$0xf] %v257
                %v259 = vld [vmem:[%s203 + $0x6c] sm:$0xf]
                %260 = vst [vmem:[%s204 + $0x6c] sm:$0xf] %v259
                %v261 = vld [vmem:[%s203 + $0x70] sm:$0xf]
                %262 = vst [vmem:[%s204 + $0x70] sm:$0xf] %v261
                %v263 = vld [vmem:[%s203 + $0x74] sm:$0xf]
                %264 = vst [vmem:[%s204 + $0x74] sm:$0xf] %v263
                %v265 = vld [vmem:[%s203 + $0x78] sm:$0xf]
                %266 = vst [vmem:[%s204 + $0x78] sm:$0xf] %v265
                %v267 = vld [vmem:[%s203 + $0x7c] sm:$0xf]
                %268 = vst [vmem:[%s204 + $0x7c] sm:$0xf] %v267
                %v269 = vld [vmem:[%s203 + $0x100] sm:$0xf]
                %270 = vst [vmem:[%s204 + $0x80] sm:$0xf] %v269
                %v271 = vld [vmem:[%s203 + $0x104] sm:$0xf]
                %272 = vst [vmem:[%s204 + $0x84] sm:$0xf] %v271
                %v273 = vld [vmem:[%s203 + $0x108] sm:$0xf]
                %274 = vst [vmem:[%s204 + $0x88] sm:$0xf] %v273
                %v275 = vld [vmem:[%s203 + $0x10c] sm:$0xf]
                %276 = vst [vmem:[%s204 + $0x8c] sm:$0xf] %v275
                %v277 = vld [vmem:[%s203 + $0x110] sm:$0xf]
                %278 = vst [vmem:[%s204 + $0x90] sm:$0xf] %v277
                %v279 = vld [vmem:[%s203 + $0x114] sm:$0xf]
                %280 = vst [vmem:[%s204 + $0x94] sm:$0xf] %v279
                %v281 = vld [vmem:[%s203 + $0x118] sm:$0xf]
                %282 = vst [vmem:[%s204 + $0x98] sm:$0xf] %v281
                %v283 = vld [vmem:[%s203 + $0x11c] sm:$0xf]
                %284 = vst [vmem:[%s204 + $0x9c] sm:$0xf] %v283
                %v285 = vld [vmem:[%s203 + $0x120] sm:$0xf]
                %286 = vst [vmem:[%s204 + $0xa0] sm:$0xf] %v285
                %v287 = vld [vmem:[%s203 + $0x124] sm:$0xf]
                %288 = vst [vmem:[%s204 + $0xa4] sm:$0xf] %v287
                %v289 = vld [vmem:[%s203 + $0x128] sm:$0xf]
                %290 = vst [vmem:[%s204 + $0xa8] sm:$0xf] %v289
                %v291 = vld [vmem:[%s203 + $0x12c] sm:$0xf]
                %292 = vst [vmem:[%s204 + $0xac] sm:$0xf] %v291
                %v293 = vld [vmem:[%s203 + $0x130] sm:$0xf]
                %294 = vst [vmem:[%s204 + $0xb0] sm:$0xf] %v293
                %v295 = vld [vmem:[%s203 + $0x134] sm:$0xf]
                %296 = vst [vmem:[%s204 + $0xb4] sm:$0xf] %v295
                %v297 = vld [vmem:[%s203 + $0x138] sm:$0xf]
                %298 = vst [vmem:[%s204 + $0xb8] sm:$0xf] %v297
                %v299 = vld [vmem:[%s203 + $0x13c] sm:$0xf]
                %300 = vst [vmem:[%s204 + $0xbc] sm:$0xf] %v299
                %v301 = vld [vmem:[%s203 + $0x140] sm:$0xf]
                %302 = vst [vmem:[%s204 + $0xc0] sm:$0xf] %v301
                %v303 = vld [vmem:[%s203 + $0x144] sm:$0xf]
                %304 = vst [vmem:[%s204 + $0xc4] sm:$0xf] %v303
                %v305 = vld [vmem:[%s203 + $0x148] sm:$0xf]
                %306 = vst [vmem:[%s204 + $0xc8] sm:$0xf] %v305
                %v307 = vld [vmem:[%s203 + $0x14c] sm:$0xf]
                %308 = vst [vmem:[%s204 + $0xcc] sm:$0xf] %v307
                %v309 = vld [vmem:[%s203 + $0x150] sm:$0xf]
                %310 = vst [vmem:[%s204 + $0xd0] sm:$0xf] %v309
                %v311 = vld [vmem:[%s203 + $0x154] sm:$0xf]
                %312 = vst [vmem:[%s204 + $0xd4] sm:$0xf] %v311
                %v313 = vld [vmem:[%s203 + $0x158] sm:$0xf]
                %314 = vst [vmem:[%s204 + $0xd8] sm:$0xf] %v313
                %v315 = vld [vmem:[%s203 + $0x15c] sm:$0xf]
                %316 = vst [vmem:[%s204 + $0xdc] sm:$0xf] %v315
                %v317 = vld [vmem:[%s203 + $0x160] sm:$0xf]
                %318 = vst [vmem:[%s204 + $0xe0] sm:$0xf] %v317
                %v319 = vld [vmem:[%s203 + $0x164] sm:$0xf]
                %320 = vst [vmem:[%s204 + $0xe4] sm:$0xf] %v319
                %v321 = vld [vmem:[%s203 + $0x168] sm:$0xf]
                %322 = vst [vmem:[%s204 + $0xe8] sm:$0xf] %v321
                %v323 = vld [vmem:[%s203 + $0x16c] sm:$0xf]
                %324 = vst [vmem:[%s204 + $0xec] sm:$0xf] %v323
                %v325 = vld [vmem:[%s203 + $0x170] sm:$0xf]
                %326 = vst [vmem:[%s204 + $0xf0] sm:$0xf] %v325
                %v327 = vld [vmem:[%s203 + $0x174] sm:$0xf]
                %328 = vst [vmem:[%s204 + $0xf4] sm:$0xf] %v327
                %v329 = vld [vmem:[%s203 + $0x178] sm:$0xf]
                %330 = vst [vmem:[%s204 + $0xf8] sm:$0xf] %v329
                %v331 = vld [vmem:[%s203 + $0x17c] sm:$0xf]
                %332 = vst [vmem:[%s204 + $0xfc] sm:$0xf] %v331
                %v333 = vld [vmem:[%s203 + $0x200] sm:$0xf]
                %334 = vst [vmem:[%s204 + $0x100] sm:$0xf] %v333
                %v335 = vld [vmem:[%s203 + $0x204] sm:$0xf]
                %336 = vst [vmem:[%s204 + $0x104] sm:$0xf] %v335
                %v337 = vld [vmem:[%s203 + $0x208] sm:$0xf]
                %338 = vst [vmem:[%s204 + $0x108] sm:$0xf] %v337
                %v339 = vld [vmem:[%s203 + $0x20c] sm:$0xf]
                %340 = vst [vmem:[%s204 + $0x10c] sm:$0xf] %v339
                %v341 = vld [vmem:[%s203 + $0x210] sm:$0xf]
                %342 = vst [vmem:[%s204 + $0x110] sm:$0xf] %v341
                %v343 = vld [vmem:[%s203 + $0x214] sm:$0xf]
                %344 = vst [vmem:[%s204 + $0x114] sm:$0xf] %v343
                %v345 = vld [vmem:[%s203 + $0x218] sm:$0xf]
                %346 = vst [vmem:[%s204 + $0x118] sm:$0xf] %v345
                %v347 = vld [vmem:[%s203 + $0x21c] sm:$0xf]
                %348 = vst [vmem:[%s204 + $0x11c] sm:$0xf] %v347
                %v349 = vld [vmem:[%s203 + $0x220] sm:$0xf]
                %350 = vst [vmem:[%s204 + $0x120] sm:$0xf] %v349
                %v351 = vld [vmem:[%s203 + $0x224] sm:$0xf]
                %352 = vst [vmem:[%s204 + $0x124] sm:$0xf] %v351
                %v353 = vld [vmem:[%s203 + $0x228] sm:$0xf]
                %354 = vst [vmem:[%s204 + $0x128] sm:$0xf] %v353
                %v355 = vld [vmem:[%s203 + $0x22c] sm:$0xf]
                %356 = vst [vmem:[%s204 + $0x12c] sm:$0xf] %v355
                %v357 = vld [vmem:[%s203 + $0x230] sm:$0xf]
                %358 = vst [vmem:[%s204 + $0x130] sm:$0xf] %v357
                %v359 = vld [vmem:[%s203 + $0x234] sm:$0xf]
                %360 = vst [vmem:[%s204 + $0x134] sm:$0xf] %v359
                %v361 = vld [vmem:[%s203 + $0x238] sm:$0xf]
                %362 = vst [vmem:[%s204 + $0x138] sm:$0xf] %v361
                %v363 = vld [vmem:[%s203 + $0x23c] sm:$0xf]
                %364 = vst [vmem:[%s204 + $0x13c] sm:$0xf] %v363
                %v365 = vld [vmem:[%s203 + $0x240] sm:$0xf]
                %366 = vst [vmem:[%s204 + $0x140] sm:$0xf] %v365
                %v367 = vld [vmem:[%s203 + $0x244] sm:$0xf]
                %368 = vst [vmem:[%s204 + $0x144] sm:$0xf] %v367
                %v369 = vld [vmem:[%s203 + $0x248] sm:$0xf]
                %370 = vst [vmem:[%s204 + $0x148] sm:$0xf] %v369
                %v371 = vld [vmem:[%s203 + $0x24c] sm:$0xf]
                %372 = vst [vmem:[%s204 + $0x14c] sm:$0xf] %v371
                %v373 = vld [vmem:[%s203 + $0x250] sm:$0xf]
                %374 = vst [vmem:[%s204 + $0x150] sm:$0xf] %v373
                %v375 = vld [vmem:[%s203 + $0x254] sm:$0xf]
                %376 = vst [vmem:[%s204 + $0x154] sm:$0xf] %v375
                %v377 = vld [vmem:[%s203 + $0x258] sm:$0xf]
                %378 = vst [vmem:[%s204 + $0x158] sm:$0xf] %v377
                %v379 = vld [vmem:[%s203 + $0x25c] sm:$0xf]
                %380 = vst [vmem:[%s204 + $0x15c] sm:$0xf] %v379
                %v381 = vld [vmem:[%s203 + $0x260] sm:$0xf]
                %382 = vst [vmem:[%s204 + $0x160] sm:$0xf] %v381
                %v383 = vld [vmem:[%s203 + $0x264] sm:$0xf]
                %384 = vst [vmem:[%s204 + $0x164] sm:$0xf] %v383
                %v385 = vld [vmem:[%s203 + $0x268] sm:$0xf]
                %386 = vst [vmem:[%s204 + $0x168] sm:$0xf] %v385
                %v387 = vld [vmem:[%s203 + $0x26c] sm:$0xf]
                %388 = vst [vmem:[%s204 + $0x16c] sm:$0xf] %v387
                %v389 = vld [vmem:[%s203 + $0x270] sm:$0xf]
                %390 = vst [vmem:[%s204 + $0x170] sm:$0xf] %v389
                %v391 = vld [vmem:[%s203 + $0x274] sm:$0xf]
                %392 = vst [vmem:[%s204 + $0x174] sm:$0xf] %v391
                %v393 = vld [vmem:[%s203 + $0x278] sm:$0xf]
                %394 = vst [vmem:[%s204 + $0x178] sm:$0xf] %v393
                %v395 = vld [vmem:[%s203 + $0x27c] sm:$0xf]
                %396 = vst [vmem:[%s204 + $0x17c] sm:$0xf] %v395
                %v397 = vld [vmem:[%s203 + $0x300] sm:$0xf]
                %398 = vst [vmem:[%s204 + $0x180] sm:$0xf] %v397
                %v399 = vld [vmem:[%s203 + $0x304] sm:$0xf]
                %400 = vst [vmem:[%s204 + $0x184] sm:$0xf] %v399
                %v401 = vld [vmem:[%s203 + $0x308] sm:$0xf]
                %402 = vst [vmem:[%s204 + $0x188] sm:$0xf] %v401
                %v403 = vld [vmem:[%s203 + $0x30c] sm:$0xf]
                %404 = vst [vmem:[%s204 + $0x18c] sm:$0xf] %v403
                %v405 = vld [vmem:[%s203 + $0x310] sm:$0xf]
                %406 = vst [vmem:[%s204 + $0x190] sm:$0xf] %v405
                %v407 = vld [vmem:[%s203 + $0x314] sm:$0xf]
                %408 = vst [vmem:[%s204 + $0x194] sm:$0xf] %v407
                %v409 = vld [vmem:[%s203 + $0x318] sm:$0xf]
                %410 = vst [vmem:[%s204 + $0x198] sm:$0xf] %v409
                %v411 = vld [vmem:[%s203 + $0x31c] sm:$0xf]
                %412 = vst [vmem:[%s204 + $0x19c] sm:$0xf] %v411
                %v413 = vld [vmem:[%s203 + $0x320] sm:$0xf]
                %414 = vst [vmem:[%s204 + $0x1a0] sm:$0xf] %v413
                %v415 = vld [vmem:[%s203 + $0x324] sm:$0xf]
                %416 = vst [vmem:[%s204 + $0x1a4] sm:$0xf] %v415
                %v417 = vld [vmem:[%s203 + $0x328] sm:$0xf]
                %418 = vst [vmem:[%s204 + $0x1a8] sm:$0xf] %v417
                %v419 = vld [vmem:[%s203 + $0x32c] sm:$0xf]
                %420 = vst [vmem:[%s204 + $0x1ac] sm:$0xf] %v419
                %v421 = vld [vmem:[%s203 + $0x330] sm:$0xf]
                %422 = vst [vmem:[%s204 + $0x1b0] sm:$0xf] %v421
                %v423 = vld [vmem:[%s203 + $0x334] sm:$0xf]
                %424 = vst [vmem:[%s204 + $0x1b4] sm:$0xf] %v423
                %v425 = vld [vmem:[%s203 + $0x338] sm:$0xf]
                %426 = vst [vmem:[%s204 + $0x1b8] sm:$0xf] %v425
                %v427 = vld [vmem:[%s203 + $0x33c] sm:$0xf]
                %428 = vst [vmem:[%s204 + $0x1bc] sm:$0xf] %v427
                %v429 = vld [vmem:[%s203 + $0x340] sm:$0xf]
                %430 = vst [vmem:[%s204 + $0x1c0] sm:$0xf] %v429
                %v431 = vld [vmem:[%s203 + $0x344] sm:$0xf]
                %432 = vst [vmem:[%s204 + $0x1c4] sm:$0xf] %v431
                %v433 = vld [vmem:[%s203 + $0x348] sm:$0xf]
                %434 = vst [vmem:[%s204 + $0x1c8] sm:$0xf] %v433
                %v435 = vld [vmem:[%s203 + $0x34c] sm:$0xf]
                %436 = vst [vmem:[%s204 + $0x1cc] sm:$0xf] %v435
                %v437 = vld [vmem:[%s203 + $0x350] sm:$0xf]
                %438 = vst [vmem:[%s204 + $0x1d0] sm:$0xf] %v437
                %v439 = vld [vmem:[%s203 + $0x354] sm:$0xf]
                %440 = vst [vmem:[%s204 + $0x1d4] sm:$0xf] %v439
                %v441 = vld [vmem:[%s203 + $0x358] sm:$0xf]
                %442 = vst [vmem:[%s204 + $0x1d8] sm:$0xf] %v441
                %v443 = vld [vmem:[%s203 + $0x35c] sm:$0xf]
                %444 = vst [vmem:[%s204 + $0x1dc] sm:$0xf] %v443
                %v445 = vld [vmem:[%s203 + $0x360] sm:$0xf]
                %446 = vst [vmem:[%s204 + $0x1e0] sm:$0xf] %v445
                %v447 = vld [vmem:[%s203 + $0x364] sm:$0xf]
                %448 = vst [vmem:[%s204 + $0x1e4] sm:$0xf] %v447
                %v449 = vld [vmem:[%s203 + $0x368] sm:$0xf]
                %450 = vst [vmem:[%s204 + $0x1e8] sm:$0xf] %v449
                %v451 = vld [vmem:[%s203 + $0x36c] sm:$0xf]
                %452 = vst [vmem:[%s204 + $0x1ec] sm:$0xf] %v451
                %v453 = vld [vmem:[%s203 + $0x370] sm:$0xf]
                %454 = vst [vmem:[%s204 + $0x1f0] sm:$0xf] %v453
                %v455 = vld [vmem:[%s203 + $0x374] sm:$0xf]
                %456 = vst [vmem:[%s204 + $0x1f4] sm:$0xf] %v455
                %v457 = vld [vmem:[%s203 + $0x378] sm:$0xf]
                %458 = vst [vmem:[%s204 + $0x1f8] sm:$0xf] %v457
                %v459 = vld [vmem:[%s203 + $0x37c] sm:$0xf]
                %460 = vst [vmem:[%s204 + $0x1fc] sm:$0xf] %v459
              $region49: #{_lambda_.3} parent=43 // loop_footer
                %s202 = sadd.s32 1, %s198
              $region50: #{_lambda_.3} parent=43 // loop_footer_branch
                %197 = sbr.rel target = $region46
              $region51: #{_lambda_.3} parent=43 // loop_exit
                _
            $region44: #{_lambda_.3} parent=35 // pred_fallthru
              _
          $region36: #{_lambda_.3} parent=31 // pred_fallthru
            _
          %736 = vnop
        $region32: #{_lambda_.3} parent=27 // pred_fallthru
          _
        // Predicated region
        $region70: #{_lambda_.3} parent=27 // pred_check
          %p737 = pneg %p57
        $region71: #{_lambda_.3} parent=27 // pred_check_branch
          %739 = sbr.rel (%p737) target = $region73
        $region72: #{_lambda_.3} parent=27 // pred_region
          %s740 = sand.u32 %s47, 1
          %s741 = sand.u32 %s47, 1
          %s742 = smul.addr %s741, 1024
          %s743 = scalar_lea.vmem [#allocation3], %s742
          %s744 = smul.u32 32, %s11
          %s745 = smul.addr %s744, 8
          %s746 = scalar_lea.vmem %s1, %s745
          // Predicated region
          $region74: #{_lambda_.3} parent=72 // pred_check
            _
          $region75: #{_lambda_.3} parent=72 // pred_check_branch
            %748 = sbr.rel (0) target = $region77
          $region76: #{_lambda_.3} parent=72 // pred_region
            // Predicated region
            $region78: #{_lambda_.3} parent=76 // pred_check
              _
            $region79: #{_lambda_.3} parent=76 // pred_check_branch
              %750 = sbr.rel (0) target = $region81
            $region80: #{_lambda_.3} parent=76 // pred_region
              // Predicated region
              $region93: #{_lambda_.3} parent=80 // pred_check
                _
              $region94: #{_lambda_.3} parent=80 // pred_check_branch
                %1019 = sbr.rel (0) target = $region96
              $region95: #{_lambda_.3} parent=80 // pred_region
                loop: start=0, step=1, limit=1
                $region97: #{_lambda_.3} parent=95 // loop_pre_header
                  _
                $region98: #{_lambda_.3} parent=95 // loop_header
                  %s1021 = sphi 0, %s1025
                  %p1022 = scmp.ge.s32.totalorder %s1021, 1
                  %s1026 = sphi %s746, %s746
                  %s1027 = sphi %s743, %s743
                $region99: #{_lambda_.3} parent=95 // loop_header_branch
                  %1024 = sbr.rel (%p1022) target = $region103
                $region100: #{_lambda_.3} parent=95 // loop_body
                  %v1028 = vld [vmem:[%s1026] sm:$0xff]
                  %1029 = vst [vmem:[%s1027] sm:$0xff] %v1028
                  %v1030 = vld [vmem:[%s1026 + $0x8] sm:$0xff]
                  %1031 = vst [vmem:[%s1027 + $0x8] sm:$0xff] %v1030
                  %v1032 = vld [vmem:[%s1026 + $0x10] sm:$0xff]
                  %1033 = vst [vmem:[%s1027 + $0x10] sm:$0xff] %v1032
                  %v1034 = vld [vmem:[%s1026 + $0x18] sm:$0xff]
                  %1035 = vst [vmem:[%s1027 + $0x18] sm:$0xff] %v1034
                  %v1036 = vld [vmem:[%s1026 + $0x20] sm:$0xff]
                  %1037 = vst [vmem:[%s1027 + $0x20] sm:$0xff] %v1036
                  %v1038 = vld [vmem:[%s1026 + $0x28] sm:$0xff]
                  %1039 = vst [vmem:[%s1027 + $0x28] sm:$0xff] %v1038
                  %v1040 = vld [vmem:[%s1026 + $0x30] sm:$0xff]
                  %1041 = vst [vmem:[%s1027 + $0x30] sm:$0xff] %v1040
                  %v1042 = vld [vmem:[%s1026 + $0x38] sm:$0xff]
                  %1043 = vst [vmem:[%s1027 + $0x38] sm:$0xff] %v1042
                  %v1044 = vld [vmem:[%s1026 + $0x40] sm:$0xff]
                  %1045 = vst [vmem:[%s1027 + $0x40] sm:$0xff] %v1044
                  %v1046 = vld [vmem:[%s1026 + $0x48] sm:$0xff]
                  %1047 = vst [vmem:[%s1027 + $0x48] sm:$0xff] %v1046
                  %v1048 = vld [vmem:[%s1026 + $0x50] sm:$0xff]
                  %1049 = vst [vmem:[%s1027 + $0x50] sm:$0xff] %v1048
                  %v1050 = vld [vmem:[%s1026 + $0x58] sm:$0xff]
                  %1051 = vst [vmem:[%s1027 + $0x58] sm:$0xff] %v1050
                  %v1052 = vld [vmem:[%s1026 + $0x60] sm:$0xff]
                  %1053 = vst [vmem:[%s1027 + $0x60] sm:$0xff] %v1052
                  %v1054 = vld [vmem:[%s1026 + $0x68] sm:$0xff]
                  %1055 = vst [vmem:[%s1027 + $0x68] sm:$0xff] %v1054
                  %v1056 = vld [vmem:[%s1026 + $0x70] sm:$0xff]
                  %1057 = vst [vmem:[%s1027 + $0x70] sm:$0xff] %v1056
                  %v1058 = vld [vmem:[%s1026 + $0x78] sm:$0xff]
                  %1059 = vst [vmem:[%s1027 + $0x78] sm:$0xff] %v1058
                  %v1060 = vld [vmem:[%s1026 + $0x80] sm:$0xff]
                  %1061 = vst [vmem:[%s1027 + $0x80] sm:$0xff] %v1060
                  %v1062 = vld [vmem:[%s1026 + $0x88] sm:$0xff]
                  %1063 = vst [vmem:[%s1027 + $0x88] sm:$0xff] %v1062
                  %v1064 = vld [vmem:[%s1026 + $0x90] sm:$0xff]
                  %1065 = vst [vmem:[%s1027 + $0x90] sm:$0xff] %v1064
                  %v1066 = vld [vmem:[%s1026 + $0x98] sm:$0xff]
                  %1067 = vst [vmem:[%s1027 + $0x98] sm:$0xff] %v1066
                  %v1068 = vld [vmem:[%s1026 + $0xa0] sm:$0xff]
                  %1069 = vst [vmem:[%s1027 + $0xa0] sm:$0xff] %v1068
                  %v1070 = vld [vmem:[%s1026 + $0xa8] sm:$0xff]
                  %1071 = vst [vmem:[%s1027 + $0xa8] sm:$0xff] %v1070
                  %v1072 = vld [vmem:[%s1026 + $0xb0] sm:$0xff]
                  %1073 = vst [vmem:[%s1027 + $0xb0] sm:$0xff] %v1072
                  %v1074 = vld [vmem:[%s1026 + $0xb8] sm:$0xff]
                  %1075 = vst [vmem:[%s1027 + $0xb8] sm:$0xff] %v1074
                  %v1076 = vld [vmem:[%s1026 + $0xc0] sm:$0xff]
                  %1077 = vst [vmem:[%s1027 + $0xc0] sm:$0xff] %v1076
                  %v1078 = vld [vmem:[%s1026 + $0xc8] sm:$0xff]
                  %1079 = vst [vmem:[%s1027 + $0xc8] sm:$0xff] %v1078
                  %v1080 = vld [vmem:[%s1026 + $0xd0] sm:$0xff]
                  %1081 = vst [vmem:[%s1027 + $0xd0] sm:$0xff] %v1080
                  %v1082 = vld [vmem:[%s1026 + $0xd8] sm:$0xff]
                  %1083 = vst [vmem:[%s1027 + $0xd8] sm:$0xff] %v1082
                  %v1084 = vld [vmem:[%s1026 + $0xe0] sm:$0xff]
                  %1085 = vst [vmem:[%s1027 + $0xe0] sm:$0xff] %v1084
                  %v1086 = vld [vmem:[%s1026 + $0xe8] sm:$0xff]
                  %1087 = vst [vmem:[%s1027 + $0xe8] sm:$0xff] %v1086
                  %v1088 = vld [vmem:[%s1026 + $0xf0] sm:$0xff]
                  %1089 = vst [vmem:[%s1027 + $0xf0] sm:$0xff] %v1088
                  %v1090 = vld [vmem:[%s1026 + $0xf8] sm:$0xff]
                  %1091 = vst [vmem:[%s1027 + $0xf8] sm:$0xff] %v1090
                  %v1092 = vld [vmem:[%s1026 + $0x200] sm:$0xff]
                  %1093 = vst [vmem:[%s1027 + $0x100] sm:$0xff] %v1092
                  %v1094 = vld [vmem:[%s1026 + $0x208] sm:$0xff]
                  %1095 = vst [vmem:[%s1027 + $0x108] sm:$0xff] %v1094
                  %v1096 = vld [vmem:[%s1026 + $0x210] sm:$0xff]
                  %1097 = vst [vmem:[%s1027 + $0x110] sm:$0xff] %v1096
                  %v1098 = vld [vmem:[%s1026 + $0x218] sm:$0xff]
                  %1099 = vst [vmem:[%s1027 + $0x118] sm:$0xff] %v1098
                  %v1100 = vld [vmem:[%s1026 + $0x220] sm:$0xff]
                  %1101 = vst [vmem:[%s1027 + $0x120] sm:$0xff] %v1100
                  %v1102 = vld [vmem:[%s1026 + $0x228] sm:$0xff]
                  %1103 = vst [vmem:[%s1027 + $0x128] sm:$0xff] %v1102
                  %v1104 = vld [vmem:[%s1026 + $0x230] sm:$0xff]
                  %1105 = vst [vmem:[%s1027 + $0x130] sm:$0xff] %v1104
                  %v1106 = vld [vmem:[%s1026 + $0x238] sm:$0xff]
                  %1107 = vst [vmem:[%s1027 + $0x138] sm:$0xff] %v1106
                  %v1108 = vld [vmem:[%s1026 + $0x240] sm:$0xff]
                  %1109 = vst [vmem:[%s1027 + $0x140] sm:$0xff] %v1108
                  %v1110 = vld [vmem:[%s1026 + $0x248] sm:$0xff]
                  %1111 = vst [vmem:[%s1027 + $0x148] sm:$0xff] %v1110
                  %v1112 = vld [vmem:[%s1026 + $0x250] sm:$0xff]
                  %1113 = vst [vmem:[%s1027 + $0x150] sm:$0xff] %v1112
                  %v1114 = vld [vmem:[%s1026 + $0x258] sm:$0xff]
                  %1115 = vst [vmem:[%s1027 + $0x158] sm:$0xff] %v1114
                  %v1116 = vld [vmem:[%s1026 + $0x260] sm:$0xff]
                  %1117 = vst [vmem:[%s1027 + $0x160] sm:$0xff] %v1116
                  %v1118 = vld [vmem:[%s1026 + $0x268] sm:$0xff]
                  %1119 = vst [vmem:[%s1027 + $0x168] sm:$0xff] %v1118
                  %v1120 = vld [vmem:[%s1026 + $0x270] sm:$0xff]
                  %1121 = vst [vmem:[%s1027 + $0x170] sm:$0xff] %v1120
                  %v1122 = vld [vmem:[%s1026 + $0x278] sm:$0xff]
                  %1123 = vst [vmem:[%s1027 + $0x178] sm:$0xff] %v1122
                  %v1124 = vld [vmem:[%s1026 + $0x280] sm:$0xff]
                  %1125 = vst [vmem:[%s1027 + $0x180] sm:$0xff] %v1124
                  %v1126 = vld [vmem:[%s1026 + $0x288] sm:$0xff]
                  %1127 = vst [vmem:[%s1027 + $0x188] sm:$0xff] %v1126
                  %v1128 = vld [vmem:[%s1026 + $0x290] sm:$0xff]
                  %1129 = vst [vmem:[%s1027 + $0x190] sm:$0xff] %v1128
                  %v1130 = vld [vmem:[%s1026 + $0x298] sm:$0xff]
                  %1131 = vst [vmem:[%s1027 + $0x198] sm:$0xff] %v1130
                  %v1132 = vld [vmem:[%s1026 + $0x2a0] sm:$0xff]
                  %1133 = vst [vmem:[%s1027 + $0x1a0] sm:$0xff] %v1132
                  %v1134 = vld [vmem:[%s1026 + $0x2a8] sm:$0xff]
                  %1135 = vst [vmem:[%s1027 + $0x1a8] sm:$0xff] %v1134
                  %v1136 = vld [vmem:[%s1026 + $0x2b0] sm:$0xff]
                  %1137 = vst [vmem:[%s1027 + $0x1b0] sm:$0xff] %v1136
                  %v1138 = vld [vmem:[%s1026 + $0x2b8] sm:$0xff]
                  %1139 = vst [vmem:[%s1027 + $0x1b8] sm:$0xff] %v1138
                  %v1140 = vld [vmem:[%s1026 + $0x2c0] sm:$0xff]
                  %1141 = vst [vmem:[%s1027 + $0x1c0] sm:$0xff] %v1140
                  %v1142 = vld [vmem:[%s1026 + $0x2c8] sm:$0xff]
                  %1143 = vst [vmem:[%s1027 + $0x1c8] sm:$0xff] %v1142
                  %v1144 = vld [vmem:[%s1026 + $0x2d0] sm:$0xff]
                  %1145 = vst [vmem:[%s1027 + $0x1d0] sm:$0xff] %v1144
                  %v1146 = vld [vmem:[%s1026 + $0x2d8] sm:$0xff]
                  %1147 = vst [vmem:[%s1027 + $0x1d8] sm:$0xff] %v1146
                  %v1148 = vld [vmem:[%s1026 + $0x2e0] sm:$0xff]
                  %1149 = vst [vmem:[%s1027 + $0x1e0] sm:$0xff] %v1148
                  %v1150 = vld [vmem:[%s1026 + $0x2e8] sm:$0xff]
                  %1151 = vst [vmem:[%s1027 + $0x1e8] sm:$0xff] %v1150
                  %v1152 = vld [vmem:[%s1026 + $0x2f0] sm:$0xff]
                  %1153 = vst [vmem:[%s1027 + $0x1f0] sm:$0xff] %v1152
                  %v1154 = vld [vmem:[%s1026 + $0x2f8] sm:$0xff]
                  %1155 = vst [vmem:[%s1027 + $0x1f8] sm:$0xff] %v1154
                  %v1156 = vld [vmem:[%s1026 + $0x400] sm:$0xff]
                  %1157 = vst [vmem:[%s1027 + $0x200] sm:$0xff] %v1156
                  %v1158 = vld [vmem:[%s1026 + $0x408] sm:$0xff]
                  %1159 = vst [vmem:[%s1027 + $0x208] sm:$0xff] %v1158
                  %v1160 = vld [vmem:[%s1026 + $0x410] sm:$0xff]
                  %1161 = vst [vmem:[%s1027 + $0x210] sm:$0xff] %v1160
                  %v1162 = vld [vmem:[%s1026 + $0x418] sm:$0xff]
                  %1163 = vst [vmem:[%s1027 + $0x218] sm:$0xff] %v1162
                  %v1164 = vld [vmem:[%s1026 + $0x420] sm:$0xff]
                  %1165 = vst [vmem:[%s1027 + $0x220] sm:$0xff] %v1164
                  %v1166 = vld [vmem:[%s1026 + $0x428] sm:$0xff]
                  %1167 = vst [vmem:[%s1027 + $0x228] sm:$0xff] %v1166
                  %v1168 = vld [vmem:[%s1026 + $0x430] sm:$0xff]
                  %1169 = vst [vmem:[%s1027 + $0x230] sm:$0xff] %v1168
                  %v1170 = vld [vmem:[%s1026 + $0x438] sm:$0xff]
                  %1171 = vst [vmem:[%s1027 + $0x238] sm:$0xff] %v1170
                  %v1172 = vld [vmem:[%s1026 + $0x440] sm:$0xff]
                  %1173 = vst [vmem:[%s1027 + $0x240] sm:$0xff] %v1172
                  %v1174 = vld [vmem:[%s1026 + $0x448] sm:$0xff]
                  %1175 = vst [vmem:[%s1027 + $0x248] sm:$0xff] %v1174
                  %v1176 = vld [vmem:[%s1026 + $0x450] sm:$0xff]
                  %1177 = vst [vmem:[%s1027 + $0x250] sm:$0xff] %v1176
                  %v1178 = vld [vmem:[%s1026 + $0x458] sm:$0xff]
                  %1179 = vst [vmem:[%s1027 + $0x258] sm:$0xff] %v1178
                  %v1180 = vld [vmem:[%s1026 + $0x460] sm:$0xff]
                  %1181 = vst [vmem:[%s1027 + $0x260] sm:$0xff] %v1180
                  %v1182 = vld [vmem:[%s1026 + $0x468] sm:$0xff]
                  %1183 = vst [vmem:[%s1027 + $0x268] sm:$0xff] %v1182
                  %v1184 = vld [vmem:[%s1026 + $0x470] sm:$0xff]
                  %1185 = vst [vmem:[%s1027 + $0x270] sm:$0xff] %v1184
                  %v1186 = vld [vmem:[%s1026 + $0x478] sm:$0xff]
                  %1187 = vst [vmem:[%s1027 + $0x278] sm:$0xff] %v1186
                  %v1188 = vld [vmem:[%s1026 + $0x480] sm:$0xff]
                  %1189 = vst [vmem:[%s1027 + $0x280] sm:$0xff] %v1188
                  %v1190 = vld [vmem:[%s1026 + $0x488] sm:$0xff]
                  %1191 = vst [vmem:[%s1027 + $0x288] sm:$0xff] %v1190
                  %v1192 = vld [vmem:[%s1026 + $0x490] sm:$0xff]
                  %1193 = vst [vmem:[%s1027 + $0x290] sm:$0xff] %v1192
                  %v1194 = vld [vmem:[%s1026 + $0x498] sm:$0xff]
                  %1195 = vst [vmem:[%s1027 + $0x298] sm:$0xff] %v1194
                  %v1196 = vld [vmem:[%s1026 + $0x4a0] sm:$0xff]
                  %1197 = vst [vmem:[%s1027 + $0x2a0] sm:$0xff] %v1196
                  %v1198 = vld [vmem:[%s1026 + $0x4a8] sm:$0xff]
                  %1199 = vst [vmem:[%s1027 + $0x2a8] sm:$0xff] %v1198
                  %v1200 = vld [vmem:[%s1026 + $0x4b0] sm:$0xff]
                  %1201 = vst [vmem:[%s1027 + $0x2b0] sm:$0xff] %v1200
                  %v1202 = vld [vmem:[%s1026 + $0x4b8] sm:$0xff]
                  %1203 = vst [vmem:[%s1027 + $0x2b8] sm:$0xff] %v1202
                  %v1204 = vld [vmem:[%s1026 + $0x4c0] sm:$0xff]
                  %1205 = vst [vmem:[%s1027 + $0x2c0] sm:$0xff] %v1204
                  %v1206 = vld [vmem:[%s1026 + $0x4c8] sm:$0xff]
                  %1207 = vst [vmem:[%s1027 + $0x2c8] sm:$0xff] %v1206
                  %v1208 = vld [vmem:[%s1026 + $0x4d0] sm:$0xff]
                  %1209 = vst [vmem:[%s1027 + $0x2d0] sm:$0xff] %v1208
                  %v1210 = vld [vmem:[%s1026 + $0x4d8] sm:$0xff]
                  %1211 = vst [vmem:[%s1027 + $0x2d8] sm:$0xff] %v1210
                  %v1212 = vld [vmem:[%s1026 + $0x4e0] sm:$0xff]
                  %1213 = vst [vmem:[%s1027 + $0x2e0] sm:$0xff] %v1212
                  %v1214 = vld [vmem:[%s1026 + $0x4e8] sm:$0xff]
                  %1215 = vst [vmem:[%s1027 + $0x2e8] sm:$0xff] %v1214
                  %v1216 = vld [vmem:[%s1026 + $0x4f0] sm:$0xff]
                  %1217 = vst [vmem:[%s1027 + $0x2f0] sm:$0xff] %v1216
                  %v1218 = vld [vmem:[%s1026 + $0x4f8] sm:$0xff]
                  %1219 = vst [vmem:[%s1027 + $0x2f8] sm:$0xff] %v1218
                  %v1220 = vld [vmem:[%s1026 + $0x600] sm:$0xff]
                  %1221 = vst [vmem:[%s1027 + $0x300] sm:$0xff] %v1220
                  %v1222 = vld [vmem:[%s1026 + $0x608] sm:$0xff]
                  %1223 = vst [vmem:[%s1027 + $0x308] sm:$0xff] %v1222
                  %v1224 = vld [vmem:[%s1026 + $0x610] sm:$0xff]
                  %1225 = vst [vmem:[%s1027 + $0x310] sm:$0xff] %v1224
                  %v1226 = vld [vmem:[%s1026 + $0x618] sm:$0xff]
                  %1227 = vst [vmem:[%s1027 + $0x318] sm:$0xff] %v1226
                  %v1228 = vld [vmem:[%s1026 + $0x620] sm:$0xff]
                  %1229 = vst [vmem:[%s1027 + $0x320] sm:$0xff] %v1228
                  %v1230 = vld [vmem:[%s1026 + $0x628] sm:$0xff]
                  %1231 = vst [vmem:[%s1027 + $0x328] sm:$0xff] %v1230
                  %v1232 = vld [vmem:[%s1026 + $0x630] sm:$0xff]
                  %1233 = vst [vmem:[%s1027 + $0x330] sm:$0xff] %v1232
                  %v1234 = vld [vmem:[%s1026 + $0x638] sm:$0xff]
                  %1235 = vst [vmem:[%s1027 + $0x338] sm:$0xff] %v1234
                  %v1236 = vld [vmem:[%s1026 + $0x640] sm:$0xff]
                  %1237 = vst [vmem:[%s1027 + $0x340] sm:$0xff] %v1236
                  %v1238 = vld [vmem:[%s1026 + $0x648] sm:$0xff]
                  %1239 = vst [vmem:[%s1027 + $0x348] sm:$0xff] %v1238
                  %v1240 = vld [vmem:[%s1026 + $0x650] sm:$0xff]
                  %1241 = vst [vmem:[%s1027 + $0x350] sm:$0xff] %v1240
                  %v1242 = vld [vmem:[%s1026 + $0x658] sm:$0xff]
                  %1243 = vst [vmem:[%s1027 + $0x358] sm:$0xff] %v1242
                  %v1244 = vld [vmem:[%s1026 + $0x660] sm:$0xff]
                  %1245 = vst [vmem:[%s1027 + $0x360] sm:$0xff] %v1244
                  %v1246 = vld [vmem:[%s1026 + $0x668] sm:$0xff]
                  %1247 = vst [vmem:[%s1027 + $0x368] sm:$0xff] %v1246
                  %v1248 = vld [vmem:[%s1026 + $0x670] sm:$0xff]
                  %1249 = vst [vmem:[%s1027 + $0x370] sm:$0xff] %v1248
                  %v1250 = vld [vmem:[%s1026 + $0x678] sm:$0xff]
                  %1251 = vst [vmem:[%s1027 + $0x378] sm:$0xff] %v1250
                  %v1252 = vld [vmem:[%s1026 + $0x680] sm:$0xff]
                  %1253 = vst [vmem:[%s1027 + $0x380] sm:$0xff] %v1252
                  %v1254 = vld [vmem:[%s1026 + $0x688] sm:$0xff]
                  %1255 = vst [vmem:[%s1027 + $0x388] sm:$0xff] %v1254
                  %v1256 = vld [vmem:[%s1026 + $0x690] sm:$0xff]
                  %1257 = vst [vmem:[%s1027 + $0x390] sm:$0xff] %v1256
                  %v1258 = vld [vmem:[%s1026 + $0x698] sm:$0xff]
                  %1259 = vst [vmem:[%s1027 + $0x398] sm:$0xff] %v1258
                  %v1260 = vld [vmem:[%s1026 + $0x6a0] sm:$0xff]
                  %1261 = vst [vmem:[%s1027 + $0x3a0] sm:$0xff] %v1260
                  %v1262 = vld [vmem:[%s1026 + $0x6a8] sm:$0xff]
                  %1263 = vst [vmem:[%s1027 + $0x3a8] sm:$0xff] %v1262
                  %v1264 = vld [vmem:[%s1026 + $0x6b0] sm:$0xff]
                  %1265 = vst [vmem:[%s1027 + $0x3b0] sm:$0xff] %v1264
                  %v1266 = vld [vmem:[%s1026 + $0x6b8] sm:$0xff]
                  %1267 = vst [vmem:[%s1027 + $0x3b8] sm:$0xff] %v1266
                  %v1268 = vld [vmem:[%s1026 + $0x6c0] sm:$0xff]
                  %1269 = vst [vmem:[%s1027 + $0x3c0] sm:$0xff] %v1268
                  %v1270 = vld [vmem:[%s1026 + $0x6c8] sm:$0xff]
                  %1271 = vst [vmem:[%s1027 + $0x3c8] sm:$0xff] %v1270
                  %v1272 = vld [vmem:[%s1026 + $0x6d0] sm:$0xff]
                  %1273 = vst [vmem:[%s1027 + $0x3d0] sm:$0xff] %v1272
                  %v1274 = vld [vmem:[%s1026 + $0x6d8] sm:$0xff]
                  %1275 = vst [vmem:[%s1027 + $0x3d8] sm:$0xff] %v1274
                  %v1276 = vld [vmem:[%s1026 + $0x6e0] sm:$0xff]
                  %1277 = vst [vmem:[%s1027 + $0x3e0] sm:$0xff] %v1276
                  %v1278 = vld [vmem:[%s1026 + $0x6e8] sm:$0xff]
                  %1279 = vst [vmem:[%s1027 + $0x3e8] sm:$0xff] %v1278
                  %v1280 = vld [vmem:[%s1026 + $0x6f0] sm:$0xff]
                  %1281 = vst [vmem:[%s1027 + $0x3f0] sm:$0xff] %v1280
                  %v1282 = vld [vmem:[%s1026 + $0x6f8] sm:$0xff]
                  %1283 = vst [vmem:[%s1027 + $0x3f8] sm:$0xff] %v1282
                $region101: #{_lambda_.3} parent=95 // loop_footer
                  %s1025 = sadd.s32 1, %s1021
                $region102: #{_lambda_.3} parent=95 // loop_footer_branch
                  %1020 = sbr.rel target = $region98
                $region103: #{_lambda_.3} parent=95 // loop_exit
                  _
              $region96: #{_lambda_.3} parent=80 // pred_fallthru
                _
              // Predicated region
              $region104: #{_lambda_.3} parent=80 // pred_check
                _
              $region105: #{_lambda_.3} parent=80 // pred_check_branch
                %1285 = sbr.rel target = $region107
              $region106: #{_lambda_.3} parent=80 // pred_region
                _
              $region107: #{_lambda_.3} parent=80 // pred_fallthru
                _
            $region81: #{_lambda_.3} parent=76 // pred_fallthru
              _
            // Predicated region
            $region82: #{_lambda_.3} parent=76 // pred_check
              _
            $region83: #{_lambda_.3} parent=76 // pred_check_branch
              %752 = sbr.rel target = $region85
            $region84: #{_lambda_.3} parent=76 // pred_region
              loop: start=0, step=1, limit=1
              $region86: #{_lambda_.3} parent=84 // loop_pre_header
                _
              $region87: #{_lambda_.3} parent=84 // loop_header
                %s755 = sphi 0, %s759
                %p756 = scmp.ge.s32.totalorder %s755, 1
                %s760 = sphi %s746, %s746
                %s761 = sphi %s743, %s743
              $region88: #{_lambda_.3} parent=84 // loop_header_branch
                %758 = sbr.rel (%p756) target = $region92
              $region89: #{_lambda_.3} parent=84 // loop_body
                %v762 = vld [vmem:[%s760] sm:$0xff]
                %763 = vst [vmem:[%s761] sm:$0xff] %v762
                %v764 = vld [vmem:[%s760 + $0x8] sm:$0xff]
                %765 = vst [vmem:[%s761 + $0x8] sm:$0xff] %v764
                %v766 = vld [vmem:[%s760 + $0x10] sm:$0xff]
                %767 = vst [vmem:[%s761 + $0x10] sm:$0xff] %v766
                %v768 = vld [vmem:[%s760 + $0x18] sm:$0xff]
                %769 = vst [vmem:[%s761 + $0x18] sm:$0xff] %v768
                %v770 = vld [vmem:[%s760 + $0x20] sm:$0xff]
                %771 = vst [vmem:[%s761 + $0x20] sm:$0xff] %v770
                %v772 = vld [vmem:[%s760 + $0x28] sm:$0xff]
                %773 = vst [vmem:[%s761 + $0x28] sm:$0xff] %v772
                %v774 = vld [vmem:[%s760 + $0x30] sm:$0xff]
                %775 = vst [vmem:[%s761 + $0x30] sm:$0xff] %v774
                %v776 = vld [vmem:[%s760 + $0x38] sm:$0xff]
                %777 = vst [vmem:[%s761 + $0x38] sm:$0xff] %v776
                %v778 = vld [vmem:[%s760 + $0x40] sm:$0xff]
                %779 = vst [vmem:[%s761 + $0x40] sm:$0xff] %v778
                %v780 = vld [vmem:[%s760 + $0x48] sm:$0xff]
                %781 = vst [vmem:[%s761 + $0x48] sm:$0xff] %v780
                %v782 = vld [vmem:[%s760 + $0x50] sm:$0xff]
                %783 = vst [vmem:[%s761 + $0x50] sm:$0xff] %v782
                %v784 = vld [vmem:[%s760 + $0x58] sm:$0xff]
                %785 = vst [vmem:[%s761 + $0x58] sm:$0xff] %v784
                %v786 = vld [vmem:[%s760 + $0x60] sm:$0xff]
                %787 = vst [vmem:[%s761 + $0x60] sm:$0xff] %v786
                %v788 = vld [vmem:[%s760 + $0x68] sm:$0xff]
                %789 = vst [vmem:[%s761 + $0x68] sm:$0xff] %v788
                %v790 = vld [vmem:[%s760 + $0x70] sm:$0xff]
                %791 = vst [vmem:[%s761 + $0x70] sm:$0xff] %v790
                %v792 = vld [vmem:[%s760 + $0x78] sm:$0xff]
                %793 = vst [vmem:[%s761 + $0x78] sm:$0xff] %v792
                %v794 = vld [vmem:[%s760 + $0x80] sm:$0xff]
                %795 = vst [vmem:[%s761 + $0x80] sm:$0xff] %v794
                %v796 = vld [vmem:[%s760 + $0x88] sm:$0xff]
                %797 = vst [vmem:[%s761 + $0x88] sm:$0xff] %v796
                %v798 = vld [vmem:[%s760 + $0x90] sm:$0xff]
                %799 = vst [vmem:[%s761 + $0x90] sm:$0xff] %v798
                %v800 = vld [vmem:[%s760 + $0x98] sm:$0xff]
                %801 = vst [vmem:[%s761 + $0x98] sm:$0xff] %v800
                %v802 = vld [vmem:[%s760 + $0xa0] sm:$0xff]
                %803 = vst [vmem:[%s761 + $0xa0] sm:$0xff] %v802
                %v804 = vld [vmem:[%s760 + $0xa8] sm:$0xff]
                %805 = vst [vmem:[%s761 + $0xa8] sm:$0xff] %v804
                %v806 = vld [vmem:[%s760 + $0xb0] sm:$0xff]
                %807 = vst [vmem:[%s761 + $0xb0] sm:$0xff] %v806
                %v808 = vld [vmem:[%s760 + $0xb8] sm:$0xff]
                %809 = vst [vmem:[%s761 + $0xb8] sm:$0xff] %v808
                %v810 = vld [vmem:[%s760 + $0xc0] sm:$0xff]
                %811 = vst [vmem:[%s761 + $0xc0] sm:$0xff] %v810
                %v812 = vld [vmem:[%s760 + $0xc8] sm:$0xff]
                %813 = vst [vmem:[%s761 + $0xc8] sm:$0xff] %v812
                %v814 = vld [vmem:[%s760 + $0xd0] sm:$0xff]
                %815 = vst [vmem:[%s761 + $0xd0] sm:$0xff] %v814
                %v816 = vld [vmem:[%s760 + $0xd8] sm:$0xff]
                %817 = vst [vmem:[%s761 + $0xd8] sm:$0xff] %v816
                %v818 = vld [vmem:[%s760 + $0xe0] sm:$0xff]
                %819 = vst [vmem:[%s761 + $0xe0] sm:$0xff] %v818
                %v820 = vld [vmem:[%s760 + $0xe8] sm:$0xff]
                %821 = vst [vmem:[%s761 + $0xe8] sm:$0xff] %v820
                %v822 = vld [vmem:[%s760 + $0xf0] sm:$0xff]
                %823 = vst [vmem:[%s761 + $0xf0] sm:$0xff] %v822
                %v824 = vld [vmem:[%s760 + $0xf8] sm:$0xff]
                %825 = vst [vmem:[%s761 + $0xf8] sm:$0xff] %v824
                %v826 = vld [vmem:[%s760 + $0x200] sm:$0xff]
                %827 = vst [vmem:[%s761 + $0x100] sm:$0xff] %v826
                %v828 = vld [vmem:[%s760 + $0x208] sm:$0xff]
                %829 = vst [vmem:[%s761 + $0x108] sm:$0xff] %v828
                %v830 = vld [vmem:[%s760 + $0x210] sm:$0xff]
                %831 = vst [vmem:[%s761 + $0x110] sm:$0xff] %v830
                %v832 = vld [vmem:[%s760 + $0x218] sm:$0xff]
                %833 = vst [vmem:[%s761 + $0x118] sm:$0xff] %v832
                %v834 = vld [vmem:[%s760 + $0x220] sm:$0xff]
                %835 = vst [vmem:[%s761 + $0x120] sm:$0xff] %v834
                %v836 = vld [vmem:[%s760 + $0x228] sm:$0xff]
                %837 = vst [vmem:[%s761 + $0x128] sm:$0xff] %v836
                %v838 = vld [vmem:[%s760 + $0x230] sm:$0xff]
                %839 = vst [vmem:[%s761 + $0x130] sm:$0xff] %v838
                %v840 = vld [vmem:[%s760 + $0x238] sm:$0xff]
                %841 = vst [vmem:[%s761 + $0x138] sm:$0xff] %v840
                %v842 = vld [vmem:[%s760 + $0x240] sm:$0xff]
                %843 = vst [vmem:[%s761 + $0x140] sm:$0xff] %v842
                %v844 = vld [vmem:[%s760 + $0x248] sm:$0xff]
                %845 = vst [vmem:[%s761 + $0x148] sm:$0xff] %v844
                %v846 = vld [vmem:[%s760 + $0x250] sm:$0xff]
                %847 = vst [vmem:[%s761 + $0x150] sm:$0xff] %v846
                %v848 = vld [vmem:[%s760 + $0x258] sm:$0xff]
                %849 = vst [vmem:[%s761 + $0x158] sm:$0xff] %v848
                %v850 = vld [vmem:[%s760 + $0x260] sm:$0xff]
                %851 = vst [vmem:[%s761 + $0x160] sm:$0xff] %v850
                %v852 = vld [vmem:[%s760 + $0x268] sm:$0xff]
                %853 = vst [vmem:[%s761 + $0x168] sm:$0xff] %v852
                %v854 = vld [vmem:[%s760 + $0x270] sm:$0xff]
                %855 = vst [vmem:[%s761 + $0x170] sm:$0xff] %v854
                %v856 = vld [vmem:[%s760 + $0x278] sm:$0xff]
                %857 = vst [vmem:[%s761 + $0x178] sm:$0xff] %v856
                %v858 = vld [vmem:[%s760 + $0x280] sm:$0xff]
                %859 = vst [vmem:[%s761 + $0x180] sm:$0xff] %v858
                %v860 = vld [vmem:[%s760 + $0x288] sm:$0xff]
                %861 = vst [vmem:[%s761 + $0x188] sm:$0xff] %v860
                %v862 = vld [vmem:[%s760 + $0x290] sm:$0xff]
                %863 = vst [vmem:[%s761 + $0x190] sm:$0xff] %v862
                %v864 = vld [vmem:[%s760 + $0x298] sm:$0xff]
                %865 = vst [vmem:[%s761 + $0x198] sm:$0xff] %v864
                %v866 = vld [vmem:[%s760 + $0x2a0] sm:$0xff]
                %867 = vst [vmem:[%s761 + $0x1a0] sm:$0xff] %v866
                %v868 = vld [vmem:[%s760 + $0x2a8] sm:$0xff]
                %869 = vst [vmem:[%s761 + $0x1a8] sm:$0xff] %v868
                %v870 = vld [vmem:[%s760 + $0x2b0] sm:$0xff]
                %871 = vst [vmem:[%s761 + $0x1b0] sm:$0xff] %v870
                %v872 = vld [vmem:[%s760 + $0x2b8] sm:$0xff]
                %873 = vst [vmem:[%s761 + $0x1b8] sm:$0xff] %v872
                %v874 = vld [vmem:[%s760 + $0x2c0] sm:$0xff]
                %875 = vst [vmem:[%s761 + $0x1c0] sm:$0xff] %v874
                %v876 = vld [vmem:[%s760 + $0x2c8] sm:$0xff]
                %877 = vst [vmem:[%s761 + $0x1c8] sm:$0xff] %v876
                %v878 = vld [vmem:[%s760 + $0x2d0] sm:$0xff]
                %879 = vst [vmem:[%s761 + $0x1d0] sm:$0xff] %v878
                %v880 = vld [vmem:[%s760 + $0x2d8] sm:$0xff]
                %881 = vst [vmem:[%s761 + $0x1d8] sm:$0xff] %v880
                %v882 = vld [vmem:[%s760 + $0x2e0] sm:$0xff]
                %883 = vst [vmem:[%s761 + $0x1e0] sm:$0xff] %v882
                %v884 = vld [vmem:[%s760 + $0x2e8] sm:$0xff]
                %885 = vst [vmem:[%s761 + $0x1e8] sm:$0xff] %v884
                %v886 = vld [vmem:[%s760 + $0x2f0] sm:$0xff]
                %887 = vst [vmem:[%s761 + $0x1f0] sm:$0xff] %v886
                %v888 = vld [vmem:[%s760 + $0x2f8] sm:$0xff]
                %889 = vst [vmem:[%s761 + $0x1f8] sm:$0xff] %v888
                %v890 = vld [vmem:[%s760 + $0x400] sm:$0xff]
                %891 = vst [vmem:[%s761 + $0x200] sm:$0xff] %v890
                %v892 = vld [vmem:[%s760 + $0x408] sm:$0xff]
                %893 = vst [vmem:[%s761 + $0x208] sm:$0xff] %v892
                %v894 = vld [vmem:[%s760 + $0x410] sm:$0xff]
                %895 = vst [vmem:[%s761 + $0x210] sm:$0xff] %v894
                %v896 = vld [vmem:[%s760 + $0x418] sm:$0xff]
                %897 = vst [vmem:[%s761 + $0x218] sm:$0xff] %v896
                %v898 = vld [vmem:[%s760 + $0x420] sm:$0xff]
                %899 = vst [vmem:[%s761 + $0x220] sm:$0xff] %v898
                %v900 = vld [vmem:[%s760 + $0x428] sm:$0xff]
                %901 = vst [vmem:[%s761 + $0x228] sm:$0xff] %v900
                %v902 = vld [vmem:[%s760 + $0x430] sm:$0xff]
                %903 = vst [vmem:[%s761 + $0x230] sm:$0xff] %v902
                %v904 = vld [vmem:[%s760 + $0x438] sm:$0xff]
                %905 = vst [vmem:[%s761 + $0x238] sm:$0xff] %v904
                %v906 = vld [vmem:[%s760 + $0x440] sm:$0xff]
                %907 = vst [vmem:[%s761 + $0x240] sm:$0xff] %v906
                %v908 = vld [vmem:[%s760 + $0x448] sm:$0xff]
                %909 = vst [vmem:[%s761 + $0x248] sm:$0xff] %v908
                %v910 = vld [vmem:[%s760 + $0x450] sm:$0xff]
                %911 = vst [vmem:[%s761 + $0x250] sm:$0xff] %v910
                %v912 = vld [vmem:[%s760 + $0x458] sm:$0xff]
                %913 = vst [vmem:[%s761 + $0x258] sm:$0xff] %v912
                %v914 = vld [vmem:[%s760 + $0x460] sm:$0xff]
                %915 = vst [vmem:[%s761 + $0x260] sm:$0xff] %v914
                %v916 = vld [vmem:[%s760 + $0x468] sm:$0xff]
                %917 = vst [vmem:[%s761 + $0x268] sm:$0xff] %v916
                %v918 = vld [vmem:[%s760 + $0x470] sm:$0xff]
                %919 = vst [vmem:[%s761 + $0x270] sm:$0xff] %v918
                %v920 = vld [vmem:[%s760 + $0x478] sm:$0xff]
                %921 = vst [vmem:[%s761 + $0x278] sm:$0xff] %v920
                %v922 = vld [vmem:[%s760 + $0x480] sm:$0xff]
                %923 = vst [vmem:[%s761 + $0x280] sm:$0xff] %v922
                %v924 = vld [vmem:[%s760 + $0x488] sm:$0xff]
                %925 = vst [vmem:[%s761 + $0x288] sm:$0xff] %v924
                %v926 = vld [vmem:[%s760 + $0x490] sm:$0xff]
                %927 = vst [vmem:[%s761 + $0x290] sm:$0xff] %v926
                %v928 = vld [vmem:[%s760 + $0x498] sm:$0xff]
                %929 = vst [vmem:[%s761 + $0x298] sm:$0xff] %v928
                %v930 = vld [vmem:[%s760 + $0x4a0] sm:$0xff]
                %931 = vst [vmem:[%s761 + $0x2a0] sm:$0xff] %v930
                %v932 = vld [vmem:[%s760 + $0x4a8] sm:$0xff]
                %933 = vst [vmem:[%s761 + $0x2a8] sm:$0xff] %v932
                %v934 = vld [vmem:[%s760 + $0x4b0] sm:$0xff]
                %935 = vst [vmem:[%s761 + $0x2b0] sm:$0xff] %v934
                %v936 = vld [vmem:[%s760 + $0x4b8] sm:$0xff]
                %937 = vst [vmem:[%s761 + $0x2b8] sm:$0xff] %v936
                %v938 = vld [vmem:[%s760 + $0x4c0] sm:$0xff]
                %939 = vst [vmem:[%s761 + $0x2c0] sm:$0xff] %v938
                %v940 = vld [vmem:[%s760 + $0x4c8] sm:$0xff]
                %941 = vst [vmem:[%s761 + $0x2c8] sm:$0xff] %v940
                %v942 = vld [vmem:[%s760 + $0x4d0] sm:$0xff]
                %943 = vst [vmem:[%s761 + $0x2d0] sm:$0xff] %v942
                %v944 = vld [vmem:[%s760 + $0x4d8] sm:$0xff]
                %945 = vst [vmem:[%s761 + $0x2d8] sm:$0xff] %v944
                %v946 = vld [vmem:[%s760 + $0x4e0] sm:$0xff]
                %947 = vst [vmem:[%s761 + $0x2e0] sm:$0xff] %v946
                %v948 = vld [vmem:[%s760 + $0x4e8] sm:$0xff]
                %949 = vst [vmem:[%s761 + $0x2e8] sm:$0xff] %v948
                %v950 = vld [vmem:[%s760 + $0x4f0] sm:$0xff]
                %951 = vst [vmem:[%s761 + $0x2f0] sm:$0xff] %v950
                %v952 = vld [vmem:[%s760 + $0x4f8] sm:$0xff]
                %953 = vst [vmem:[%s761 + $0x2f8] sm:$0xff] %v952
                %v954 = vld [vmem:[%s760 + $0x600] sm:$0xff]
                %955 = vst [vmem:[%s761 + $0x300] sm:$0xff] %v954
                %v956 = vld [vmem:[%s760 + $0x608] sm:$0xff]
                %957 = vst [vmem:[%s761 + $0x308] sm:$0xff] %v956
                %v958 = vld [vmem:[%s760 + $0x610] sm:$0xff]
                %959 = vst [vmem:[%s761 + $0x310] sm:$0xff] %v958
                %v960 = vld [vmem:[%s760 + $0x618] sm:$0xff]
                %961 = vst [vmem:[%s761 + $0x318] sm:$0xff] %v960
                %v962 = vld [vmem:[%s760 + $0x620] sm:$0xff]
                %963 = vst [vmem:[%s761 + $0x320] sm:$0xff] %v962
                %v964 = vld [vmem:[%s760 + $0x628] sm:$0xff]
                %965 = vst [vmem:[%s761 + $0x328] sm:$0xff] %v964
                %v966 = vld [vmem:[%s760 + $0x630] sm:$0xff]
                %967 = vst [vmem:[%s761 + $0x330] sm:$0xff] %v966
                %v968 = vld [vmem:[%s760 + $0x638] sm:$0xff]
                %969 = vst [vmem:[%s761 + $0x338] sm:$0xff] %v968
                %v970 = vld [vmem:[%s760 + $0x640] sm:$0xff]
                %971 = vst [vmem:[%s761 + $0x340] sm:$0xff] %v970
                %v972 = vld [vmem:[%s760 + $0x648] sm:$0xff]
                %973 = vst [vmem:[%s761 + $0x348] sm:$0xff] %v972
                %v974 = vld [vmem:[%s760 + $0x650] sm:$0xff]
                %975 = vst [vmem:[%s761 + $0x350] sm:$0xff] %v974
                %v976 = vld [vmem:[%s760 + $0x658] sm:$0xff]
                %977 = vst [vmem:[%s761 + $0x358] sm:$0xff] %v976
                %v978 = vld [vmem:[%s760 + $0x660] sm:$0xff]
                %979 = vst [vmem:[%s761 + $0x360] sm:$0xff] %v978
                %v980 = vld [vmem:[%s760 + $0x668] sm:$0xff]
                %981 = vst [vmem:[%s761 + $0x368] sm:$0xff] %v980
                %v982 = vld [vmem:[%s760 + $0x670] sm:$0xff]
                %983 = vst [vmem:[%s761 + $0x370] sm:$0xff] %v982
                %v984 = vld [vmem:[%s760 + $0x678] sm:$0xff]
                %985 = vst [vmem:[%s761 + $0x378] sm:$0xff] %v984
                %v986 = vld [vmem:[%s760 + $0x680] sm:$0xff]
                %987 = vst [vmem:[%s761 + $0x380] sm:$0xff] %v986
                %v988 = vld [vmem:[%s760 + $0x688] sm:$0xff]
                %989 = vst [vmem:[%s761 + $0x388] sm:$0xff] %v988
                %v990 = vld [vmem:[%s760 + $0x690] sm:$0xff]
                %991 = vst [vmem:[%s761 + $0x390] sm:$0xff] %v990
                %v992 = vld [vmem:[%s760 + $0x698] sm:$0xff]
                %993 = vst [vmem:[%s761 + $0x398] sm:$0xff] %v992
                %v994 = vld [vmem:[%s760 + $0x6a0] sm:$0xff]
                %995 = vst [vmem:[%s761 + $0x3a0] sm:$0xff] %v994
                %v996 = vld [vmem:[%s760 + $0x6a8] sm:$0xff]
                %997 = vst [vmem:[%s761 + $0x3a8] sm:$0xff] %v996
                %v998 = vld [vmem:[%s760 + $0x6b0] sm:$0xff]
                %999 = vst [vmem:[%s761 + $0x3b0] sm:$0xff] %v998
                %v1000 = vld [vmem:[%s760 + $0x6b8] sm:$0xff]
                %1001 = vst [vmem:[%s761 + $0x3b8] sm:$0xff] %v1000
                %v1002 = vld [vmem:[%s760 + $0x6c0] sm:$0xff]
                %1003 = vst [vmem:[%s761 + $0x3c0] sm:$0xff] %v1002
                %v1004 = vld [vmem:[%s760 + $0x6c8] sm:$0xff]
                %1005 = vst [vmem:[%s761 + $0x3c8] sm:$0xff] %v1004
                %v1006 = vld [vmem:[%s760 + $0x6d0] sm:$0xff]
                %1007 = vst [vmem:[%s761 + $0x3d0] sm:$0xff] %v1006
                %v1008 = vld [vmem:[%s760 + $0x6d8] sm:$0xff]
                %1009 = vst [vmem:[%s761 + $0x3d8] sm:$0xff] %v1008
                %v1010 = vld [vmem:[%s760 + $0x6e0] sm:$0xff]
                %1011 = vst [vmem:[%s761 + $0x3e0] sm:$0xff] %v1010
                %v1012 = vld [vmem:[%s760 + $0x6e8] sm:$0xff]
                %1013 = vst [vmem:[%s761 + $0x3e8] sm:$0xff] %v1012
                %v1014 = vld [vmem:[%s760 + $0x6f0] sm:$0xff]
                %1015 = vst [vmem:[%s761 + $0x3f0] sm:$0xff] %v1014
                %v1016 = vld [vmem:[%s760 + $0x6f8] sm:$0xff]
                %1017 = vst [vmem:[%s761 + $0x3f8] sm:$0xff] %v1016
              $region90: #{_lambda_.3} parent=84 // loop_footer
                %s759 = sadd.s32 1, %s755
              $region91: #{_lambda_.3} parent=84 // loop_footer_branch
                %754 = sbr.rel target = $region87
              $region92: #{_lambda_.3} parent=84 // loop_exit
                _
            $region85: #{_lambda_.3} parent=76 // pred_fallthru
              _
          $region77: #{_lambda_.3} parent=72 // pred_fallthru
            _
          %1286 = vnop
        $region73: #{_lambda_.3} parent=27 // pred_fallthru
          _
      $region28: #{_lambda_.3} parent=5 // pred_fallthru
        _
      %p1287 = scmp.le.s32.totalorder 1, %s11
      %p1288 = scmp.lt.s32.totalorder %s11, 3
      %p1289 = pnand %p1287, %p1288
      %p1290 = pneg %p1289
      // Predicated region
      $region108: #{_lambda_.3} parent=5 // pred_check
        _
      $region109: #{_lambda_.3} parent=5 // pred_check_branch
        %1292 = sbr.rel (%p1289) target = $region111
      $region110: #{_lambda_.3} parent=5 // pred_region
        %s1293 = ssub.s32 %s11, 1
        %s1294 = sand.u32 %s24, 1
        %s1295 = sand.u32 %s24, 1
        %s1296 = smul.addr %s1295, 512
        %s1297 = scalar_lea.vmem [#allocation2], %s1296
        // Predicated region
        $region112: #{_lambda_.3} parent=110 // pred_check
          %p1298 = pneg %p37
        $region113: #{_lambda_.3} parent=110 // pred_check_branch
          %1300 = sbr.rel (%p1298) target = $region115
        $region114: #{_lambda_.3} parent=110 // pred_region
          _
        $region115: #{_lambda_.3} parent=110 // pred_fallthru
          _
        %s1301 = sand.u32 %s50, 1
        %s1302 = sand.u32 %s50, 1
        %s1303 = smul.addr %s1302, 1024
        %s1304 = scalar_lea.vmem [#allocation3], %s1303
        // Predicated region
        $region116: #{_lambda_.3} parent=110 // pred_check
          %p1305 = pneg %p63
        $region117: #{_lambda_.3} parent=110 // pred_check_branch
          %1307 = sbr.rel (%p1305) target = $region119
        $region118: #{_lambda_.3} parent=110 // pred_region
          _
        $region119: #{_lambda_.3} parent=110 // pred_fallthru
          _
        %s1308 = sand.u32 %s24, 1
        %s1309 = sand.u32 %s24, 1
        %s1310 = smul.addr %s1309, 512
        %s1311 = scalar_lea.vmem [#allocation2], %s1310
        %p1312 = pneg %p37
        %p1313 = pneg %p34
        %s1314 = sand.u32 %s50, 1
        %s1315 = sand.u32 %s50, 1
        %s1316 = smul.addr %s1315, 1024
        %s1317 = scalar_lea.vmem [#allocation3], %s1316
        %p1318 = pneg %p63
        %p1319 = pneg %p60
        %p1320 = pneg %p84
        %p1321 = pneg %p81
        %p1322 = pneg %p105
        %p1323 = pneg %p102
        %p1324 = pneg %p126
        %p1325 = pneg %p123
        %p1326 = pneg %p152
        %p1327 = pneg %p149
        %s1328 = smul.u32 32, %s16
        %p1329 = scmp.lt.s32.totalorder %s1328, 63
        %s1330 = scalar_select %p1329, %s1328, 63
        %s1331 = smul.addr %s1330, 8
        %s1332 = scalar_lea.vmem %s5, %s1331
        %s1333 = smul.u32 32, %s16
        %s1334 = smul.u32 32, %s16
        %s1335 = smul.u32 32, %s16
        %p1336 = scmp.lt.s32.totalorder %s1335, 63
        %s1337 = scalar_select %p1336, %s1335, 63
        %s1338 = smul.addr %s1337, 8
        %s1339 = scalar_lea.vmem %s5, %s1338
        %s1340 = smul.u32 32, %s16
        %v1341 = vld [vmem:[%s1304] sm:$0xff]
        %v1342 = vld [vmem:[%s1304 + $0x8] sm:$0xff]
        %v1343 = vld [vmem:[%s1304 + $0x10] sm:$0xff]
        %v1344 = vld [vmem:[%s1304 + $0x18] sm:$0xff]
        %v1345 = vld [vmem:[%s1304 + $0x20] sm:$0xff]
        %v1346 = vld [vmem:[%s1304 + $0x28] sm:$0xff]
        %v1347 = vld [vmem:[%s1304 + $0x30] sm:$0xff]
        %v1348 = vld [vmem:[%s1304 + $0x38] sm:$0xff]
        %v1349 = vld [vmem:[%s1304 + $0x40] sm:$0xff]
        %v1350 = vld [vmem:[%s1304 + $0x48] sm:$0xff]
        %v1351 = vld [vmem:[%s1304 + $0x50] sm:$0xff]
        %v1352 = vld [vmem:[%s1304 + $0x58] sm:$0xff]
        %v1353 = vld [vmem:[%s1304 + $0x60] sm:$0xff]
        %v1354 = vld [vmem:[%s1304 + $0x68] sm:$0xff]
        %v1355 = vld [vmem:[%s1304 + $0x70] sm:$0xff]
        %v1356 = vld [vmem:[%s1304 + $0x78] sm:$0xff]
        %v1357 = vld [vmem:[%s1304 + $0x80] sm:$0xff]
        %v1358 = vld [vmem:[%s1304 + $0x88] sm:$0xff]
        %v1359 = vld [vmem:[%s1304 + $0x90] sm:$0xff]
        %v1360 = vld [vmem:[%s1304 + $0x98] sm:$0xff]
        %v1361 = vld [vmem:[%s1304 + $0xa0] sm:$0xff]
        %v1362 = vld [vmem:[%s1304 + $0xa8] sm:$0xff]
        %v1363 = vld [vmem:[%s1304 + $0xb0] sm:$0xff]
        %v1364 = vld [vmem:[%s1304 + $0xb8] sm:$0xff]
        %v1365 = vld [vmem:[%s1304 + $0xc0] sm:$0xff]
        %v1366 = vld [vmem:[%s1304 + $0xc8] sm:$0xff]
        %v1367 = vld [vmem:[%s1304 + $0xd0] sm:$0xff]
        %v1368 = vld [vmem:[%s1304 + $0xd8] sm:$0xff]
        %v1369 = vld [vmem:[%s1304 + $0xe0] sm:$0xff]
        %v1370 = vld [vmem:[%s1304 + $0xe8] sm:$0xff]
        %v1371 = vld [vmem:[%s1304 + $0xf0] sm:$0xff]
        %v1372 = vld [vmem:[%s1304 + $0xf8] sm:$0xff]
        %v1373 = vld [vmem:[%s2] sm:$0xff]
        %v1374 = vld [vmem:[%s2 + $0x8] sm:$0x1]
        %vm1375 = vcmask 72704
        %v1377 = vsel %vm1375, %v1341, 0
        %v1380 = vsel %vm1375, %v1342, 0
        %v1383 = vsel %vm1375, %v1343, 0
        %v1386 = vsel %vm1375, %v1344, 0
        %v1389 = vsel %vm1375, %v1345, 0
        %v1392 = vsel %vm1375, %v1346, 0
        %v1395 = vsel %vm1375, %v1347, 0
        %v1398 = vsel %vm1375, %v1348, 0
        %v1401 = vsel %vm1375, %v1349, 0
        %v1404 = vsel %vm1375, %v1350, 0
        %v1407 = vsel %vm1375, %v1351, 0
        %v1410 = vsel %vm1375, %v1352, 0
        %v1413 = vsel %vm1375, %v1353, 0
        %v1416 = vsel %vm1375, %v1354, 0
        %v1419 = vsel %vm1375, %v1355, 0
        %v1422 = vsel %vm1375, %v1356, 0
        %v1425 = vsel %vm1375, %v1357, 0
        %v1428 = vsel %vm1375, %v1358, 0
        %v1431 = vsel %vm1375, %v1359, 0
        %v1434 = vsel %vm1375, %v1360, 0
        %v1437 = vsel %vm1375, %v1361, 0
        %v1440 = vsel %vm1375, %v1362, 0
        %v1443 = vsel %vm1375, %v1363, 0
        %v1446 = vsel %vm1375, %v1364, 0
        %v1449 = vsel %vm1375, %v1365, 0
        %v1452 = vsel %vm1375, %v1366, 0
        %v1455 = vsel %vm1375, %v1367, 0
        %v1458 = vsel %vm1375, %v1368, 0
        %v1461 = vsel %vm1375, %v1369, 0
        %v1464 = vsel %vm1375, %v1370, 0
        %v1467 = vsel %vm1375, %v1371, 0
        %v1470 = vsel %vm1375, %v1372, 0
        %vm1472 = vcmask 1040384
        %v1474 = vsel %vm1472, %v1374, 0
        %1476 = vmatprep.subr.mxu0 0.0
        %1477 = vmatpush1.msra.mxu0 %v1373
        %1478 = vmatprep.subr.mxu0 0.0
        %1479 = vmatpush1.msra.mxu0 %v1474
        %1480 = vmatprep.subr.mxu0 0.0
        %1481 = vmatpush1.msra.mxu0 0.0
        %1482 = vmatprep.subr.mxu0 0.0
        %1483 = vmatpush1.msra.mxu0 0.0
        %1484 = vmatprep.subr.mxu0 0.0
        %1485 = vmatpush1.msra.mxu0 0.0
        %1486 = vmatprep.subr.mxu0 0.0
        %1487 = vmatpush1.msra.mxu0 0.0
        %1488 = vmatprep.subr.mxu0 0.0
        %1489 = vmatpush1.msra.mxu0 0.0
        %1490 = vmatprep.subr.mxu0 0.0
        %1491 = vmatpush1.msra.mxu0 0.0
        %1492 = vmatprep.subr.mxu0 0.0
        %1493 = vmatpush1.msra.mxu0 0.0
        %1494 = vmatprep.subr.mxu0 0.0
        %1495 = vmatpush1.msra.mxu0 0.0
        %1496 = vmatprep.subr.mxu0 0.0
        %1497 = vmatpush1.msra.mxu0 0.0
        %1498 = vmatprep.subr.mxu0 0.0
        %1499 = vmatpush1.msra.mxu0 0.0
        %1500 = vmatprep.subr.mxu0 0.0
        %1501 = vmatpush1.msra.mxu0 0.0
        %1502 = vmatprep.subr.mxu0 0.0
        %1503 = vmatpush1.msra.mxu0 0.0
        %1504 = vmatprep.subr.mxu0 0.0
        %1505 = vmatpush1.msra.mxu0 0.0
        %1506 = vmatprep.subr.mxu0 0.0
        %1507 = vmatpush1.msra.mxu0 0.0
        %1508 = vmatprep.subr.mxu0 0.0
        %1509 = vmatpush1.msra.mxu0 0.0
        %1510 = vmatprep.subr.mxu0 0.0
        %1511 = vmatpush1.msra.mxu0 0.0
        %1512 = vmatprep.subr.mxu0 0.0
        %1513 = vmatpush1.msra.mxu0 0.0
        %1514 = vmatprep.subr.mxu0 0.0
        %1515 = vmatpush1.msra.mxu0 0.0
        %1516 = vmatprep.subr.mxu0 0.0
        %1517 = vmatpush1.msra.mxu0 0.0
        %1518 = vmatprep.subr.mxu0 0.0
        %1519 = vmatpush1.msra.mxu0 0.0
        %1520 = vmatprep.subr.mxu0 0.0
        %1521 = vmatpush1.msra.mxu0 0.0
        %1522 = vmatprep.subr.mxu0 0.0
        %1523 = vmatpush1.msra.mxu0 0.0
        %1524 = vmatprep.subr.mxu0 0.0
        %1525 = vmatpush1.msra.mxu0 0.0
        %1526 = vmatprep.subr.mxu0 0.0
        %1527 = vmatpush1.msra.mxu0 0.0
        %1528 = vmatprep.subr.mxu0 0.0
        %1529 = vmatpush1.msra.mxu0 0.0
        %1530 = vmatprep.subr.mxu0 0.0
        %1531 = vmatpush1.msra.mxu0 0.0
        %1532 = vmatprep.subr.mxu0 0.0
        %1533 = vmatpush1.msra.mxu0 0.0
        %1534 = vmatprep.subr.mxu0 0.0
        %1535 = vmatpush1.msra.mxu0 0.0
        %1536 = vmatprep.subr.mxu0 0.0
        %1537 = vmatpush1.msra.mxu0 0.0
        %1538 = vmatprep.subr.mxu0 0.0
        %1539 = vmatpush1.msra.mxu0 0.0
        %1540 = vmatprep.mubr.f32.mxu0 0.0
        %1541 = vmatmul.mubr.f32.gmra.mrb[0].mxu0 %v1377
        %v1542 = vpop.f32.mrb[0].mxu0
        %v1543 = vadd.f32 0.0, %v1542
        %v1544 = vpop.f32.mrb[0].mxu0
        %1545 = vmatprep.mubr.f32.mxu0 0.0
        %1546 = vmatmul.mubr.f32.gmra.mrb[0].mxu0 %v1380
        %v1547 = vpop.f32.mrb[0].mxu0
        %v1548 = vadd.f32 0.0, %v1547
        %v1549 = vpop.f32.mrb[0].mxu0
        %1550 = vmatprep.mubr.f32.mxu0 0.0
        %1551 = vmatmul.mubr.f32.gmra.mrb[0].mxu0 %v1383
        %v1552 = vpop.f32.mrb[0].mxu0
        %v1553 = vadd.f32 0.0, %v1552
        %v1554 = vpop.f32.mrb[0].mxu0
        %1555 = vmatprep.mubr.f32.mxu0 0.0
        %1556 = vmatmul.mubr.f32.gmra.mrb[0].mxu0 %v1386
        %v1557 = vpop.f32.mrb[0].mxu0
        %v1558 = vadd.f32 0.0, %v1557
        %v1559 = vpop.f32.mrb[0].mxu0
        %1560 = vmatprep.mubr.f32.mxu0 0.0
        %1561 = vmatmul.mubr.f32.gmra.mrb[0].mxu0 %v1389
        %v1562 = vpop.f32.mrb[0].mxu0
        %v1563 = vadd.f32 0.0, %v1562
        %v1564 = vpop.f32.mrb[0].mxu0
        %1565 = vmatprep.mubr.f32.mxu0 0.0
        %1566 = vmatmul.mubr.f32.gmra.mrb[0].mxu0 %v1392
        %v1567 = vpop.f32.mrb[0].mxu0
        %v1568 = vadd.f32 0.0, %v1567
        %v1569 = vpop.f32.mrb[0].mxu0
        %1570 = vmatprep.mubr.f32.mxu0 0.0
        %1571 = vmatmul.mubr.f32.gmra.mrb[0].mxu0 %v1395
        %v1572 = vpop.f32.mrb[0].mxu0
        %v1573 = vadd.f32 0.0, %v1572
        %v1574 = vpop.f32.mrb[0].mxu0
        %1575 = vmatprep.mubr.f32.mxu0 0.0
        %1576 = vmatmul.mubr.f32.gmra.mrb[0].mxu0 %v1398
        %v1577 = vpop.f32.mrb[0].mxu0
        %v1578 = vadd.f32 0.0, %v1577
        %v1579 = vpop.f32.mrb[0].mxu0
        %1580 = vmatprep.mubr.f32.mxu0 0.0
        %1581 = vmatmul.mubr.f32.gmra.mrb[0].mxu0 %v1401
        %v1582 = vpop.f32.mrb[0].mxu0
        %v1583 = vadd.f32 0.0, %v1582
        %v1584 = vpop.f32.mrb[0].mxu0
        %1585 = vmatprep.mubr.f32.mxu0 0.0
        %1586 = vmatmul.mubr.f32.gmra.mrb[0].mxu0 %v1404
        %v1587 = vpop.f32.mrb[0].mxu0
        %v1588 = vadd.f32 0.0, %v1587
        %v1589 = vpop.f32.mrb[0].mxu0
        %1590 = vmatprep.mubr.f32.mxu0 0.0
        %1591 = vmatmul.mubr.f32.gmra.mrb[0].mxu0 %v1407
        %v1592 = vpop.f32.mrb[0].mxu0
        %v1593 = vadd.f32 0.0, %v1592
        %v1594 = vpop.f32.mrb[0].mxu0
        %1595 = vmatprep.mubr.f32.mxu0 0.0
        %1596 = vmatmul.mubr.f32.gmra.mrb[0].mxu0 %v1410
        %v1597 = vpop.f32.mrb[0].mxu0
        %v1598 = vadd.f32 0.0, %v1597
        %v1599 = vpop.f32.mrb[0].mxu0
        %1600 = vmatprep.mubr.f32.mxu0 0.0
        %1601 = vmatmul.mubr.f32.gmra.mrb[0].mxu0 %v1413
        %v1602 = vpop.f32.mrb[0].mxu0
        %v1603 = vadd.f32 0.0, %v1602
        %v1604 = vpop.f32.mrb[0].mxu0
        %1605 = vmatprep.mubr.f32.mxu0 0.0
        %1606 = vmatmul.mubr.f32.gmra.mrb[0].mxu0 %v1416
        %v1607 = vpop.f32.mrb[0].mxu0
        %v1608 = vadd.f32 0.0, %v1607
        %v1609 = vpop.f32.mrb[0].mxu0
        %1610 = vmatprep.mubr.f32.mxu0 0.0
        %1611 = vmatmul.mubr.f32.gmra.mrb[0].mxu0 %v1419
        %v1612 = vpop.f32.mrb[0].mxu0
        %v1613 = vadd.f32 0.0, %v1612
        %v1614 = vpop.f32.mrb[0].mxu0
        %1615 = vmatprep.mubr.f32.mxu0 0.0
        %1616 = vmatmul.mubr.f32.gmra.mrb[0].mxu0 %v1422
        %v1617 = vpop.f32.mrb[0].mxu0
        %v1618 = vadd.f32 0.0, %v1617
        %v1619 = vpop.f32.mrb[0].mxu0
        %1620 = vmatprep.mubr.f32.mxu0 0.0
        %1621 = vmatmul.mubr.f32.gmra.mrb[0].mxu0 %v1425
        %v1622 = vpop.f32.mrb[0].mxu0
        %v1623 = vadd.f32 0.0, %v1622
        %v1624 = vpop.f32.mrb[0].mxu0
        %1625 = vmatprep.mubr.f32.mxu0 0.0
        %1626 = vmatmul.mubr.f32.gmra.mrb[0].mxu0 %v1428
        %v1627 = vpop.f32.mrb[0].mxu0
        %v1628 = vadd.f32 0.0, %v1627
        %v1629 = vpop.f32.mrb[0].mxu0
        %1630 = vmatprep.mubr.f32.mxu0 0.0
        %1631 = vmatmul.mubr.f32.gmra.mrb[0].mxu0 %v1431
        %v1632 = vpop.f32.mrb[0].mxu0
        %v1633 = vadd.f32 0.0, %v1632
        %v1634 = vpop.f32.mrb[0].mxu0
        %1635 = vmatprep.mubr.f32.mxu0 0.0
        %1636 = vmatmul.mubr.f32.gmra.mrb[0].mxu0 %v1434
        %v1637 = vpop.f32.mrb[0].mxu0
        %v1638 = vadd.f32 0.0, %v1637
        %v1639 = vpop.f32.mrb[0].mxu0
        %1640 = vmatprep.mubr.f32.mxu0 0.0
        %1641 = vmatmul.mubr.f32.gmra.mrb[0].mxu0 %v1437
        %v1642 = vpop.f32.mrb[0].mxu0
        %v1643 = vadd.f32 0.0, %v1642
        %v1644 = vpop.f32.mrb[0].mxu0
        %1645 = vmatprep.mubr.f32.mxu0 0.0
        %1646 = vmatmul.mubr.f32.gmra.mrb[0].mxu0 %v1440
        %v1647 = vpop.f32.mrb[0].mxu0
        %v1648 = vadd.f32 0.0, %v1647
        %v1649 = vpop.f32.mrb[0].mxu0
        %1650 = vmatprep.mubr.f32.mxu0 0.0
        %1651 = vmatmul.mubr.f32.gmra.mrb[0].mxu0 %v1443
        %v1652 = vpop.f32.mrb[0].mxu0
        %v1653 = vadd.f32 0.0, %v1652
        %v1654 = vpop.f32.mrb[0].mxu0
        %1655 = vmatprep.mubr.f32.mxu0 0.0
        %1656 = vmatmul.mubr.f32.gmra.mrb[0].mxu0 %v1446
        %v1657 = vpop.f32.mrb[0].mxu0
        %v1658 = vadd.f32 0.0, %v1657
        %v1659 = vpop.f32.mrb[0].mxu0
        %1660 = vmatprep.mubr.f32.mxu0 0.0
        %1661 = vmatmul.mubr.f32.gmra.mrb[0].mxu0 %v1449
        %v1662 = vpop.f32.mrb[0].mxu0
        %v1663 = vadd.f32 0.0, %v1662
        %v1664 = vpop.f32.mrb[0].mxu0
        %1665 = vmatprep.mubr.f32.mxu0 0.0
        %1666 = vmatmul.mubr.f32.gmra.mrb[0].mxu0 %v1452
        %v1667 = vpop.f32.mrb[0].mxu0
        %v1668 = vadd.f32 0.0, %v1667
        %v1669 = vpop.f32.mrb[0].mxu0
        %1670 = vmatprep.mubr.f32.mxu0 0.0
        %1671 = vmatmul.mubr.f32.gmra.mrb[0].mxu0 %v1455
        %v1672 = vpop.f32.mrb[0].mxu0
        %v1673 = vadd.f32 0.0, %v1672
        %v1674 = vpop.f32.mrb[0].mxu0
        %1675 = vmatprep.mubr.f32.mxu0 0.0
        %1676 = vmatmul.mubr.f32.gmra.mrb[0].mxu0 %v1458
        %v1677 = vpop.f32.mrb[0].mxu0
        %v1678 = vadd.f32 0.0, %v1677
        %v1679 = vpop.f32.mrb[0].mxu0
        %1680 = vmatprep.mubr.f32.mxu0 0.0
        %1681 = vmatmul.mubr.f32.gmra.mrb[0].mxu0 %v1461
        %v1682 = vpop.f32.mrb[0].mxu0
        %v1683 = vadd.f32 0.0, %v1682
        %v1684 = vpop.f32.mrb[0].mxu0
        %1685 = vmatprep.mubr.f32.mxu0 0.0
        %1686 = vmatmul.mubr.f32.gmra.mrb[0].mxu0 %v1464
        %v1687 = vpop.f32.mrb[0].mxu0
        %v1688 = vadd.f32 0.0, %v1687
        %v1689 = vpop.f32.mrb[0].mxu0
        %1690 = vmatprep.mubr.f32.mxu0 0.0
        %1691 = vmatmul.mubr.f32.gmra.mrb[0].mxu0 %v1467
        %v1692 = vpop.f32.mrb[0].mxu0
        %v1693 = vadd.f32 0.0, %v1692
        %v1694 = vpop.f32.mrb[0].mxu0
        %1695 = vmatprep.mubr.f32.mxu0 0.0
        %1696 = vmatmul.mubr.f32.gmra.mrb[0].mxu0 %v1470
        %v1697 = vpop.f32.mrb[0].mxu0
        %v1698 = vadd.f32 0.0, %v1697
        %v1699 = vpop.f32.mrb[0].mxu0
        %1700 = vdwg.mxu0
        %v1701 = vld [vmem:[%s1297] sm:$0xf]
        %v1702 = vld [vmem:[%s1297 + $0x4] sm:$0xf]
        %v1703 = vld [vmem:[%s1297 + $0x8] sm:$0xf]
        %v1704 = vld [vmem:[%s1297 + $0xc] sm:$0xf]
        %v1705 = vld [vmem:[%s1297 + $0x10] sm:$0xf]
        %v1706 = vld [vmem:[%s1297 + $0x14] sm:$0xf]
        %v1707 = vld [vmem:[%s1297 + $0x18] sm:$0xf]
        %v1708 = vld [vmem:[%s1297 + $0x1c] sm:$0xf]
        %v1709 = vld [vmem:[%s1297 + $0x20] sm:$0xf]
        %v1710 = vld [vmem:[%s1297 + $0x24] sm:$0xf]
        %v1711 = vld [vmem:[%s1297 + $0x28] sm:$0xf]
        %v1712 = vld [vmem:[%s1297 + $0x2c] sm:$0xf]
        %v1713 = vld [vmem:[%s1297 + $0x30] sm:$0xf]
        %v1714 = vld [vmem:[%s1297 + $0x34] sm:$0xf]
        %v1715 = vld [vmem:[%s1297 + $0x38] sm:$0xf]
        %v1716 = vld [vmem:[%s1297 + $0x3c] sm:$0xf]
        %v1717 = vld [vmem:[%s1297 + $0x40] sm:$0xf]
        %v1718 = vld [vmem:[%s1297 + $0x44] sm:$0xf]
        %v1719 = vld [vmem:[%s1297 + $0x48] sm:$0xf]
        %v1720 = vld [vmem:[%s1297 + $0x4c] sm:$0xf]
        %v1721 = vld [vmem:[%s1297 + $0x50] sm:$0xf]
        %v1722 = vld [vmem:[%s1297 + $0x54] sm:$0xf]
        %v1723 = vld [vmem:[%s1297 + $0x58] sm:$0xf]
        %v1724 = vld [vmem:[%s1297 + $0x5c] sm:$0xf]
        %v1725 = vld [vmem:[%s1297 + $0x60] sm:$0xf]
        %v1726 = vld [vmem:[%s1297 + $0x64] sm:$0xf]
        %v1727 = vld [vmem:[%s1297 + $0x68] sm:$0xf]
        %v1728 = vld [vmem:[%s1297 + $0x6c] sm:$0xf]
        %v1729 = vld [vmem:[%s1297 + $0x70] sm:$0xf]
        %v1730 = vld [vmem:[%s1297 + $0x74] sm:$0xf]
        %v1731 = vld [vmem:[%s1297 + $0x78] sm:$0xf]
        %v1732 = vld [vmem:[%s1297 + $0x7c] sm:$0xf]
        %v1733 = vunpack.c.l.bf16 %v1701
        %v1734 = vunpack.c.l.bf16 %v1702
        %v1735 = vunpack.c.l.bf16 %v1703
        %v1736 = vunpack.c.l.bf16 %v1704
        %v1737 = vunpack.c.l.bf16 %v1705
        %v1738 = vunpack.c.l.bf16 %v1706
        %v1739 = vunpack.c.l.bf16 %v1707
        %v1740 = vunpack.c.l.bf16 %v1708
        %v1741 = vunpack.c.l.bf16 %v1709
        %v1742 = vunpack.c.l.bf16 %v1710
        %v1743 = vunpack.c.l.bf16 %v1711
        %v1744 = vunpack.c.l.bf16 %v1712
        %v1745 = vunpack.c.l.bf16 %v1713
        %v1746 = vunpack.c.l.bf16 %v1714
        %v1747 = vunpack.c.l.bf16 %v1715
        %v1748 = vunpack.c.l.bf16 %v1716
        %v1749 = vunpack.c.l.bf16 %v1717
        %v1750 = vunpack.c.l.bf16 %v1718
        %v1751 = vunpack.c.l.bf16 %v1719
        %v1752 = vunpack.c.l.bf16 %v1720
        %v1753 = vunpack.c.l.bf16 %v1721
        %v1754 = vunpack.c.l.bf16 %v1722
        %v1755 = vunpack.c.l.bf16 %v1723
        %v1756 = vunpack.c.l.bf16 %v1724
        %v1757 = vunpack.c.l.bf16 %v1725
        %v1758 = vunpack.c.l.bf16 %v1726
        %v1759 = vunpack.c.l.bf16 %v1727
        %v1760 = vunpack.c.l.bf16 %v1728
        %v1761 = vunpack.c.l.bf16 %v1729
        %v1762 = vunpack.c.l.bf16 %v1730
        %v1763 = vunpack.c.l.bf16 %v1731
        %v1764 = vunpack.c.l.bf16 %v1732
        %v1765 = vmul.f32 %v1543, %v1733
        %v1766 = vmul.f32 %v1548, %v1734
        %v1767 = vmul.f32 %v1553, %v1735
        %v1768 = vmul.f32 %v1558, %v1736
        %v1769 = vmul.f32 %v1563, %v1737
        %v1770 = vmul.f32 %v1568, %v1738
        %v1771 = vmul.f32 %v1573, %v1739
        %v1772 = vmul.f32 %v1578, %v1740
        %v1773 = vmul.f32 %v1583, %v1741
        %v1774 = vmul.f32 %v1588, %v1742
        %v1775 = vmul.f32 %v1593, %v1743
        %v1776 = vmul.f32 %v1598, %v1744
        %v1777 = vmul.f32 %v1603, %v1745
        %v1778 = vmul.f32 %v1608, %v1746
        %v1779 = vmul.f32 %v1613, %v1747
        %v1780 = vmul.f32 %v1618, %v1748
        %v1781 = vmul.f32 %v1623, %v1749
        %v1782 = vmul.f32 %v1628, %v1750
        %v1783 = vmul.f32 %v1633, %v1751
        %v1784 = vmul.f32 %v1638, %v1752
        %v1785 = vmul.f32 %v1643, %v1753
        %v1786 = vmul.f32 %v1648, %v1754
        %v1787 = vmul.f32 %v1653, %v1755
        %v1788 = vmul.f32 %v1658, %v1756
        %v1789 = vmul.f32 %v1663, %v1757
        %v1790 = vmul.f32 %v1668, %v1758
        %v1791 = vmul.f32 %v1673, %v1759
        %v1792 = vmul.f32 %v1678, %v1760
        %v1793 = vmul.f32 %v1683, %v1761
        %v1794 = vmul.f32 %v1688, %v1762
        %v1795 = vmul.f32 %v1693, %v1763
        %v1796 = vmul.f32 %v1698, %v1764
        %s1797 = scalar_lea.vmem %s1304, 256 [#allocation3]
        %v1798 = vld [vmem:[%s1797] sm:$0xff]
        %v1799 = vld [vmem:[%s1797 + $0x8] sm:$0xff]
        %v1800 = vld [vmem:[%s1797 + $0x10] sm:$0xff]
        %v1801 = vld [vmem:[%s1797 + $0x18] sm:$0xff]
        %v1802 = vld [vmem:[%s1797 + $0x20] sm:$0xff]
        %v1803 = vld [vmem:[%s1797 + $0x28] sm:$0xff]
        %v1804 = vld [vmem:[%s1797 + $0x30] sm:$0xff]
        %v1805 = vld [vmem:[%s1797 + $0x38] sm:$0xff]
        %v1806 = vld [vmem:[%s1797 + $0x40] sm:$0xff]
        %v1807 = vld [vmem:[%s1797 + $0x48] sm:$0xff]
        %v1808 = vld [vmem:[%s1797 + $0x50] sm:$0xff]
        %v1809 = vld [vmem:[%s1797 + $0x58] sm:$0xff]
        %v1810 = vld [vmem:[%s1797 + $0x60] sm:$0xff]
        %v1811 = vld [vmem:[%s1797 + $0x68] sm:$0xff]
        %v1812 = vld [vmem:[%s1797 + $0x70] sm:$0xff]
        %v1813 = vld [vmem:[%s1797 + $0x78] sm:$0xff]
        %v1814 = vld [vmem:[%s1797 + $0x80] sm:$0xff]
        %v1815 = vld [vmem:[%s1797 + $0x88] sm:$0xff]
        %v1816 = vld [vmem:[%s1797 + $0x90] sm:$0xff]
        %v1817 = vld [vmem:[%s1797 + $0x98] sm:$0xff]
        %v1818 = vld [vmem:[%s1797 + $0xa0] sm:$0xff]
        %v1819 = vld [vmem:[%s1797 + $0xa8] sm:$0xff]
        %v1820 = vld [vmem:[%s1797 + $0xb0] sm:$0xff]
        %v1821 = vld [vmem:[%s1797 + $0xb8] sm:$0xff]
        %v1822 = vld [vmem:[%s1797 + $0xc0] sm:$0xff]
        %v1823 = vld [vmem:[%s1797 + $0xc8] sm:$0xff]
        %v1824 = vld [vmem:[%s1797 + $0xd0] sm:$0xff]
        %v1825 = vld [vmem:[%s1797 + $0xd8] sm:$0xff]
        %v1826 = vld [vmem:[%s1797 + $0xe0] sm:$0xff]
        %v1827 = vld [vmem:[%s1797 + $0xe8] sm:$0xff]
        %v1828 = vld [vmem:[%s1797 + $0xf0] sm:$0xff]
        %v1829 = vld [vmem:[%s1797 + $0xf8] sm:$0xff]
        %v1831 = vsel %vm1375, %v1798, 0
        %v1834 = vsel %vm1375, %v1799, 0
        %v1837 = vsel %vm1375, %v1800, 0
        %v1840 = vsel %vm1375, %v1801, 0
        %v1843 = vsel %vm1375, %v1802, 0
        %v1846 = vsel %vm1375, %v1803, 0
        %v1849 = vsel %vm1375, %v1804, 0
        %v1852 = vsel %vm1375, %v1805, 0
        %v1855 = vsel %vm1375, %v1806, 0
        %v1858 = vsel %vm1375, %v1807, 0
        %v1861 = vsel %vm1375, %v1808, 0
        %v1864 = vsel %vm1375, %v1809, 0
        %v1867 = vsel %vm1375, %v1810, 0
        %v1870 = vsel %vm1375, %v1811, 0
        %v1873 = vsel %vm1375, %v1812, 0
        %v1876 = vsel %vm1375, %v1813, 0
        %v1879 = vsel %vm1375, %v1814, 0
        %v1882 = vsel %vm1375, %v1815, 0
        %v1885 = vsel %vm1375, %v1816, 0
        %v1888 = vsel %vm1375, %v1817, 0
        %v1891 = vsel %vm1375, %v1818, 0
        %v1894 = vsel %vm1375, %v1819, 0
        %v1897 = vsel %vm1375, %v1820, 0
        %v1900 = vsel %vm1375, %v1821, 0
        %v1903 = vsel %vm1375, %v1822, 0
        %v1906 = vsel %vm1375, %v1823, 0
        %v1909 = vsel %vm1375, %v1824, 0
        %v1912 = vsel %vm1375, %v1825, 0
        %v1915 = vsel %vm1375, %v1826, 0
        %v1918 = vsel %vm1375, %v1827, 0
        %v1921 = vsel %vm1375, %v1828, 0
        %v1924 = vsel %vm1375, %v1829, 0
        %1926 = vmatprep.subr.mxu0 0.0
        %1927 = vmatpush1.msra.mxu0 %v1373
        %1928 = vmatprep.subr.mxu0 0.0
        %1929 = vmatpush1.msra.mxu0 %v1474
        %1930 = vmatprep.subr.mxu0 0.0
        %1931 = vmatpush1.msra.mxu0 0.0
        %1932 = vmatprep.subr.mxu0 0.0
        %1933 = vmatpush1.msra.mxu0 0.0
        %1934 = vmatprep.subr.mxu0 0.0
        %1935 = vmatpush1.msra.mxu0 0.0
        %1936 = vmatprep.subr.mxu0 0.0
        %1937 = vmatpush1.msra.mxu0 0.0
        %1938 = vmatprep.subr.mxu0 0.0
        %1939 = vmatpush1.msra.mxu0 0.0
        %1940 = vmatprep.subr.mxu0 0.0
        %1941 = vmatpush1.msra.mxu0 0.0
        %1942 = vmatprep.subr.mxu0 0.0
        %1943 = vmatpush1.msra.mxu0 0.0
        %1944 = vmatprep.subr.mxu0 0.0
        %1945 = vmatpush1.msra.mxu0 0.0
        %1946 = vmatprep.subr.mxu0 0.0
        %1947 = vmatpush1.msra.mxu0 0.0
        %1948 = vmatprep.subr.mxu0 0.0
        %1949 = vmatpush1.msra.mxu0 0.0
        %1950 = vmatprep.subr.mxu0 0.0
        %1951 = vmatpush1.msra.mxu0 0.0
        %1952 = vmatprep.subr.mxu0 0.0
        %1953 = vmatpush1.msra.mxu0 0.0
        %1954 = vmatprep.subr.mxu0 0.0
        %1955 = vmatpush1.msra.mxu0 0.0
        %1956 = vmatprep.subr.mxu0 0.0
        %1957 = vmatpush1.msra.mxu0 0.0
        %1958 = vmatprep.subr.mxu0 0.0
        %1959 = vmatpush1.msra.mxu0 0.0
        %1960 = vmatprep.subr.mxu0 0.0
        %1961 = vmatpush1.msra.mxu0 0.0
        %1962 = vmatprep.subr.mxu0 0.0
        %1963 = vmatpush1.msra.mxu0 0.0
        %1964 = vmatprep.subr.mxu0 0.0
        %1965 = vmatpush1.msra.mxu0 0.0
        %1966 = vmatprep.subr.mxu0 0.0
        %1967 = vmatpush1.msra.mxu0 0.0
        %1968 = vmatprep.subr.mxu0 0.0
        %1969 = vmatpush1.msra.mxu0 0.0
        %1970 = vmatprep.subr.mxu0 0.0
        %1971 = vmatpush1.msra.mxu0 0.0
        %1972 = vmatprep.subr.mxu0 0.0
        %1973 = vmatpush1.msra.mxu0 0.0
        %1974 = vmatprep.subr.mxu0 0.0
        %1975 = vmatpush1.msra.mxu0 0.0
        %1976 = vmatprep.subr.mxu0 0.0
        %1977 = vmatpush1.msra.mxu0 0.0
        %1978 = vmatprep.subr.mxu0 0.0
        %1979 = vmatpush1.msra.mxu0 0.0
        %1980 = vmatprep.subr.mxu0 0.0
        %1981 = vmatpush1.msra.mxu0 0.0
        %1982 = vmatprep.subr.mxu0 0.0
        %1983 = vmatpush1.msra.mxu0 0.0
        %1984 = vmatprep.subr.mxu0 0.0
        %1985 = vmatpush1.msra.mxu0 0.0
        %1986 = vmatprep.subr.mxu0 0.0
        %1987 = vmatpush1.msra.mxu0 0.0
        %1988 = vmatprep.subr.mxu0 0.0
        %1989 = vmatpush1.msra.mxu0 0.0
        %1990 = vmatprep.mubr.f32.mxu0 0.0
        %1991 = vmatmul.mubr.f32.gmra.mrb[0].mxu0 %v1831
        %v1992 = vpop.f32.mrb[0].mxu0
        %v1993 = vadd.f32 0.0, %v1992
        %v1994 = vpop.f32.mrb[0].mxu0
        %1995 = vmatprep.mubr.f32.mxu0 0.0
        %1996 = vmatmul.mubr.f32.gmra.mrb[0].mxu0 %v1834
        %v1997 = vpop.f32.mrb[0].mxu0
        %v1998 = vadd.f32 0.0, %v1997
        %v1999 = vpop.f32.mrb[0].mxu0
        %2000 = vmatprep.mubr.f32.mxu0 0.0
        %2001 = vmatmul.mubr.f32.gmra.mrb[0].mxu0 %v1837
        %v2002 = vpop.f32.mrb[0].mxu0
        %v2003 = vadd.f32 0.0, %v2002
        %v2004 = vpop.f32.mrb[0].mxu0
        %2005 = vmatprep.mubr.f32.mxu0 0.0
        %2006 = vmatmul.mubr.f32.gmra.mrb[0].mxu0 %v1840
        %v2007 = vpop.f32.mrb[0].mxu0
        %v2008 = vadd.f32 0.0, %v2007
        %v2009 = vpop.f32.mrb[0].mxu0
        %2010 = vmatprep.mubr.f32.mxu0 0.0
        %2011 = vmatmul.mubr.f32.gmra.mrb[0].mxu0 %v1843
        %v2012 = vpop.f32.mrb[0].mxu0
        %v2013 = vadd.f32 0.0, %v2012
        %v2014 = vpop.f32.mrb[0].mxu0
        %2015 = vmatprep.mubr.f32.mxu0 0.0
        %2016 = vmatmul.mubr.f32.gmra.mrb[0].mxu0 %v1846
        %v2017 = vpop.f32.mrb[0].mxu0
        %v2018 = vadd.f32 0.0, %v2017
        %v2019 = vpop.f32.mrb[0].mxu0
        %2020 = vmatprep.mubr.f32.mxu0 0.0
        %2021 = vmatmul.mubr.f32.gmra.mrb[0].mxu0 %v1849
        %v2022 = vpop.f32.mrb[0].mxu0
        %v2023 = vadd.f32 0.0, %v2022
        %v2024 = vpop.f32.mrb[0].mxu0
        %2025 = vmatprep.mubr.f32.mxu0 0.0
        %2026 = vmatmul.mubr.f32.gmra.mrb[0].mxu0 %v1852
        %v2027 = vpop.f32.mrb[0].mxu0
        %v2028 = vadd.f32 0.0, %v2027
        %v2029 = vpop.f32.mrb[0].mxu0
        %2030 = vmatprep.mubr.f32.mxu0 0.0
        %2031 = vmatmul.mubr.f32.gmra.mrb[0].mxu0 %v1855
        %v2032 = vpop.f32.mrb[0].mxu0
        %v2033 = vadd.f32 0.0, %v2032
        %v2034 = vpop.f32.mrb[0].mxu0
        %2035 = vmatprep.mubr.f32.mxu0 0.0
        %2036 = vmatmul.mubr.f32.gmra.mrb[0].mxu0 %v1858
        %v2037 = vpop.f32.mrb[0].mxu0
        %v2038 = vadd.f32 0.0, %v2037
        %v2039 = vpop.f32.mrb[0].mxu0
        %2040 = vmatprep.mubr.f32.mxu0 0.0
        %2041 = vmatmul.mubr.f32.gmra.mrb[0].mxu0 %v1861
        %v2042 = vpop.f32.mrb[0].mxu0
        %v2043 = vadd.f32 0.0, %v2042
        %v2044 = vpop.f32.mrb[0].mxu0
        %2045 = vmatprep.mubr.f32.mxu0 0.0
        %2046 = vmatmul.mubr.f32.gmra.mrb[0].mxu0 %v1864
        %v2047 = vpop.f32.mrb[0].mxu0
        %v2048 = vadd.f32 0.0, %v2047
        %v2049 = vpop.f32.mrb[0].mxu0
        %2050 = vmatprep.mubr.f32.mxu0 0.0
        %2051 = vmatmul.mubr.f32.gmra.mrb[0].mxu0 %v1867
        %v2052 = vpop.f32.mrb[0].mxu0
        %v2053 = vadd.f32 0.0, %v2052
        %v2054 = vpop.f32.mrb[0].mxu0
        %2055 = vmatprep.mubr.f32.mxu0 0.0
        %2056 = vmatmul.mubr.f32.gmra.mrb[0].mxu0 %v1870
        %v2057 = vpop.f32.mrb[0].mxu0
        %v2058 = vadd.f32 0.0, %v2057
        %v2059 = vpop.f32.mrb[0].mxu0
        %2060 = vmatprep.mubr.f32.mxu0 0.0
        %2061 = vmatmul.mubr.f32.gmra.mrb[0].mxu0 %v1873
        %v2062 = vpop.f32.mrb[0].mxu0
        %v2063 = vadd.f32 0.0, %v2062
        %v2064 = vpop.f32.mrb[0].mxu0
        %2065 = vmatprep.mubr.f32.mxu0 0.0
        %2066 = vmatmul.mubr.f32.gmra.mrb[0].mxu0 %v1876
        %v2067 = vpop.f32.mrb[0].mxu0
        %v2068 = vadd.f32 0.0, %v2067
        %v2069 = vpop.f32.mrb[0].mxu0
        %2070 = vmatprep.mubr.f32.mxu0 0.0
        %2071 = vmatmul.mubr.f32.gmra.mrb[0].mxu0 %v1879
        %v2072 = vpop.f32.mrb[0].mxu0
        %v2073 = vadd.f32 0.0, %v2072
        %v2074 = vpop.f32.mrb[0].mxu0
        %2075 = vmatprep.mubr.f32.mxu0 0.0
        %2076 = vmatmul.mubr.f32.gmra.mrb[0].mxu0 %v1882
        %v2077 = vpop.f32.mrb[0].mxu0
        %v2078 = vadd.f32 0.0, %v2077
        %v2079 = vpop.f32.mrb[0].mxu0
        %2080 = vmatprep.mubr.f32.mxu0 0.0
        %2081 = vmatmul.mubr.f32.gmra.mrb[0].mxu0 %v1885
        %v2082 = vpop.f32.mrb[0].mxu0
        %v2083 = vadd.f32 0.0, %v2082
        %v2084 = vpop.f32.mrb[0].mxu0
        %2085 = vmatprep.mubr.f32.mxu0 0.0
        %2086 = vmatmul.mubr.f32.gmra.mrb[0].mxu0 %v1888
        %v2087 = vpop.f32.mrb[0].mxu0
        %v2088 = vadd.f32 0.0, %v2087
        %v2089 = vpop.f32.mrb[0].mxu0
        %2090 = vmatprep.mubr.f32.mxu0 0.0
        %2091 = vmatmul.mubr.f32.gmra.mrb[0].mxu0 %v1891
        %v2092 = vpop.f32.mrb[0].mxu0
        %v2093 = vadd.f32 0.0, %v2092
        %v2094 = vpop.f32.mrb[0].mxu0
        %2095 = vmatprep.mubr.f32.mxu0 0.0
        %2096 = vmatmul.mubr.f32.gmra.mrb[0].mxu0 %v1894
        %v2097 = vpop.f32.mrb[0].mxu0
        %v2098 = vadd.f32 0.0, %v2097
        %v2099 = vpop.f32.mrb[0].mxu0
        %2100 = vmatprep.mubr.f32.mxu0 0.0
        %2101 = vmatmul.mubr.f32.gmra.mrb[0].mxu0 %v1897
        %v2102 = vpop.f32.mrb[0].mxu0
        %v2103 = vadd.f32 0.0, %v2102
        %v2104 = vpop.f32.mrb[0].mxu0
        %2105 = vmatprep.mubr.f32.mxu0 0.0
        %2106 = vmatmul.mubr.f32.gmra.mrb[0].mxu0 %v1900
        %v2107 = vpop.f32.mrb[0].mxu0
        %v2108 = vadd.f32 0.0, %v2107
        %v2109 = vpop.f32.mrb[0].mxu0
        %2110 = vmatprep.mubr.f32.mxu0 0.0
        %2111 = vmatmul.mubr.f32.gmra.mrb[0].mxu0 %v1903
        %v2112 = vpop.f32.mrb[0].mxu0
        %v2113 = vadd.f32 0.0, %v2112
        %v2114 = vpop.f32.mrb[0].mxu0
        %2115 = vmatprep.mubr.f32.mxu0 0.0
        %2116 = vmatmul.mubr.f32.gmra.mrb[0].mxu0 %v1906
        %v2117 = vpop.f32.mrb[0].mxu0
        %v2118 = vadd.f32 0.0, %v2117
        %v2119 = vpop.f32.mrb[0].mxu0
        %2120 = vmatprep.mubr.f32.mxu0 0.0
        %2121 = vmatmul.mubr.f32.gmra.mrb[0].mxu0 %v1909
        %v2122 = vpop.f32.mrb[0].mxu0
        %v2123 = vadd.f32 0.0, %v2122
        %v2124 = vpop.f32.mrb[0].mxu0
        %2125 = vmatprep.mubr.f32.mxu0 0.0
        %2126 = vmatmul.mubr.f32.gmra.mrb[0].mxu0 %v1912
        %v2127 = vpop.f32.mrb[0].mxu0
        %v2128 = vadd.f32 0.0, %v2127
        %v2129 = vpop.f32.mrb[0].mxu0
        %2130 = vmatprep.mubr.f32.mxu0 0.0
        %2131 = vmatmul.mubr.f32.gmra.mrb[0].mxu0 %v1915
        %v2132 = vpop.f32.mrb[0].mxu0
        %v2133 = vadd.f32 0.0, %v2132
        %v2134 = vpop.f32.mrb[0].mxu0
        %2135 = vmatprep.mubr.f32.mxu0 0.0
        %2136 = vmatmul.mubr.f32.gmra.mrb[0].mxu0 %v1918
        %v2137 = vpop.f32.mrb[0].mxu0
        %v2138 = vadd.f32 0.0, %v2137
        %v2139 = vpop.f32.mrb[0].mxu0
        %2140 = vmatprep.mubr.f32.mxu0 0.0
        %2141 = vmatmul.mubr.f32.gmra.mrb[0].mxu0 %v1921
        %v2142 = vpop.f32.mrb[0].mxu0
        %v2143 = vadd.f32 0.0, %v2142
        %v2144 = vpop.f32.mrb[0].mxu0
        %2145 = vmatprep.mubr.f32.mxu0 0.0
        %2146 = vmatmul.mubr.f32.gmra.mrb[0].mxu0 %v1924
        %v2147 = vpop.f32.mrb[0].mxu0
        %v2148 = vadd.f32 0.0, %v2147
        %v2149 = vpop.f32.mrb[0].mxu0
        %2150 = vdwg.mxu0
        %s2151 = scalar_lea.vmem %s1297, 128 [#allocation2]
        %v2152 = vld [vmem:[%s2151] sm:$0xf]
        %v2153 = vld [vmem:[%s2151 + $0x4] sm:$0xf]
        %v2154 = vld [vmem:[%s2151 + $0x8] sm:$0xf]
        %v2155 = vld [vmem:[%s2151 + $0xc] sm:$0xf]
        %v2156 = vld [vmem:[%s2151 + $0x10] sm:$0xf]
        %v2157 = vld [vmem:[%s2151 + $0x14] sm:$0xf]
        %v2158 = vld [vmem:[%s2151 + $0x18] sm:$0xf]
        %v2159 = vld [vmem:[%s2151 + $0x1c] sm:$0xf]
        %v2160 = vld [vmem:[%s2151 + $0x20] sm:$0xf]
        %v2161 = vld [vmem:[%s2151 + $0x24] sm:$0xf]
        %v2162 = vld [vmem:[%s2151 + $0x28] sm:$0xf]
        %v2163 = vld [vmem:[%s2151 + $0x2c] sm:$0xf]
        %v2164 = vld [vmem:[%s2151 + $0x30] sm:$0xf]
        %v2165 = vld [vmem:[%s2151 + $0x34] sm:$0xf]
        %v2166 = vld [vmem:[%s2151 + $0x38] sm:$0xf]
        %v2167 = vld [vmem:[%s2151 + $0x3c] sm:$0xf]
        %v2168 = vld [vmem:[%s2151 + $0x40] sm:$0xf]
        %v2169 = vld [vmem:[%s2151 + $0x44] sm:$0xf]
        %v2170 = vld [vmem:[%s2151 + $0x48] sm:$0xf]
        %v2171 = vld [vmem:[%s2151 + $0x4c] sm:$0xf]
        %v2172 = vld [vmem:[%s2151 + $0x50] sm:$0xf]
        %v2173 = vld [vmem:[%s2151 + $0x54] sm:$0xf]
        %v2174 = vld [vmem:[%s2151 + $0x58] sm:$0xf]
        %v2175 = vld [vmem:[%s2151 + $0x5c] sm:$0xf]
        %v2176 = vld [vmem:[%s2151 + $0x60] sm:$0xf]
        %v2177 = vld [vmem:[%s2151 + $0x64] sm:$0xf]
        %v2178 = vld [vmem:[%s2151 + $0x68] sm:$0xf]
        %v2179 = vld [vmem:[%s2151 + $0x6c] sm:$0xf]
        %v2180 = vld [vmem:[%s2151 + $0x70] sm:$0xf]
        %v2181 = vld [vmem:[%s2151 + $0x74] sm:$0xf]
        %v2182 = vld [vmem:[%s2151 + $0x78] sm:$0xf]
        %v2183 = vld [vmem:[%s2151 + $0x7c] sm:$0xf]
        %v2184 = vunpack.c.l.bf16 %v2152
        %v2185 = vunpack.c.l.bf16 %v2153
        %v2186 = vunpack.c.l.bf16 %v2154
        %v2187 = vunpack.c.l.bf16 %v2155
        %v2188 = vunpack.c.l.bf16 %v2156
        %v2189 = vunpack.c.l.bf16 %v2157
        %v2190 = vunpack.c.l.bf16 %v2158
        %v2191 = vunpack.c.l.bf16 %v2159
        %v2192 = vunpack.c.l.bf16 %v2160
        %v2193 = vunpack.c.l.bf16 %v2161
        %v2194 = vunpack.c.l.bf16 %v2162
        %v2195 = vunpack.c.l.bf16 %v2163
        %v2196 = vunpack.c.l.bf16 %v2164
        %v2197 = vunpack.c.l.bf16 %v2165
        %v2198 = vunpack.c.l.bf16 %v2166
        %v2199 = vunpack.c.l.bf16 %v2167
        %v2200 = vunpack.c.l.bf16 %v2168
        %v2201 = vunpack.c.l.bf16 %v2169
        %v2202 = vunpack.c.l.bf16 %v2170
        %v2203 = vunpack.c.l.bf16 %v2171
        %v2204 = vunpack.c.l.bf16 %v2172
        %v2205 = vunpack.c.l.bf16 %v2173
        %v2206 = vunpack.c.l.bf16 %v2174
        %v2207 = vunpack.c.l.bf16 %v2175
        %v2208 = vunpack.c.l.bf16 %v2176
        %v2209 = vunpack.c.l.bf16 %v2177
        %v2210 = vunpack.c.l.bf16 %v2178
        %v2211 = vunpack.c.l.bf16 %v2179
        %v2212 = vunpack.c.l.bf16 %v2180
        %v2213 = vunpack.c.l.bf16 %v2181
        %v2214 = vunpack.c.l.bf16 %v2182
        %v2215 = vunpack.c.l.bf16 %v2183
        %v2216 = vmul.f32 %v1993, %v2184
        %v2217 = vmul.f32 %v1998, %v2185
        %v2218 = vmul.f32 %v2003, %v2186
        %v2219 = vmul.f32 %v2008, %v2187
        %v2220 = vmul.f32 %v2013, %v2188
        %v2221 = vmul.f32 %v2018, %v2189
        %v2222 = vmul.f32 %v2023, %v2190
        %v2223 = vmul.f32 %v2028, %v2191
        %v2224 = vmul.f32 %v2033, %v2192
        %v2225 = vmul.f32 %v2038, %v2193
        %v2226 = vmul.f32 %v2043, %v2194
        %v2227 = vmul.f32 %v2048, %v2195
        %v2228 = vmul.f32 %v2053, %v2196
        %v2229 = vmul.f32 %v2058, %v2197
        %v2230 = vmul.f32 %v2063, %v2198
        %v2231 = vmul.f32 %v2068, %v2199
        %v2232 = vmul.f32 %v2073, %v2200
        %v2233 = vmul.f32 %v2078, %v2201
        %v2234 = vmul.f32 %v2083, %v2202
        %v2235 = vmul.f32 %v2088, %v2203
        %v2236 = vmul.f32 %v2093, %v2204
        %v2237 = vmul.f32 %v2098, %v2205
        %v2238 = vmul.f32 %v2103, %v2206
        %v2239 = vmul.f32 %v2108, %v2207
        %v2240 = vmul.f32 %v2113, %v2208
        %v2241 = vmul.f32 %v2118, %v2209
        %v2242 = vmul.f32 %v2123, %v2210
        %v2243 = vmul.f32 %v2128, %v2211
        %v2244 = vmul.f32 %v2133, %v2212
        %v2245 = vmul.f32 %v2138, %v2213
        %v2246 = vmul.f32 %v2143, %v2214
        %v2247 = vmul.f32 %v2148, %v2215
        %v2248 = vadd.f32 %v1765, %v2216
        %v2249 = vadd.f32 %v1766, %v2217
        %v2250 = vadd.f32 %v1767, %v2218
        %v2251 = vadd.f32 %v1768, %v2219
        %v2252 = vadd.f32 %v1769, %v2220
        %v2253 = vadd.f32 %v1770, %v2221
        %v2254 = vadd.f32 %v1771, %v2222
        %v2255 = vadd.f32 %v1772, %v2223
        %v2256 = vadd.f32 %v1773, %v2224
        %v2257 = vadd.f32 %v1774, %v2225
        %v2258 = vadd.f32 %v1775, %v2226
        %v2259 = vadd.f32 %v1776, %v2227
        %v2260 = vadd.f32 %v1777, %v2228
        %v2261 = vadd.f32 %v1778, %v2229
        %v2262 = vadd.f32 %v1779, %v2230
        %v2263 = vadd.f32 %v1780, %v2231
        %v2264 = vadd.f32 %v1781, %v2232
        %v2265 = vadd.f32 %v1782, %v2233
        %v2266 = vadd.f32 %v1783, %v2234
        %v2267 = vadd.f32 %v1784, %v2235
        %v2268 = vadd.f32 %v1785, %v2236
        %v2269 = vadd.f32 %v1786, %v2237
        %v2270 = vadd.f32 %v1787, %v2238
        %v2271 = vadd.f32 %v1788, %v2239
        %v2272 = vadd.f32 %v1789, %v2240
        %v2273 = vadd.f32 %v1790, %v2241
        %v2274 = vadd.f32 %v1791, %v2242
        %v2275 = vadd.f32 %v1792, %v2243
        %v2276 = vadd.f32 %v1793, %v2244
        %v2277 = vadd.f32 %v1794, %v2245
        %v2278 = vadd.f32 %v1795, %v2246
        %v2279 = vadd.f32 %v1796, %v2247
        %s2280 = scalar_lea.vmem %s1304, 512 [#allocation3]
        %v2281 = vld [vmem:[%s2280] sm:$0xff]
        %v2282 = vld [vmem:[%s2280 + $0x8] sm:$0xff]
        %v2283 = vld [vmem:[%s2280 + $0x10] sm:$0xff]
        %v2284 = vld [vmem:[%s2280 + $0x18] sm:$0xff]
        %v2285 = vld [vmem:[%s2280 + $0x20] sm:$0xff]
        %v2286 = vld [vmem:[%s2280 + $0x28] sm:$0xff]
        %v2287 = vld [vmem:[%s2280 + $0x30] sm:$0xff]
        %v2288 = vld [vmem:[%s2280 + $0x38] sm:$0xff]
        %v2289 = vld [vmem:[%s2280 + $0x40] sm:$0xff]
        %v2290 = vld [vmem:[%s2280 + $0x48] sm:$0xff]
        %v2291 = vld [vmem:[%s2280 + $0x50] sm:$0xff]
        %v2292 = vld [vmem:[%s2280 + $0x58] sm:$0xff]
        %v2293 = vld [vmem:[%s2280 + $0x60] sm:$0xff]
        %v2294 = vld [vmem:[%s2280 + $0x68] sm:$0xff]
        %v2295 = vld [vmem:[%s2280 + $0x70] sm:$0xff]
        %v2296 = vld [vmem:[%s2280 + $0x78] sm:$0xff]
        %v2297 = vld [vmem:[%s2280 + $0x80] sm:$0xff]
        %v2298 = vld [vmem:[%s2280 + $0x88] sm:$0xff]
        %v2299 = vld [vmem:[%s2280 + $0x90] sm:$0xff]
        %v2300 = vld [vmem:[%s2280 + $0x98] sm:$0xff]
        %v2301 = vld [vmem:[%s2280 + $0xa0] sm:$0xff]
        %v2302 = vld [vmem:[%s2280 + $0xa8] sm:$0xff]
        %v2303 = vld [vmem:[%s2280 + $0xb0] sm:$0xff]
        %v2304 = vld [vmem:[%s2280 + $0xb8] sm:$0xff]
        %v2305 = vld [vmem:[%s2280 + $0xc0] sm:$0xff]
        %v2306 = vld [vmem:[%s2280 + $0xc8] sm:$0xff]
        %v2307 = vld [vmem:[%s2280 + $0xd0] sm:$0xff]
        %v2308 = vld [vmem:[%s2280 + $0xd8] sm:$0xff]
        %v2309 = vld [vmem:[%s2280 + $0xe0] sm:$0xff]
        %v2310 = vld [vmem:[%s2280 + $0xe8] sm:$0xff]
        %v2311 = vld [vmem:[%s2280 + $0xf0] sm:$0xff]
        %v2312 = vld [vmem:[%s2280 + $0xf8] sm:$0xff]
        %v2314 = vsel %vm1375, %v2281, 0
        %v2317 = vsel %vm1375, %v2282, 0
        %v2320 = vsel %vm1375, %v2283, 0
        %v2323 = vsel %vm1375, %v2284, 0
        %v2326 = vsel %vm1375, %v2285, 0
        %v2329 = vsel %vm1375, %v2286, 0
        %v2332 = vsel %vm1375, %v2287, 0
        %v2335 = vsel %vm1375, %v2288, 0
        %v2338 = vsel %vm1375, %v2289, 0
        %v2341 = vsel %vm1375, %v2290, 0
        %v2344 = vsel %vm1375, %v2291, 0
        %v2347 = vsel %vm1375, %v2292, 0
        %v2350 = vsel %vm1375, %v2293, 0
        %v2353 = vsel %vm1375, %v2294, 0
        %v2356 = vsel %vm1375, %v2295, 0
        %v2359 = vsel %vm1375, %v2296, 0
        %v2362 = vsel %vm1375, %v2297, 0
        %v2365 = vsel %vm1375, %v2298, 0
        %v2368 = vsel %vm1375, %v2299, 0
        %v2371 = vsel %vm1375, %v2300, 0
        %v2374 = vsel %vm1375, %v2301, 0
        %v2377 = vsel %vm1375, %v2302, 0
        %v2380 = vsel %vm1375, %v2303, 0
        %v2383 = vsel %vm1375, %v2304, 0
        %v2386 = vsel %vm1375, %v2305, 0
        %v2389 = vsel %vm1375, %v2306, 0
        %v2392 = vsel %vm1375, %v2307, 0
        %v2395 = vsel %vm1375, %v2308, 0
        %v2398 = vsel %vm1375, %v2309, 0
        %v2401 = vsel %vm1375, %v2310, 0
        %v2404 = vsel %vm1375, %v2311, 0
        %v2407 = vsel %vm1375, %v2312, 0
        %2409 = vmatprep.subr.mxu0 0.0
        %2410 = vmatpush1.msra.mxu0 %v1373
        %2411 = vmatprep.subr.mxu0 0.0
        %2412 = vmatpush1.msra.mxu0 %v1474
        %2413 = vmatprep.subr.mxu0 0.0
        %2414 = vmatpush1.msra.mxu0 0.0
        %2415 = vmatprep.subr.mxu0 0.0
        %2416 = vmatpush1.msra.mxu0 0.0
        %2417 = vmatprep.subr.mxu0 0.0
        %2418 = vmatpush1.msra.mxu0 0.0
        %2419 = vmatprep.subr.mxu0 0.0
        %2420 = vmatpush1.msra.mxu0 0.0
        %2421 = vmatprep.subr.mxu0 0.0
        %2422 = vmatpush1.msra.mxu0 0.0
        %2423 = vmatprep.subr.mxu0 0.0
        %2424 = vmatpush1.msra.mxu0 0.0
        %2425 = vmatprep.subr.mxu0 0.0
        %2426 = vmatpush1.msra.mxu0 0.0
        %2427 = vmatprep.subr.mxu0 0.0
        %2428 = vmatpush1.msra.mxu0 0.0
        %2429 = vmatprep.subr.mxu0 0.0
        %2430 = vmatpush1.msra.mxu0 0.0
        %2431 = vmatprep.subr.mxu0 0.0
        %2432 = vmatpush1.msra.mxu0 0.0
        %2433 = vmatprep.subr.mxu0 0.0
        %2434 = vmatpush1.msra.mxu0 0.0
        %2435 = vmatprep.subr.mxu0 0.0
        %2436 = vmatpush1.msra.mxu0 0.0
        %2437 = vmatprep.subr.mxu0 0.0
        %2438 = vmatpush1.msra.mxu0 0.0
        %2439 = vmatprep.subr.mxu0 0.0
        %2440 = vmatpush1.msra.mxu0 0.0
        %2441 = vmatprep.subr.mxu0 0.0
        %2442 = vmatpush1.msra.mxu0 0.0
        %2443 = vmatprep.subr.mxu0 0.0
        %2444 = vmatpush1.msra.mxu0 0.0
        %2445 = vmatprep.subr.mxu0 0.0
        %2446 = vmatpush1.msra.mxu0 0.0
        %2447 = vmatprep.subr.mxu0 0.0
        %2448 = vmatpush1.msra.mxu0 0.0
        %2449 = vmatprep.subr.mxu0 0.0
        %2450 = vmatpush1.msra.mxu0 0.0
        %2451 = vmatprep.subr.mxu0 0.0
        %2452 = vmatpush1.msra.mxu0 0.0
        %2453 = vmatprep.subr.mxu0 0.0
        %2454 = vmatpush1.msra.mxu0 0.0
        %2455 = vmatprep.subr.mxu0 0.0
        %2456 = vmatpush1.msra.mxu0 0.0
        %2457 = vmatprep.subr.mxu0 0.0
        %2458 = vmatpush1.msra.mxu0 0.0
        %2459 = vmatprep.subr.mxu0 0.0
        %2460 = vmatpush1.msra.mxu0 0.0
        %2461 = vmatprep.subr.mxu0 0.0
        %2462 = vmatpush1.msra.mxu0 0.0
        %2463 = vmatprep.subr.mxu0 0.0
        %2464 = vmatpush1.msra.mxu0 0.0
        %2465 = vmatprep.subr.mxu0 0.0
        %2466 = vmatpush1.msra.mxu0 0.0
        %2467 = vmatprep.subr.mxu0 0.0
        %2468 = vmatpush1.msra.mxu0 0.0
        %2469 = vmatprep.subr.mxu0 0.0
        %2470 = vmatpush1.msra.mxu0 0.0
        %2471 = vmatprep.subr.mxu0 0.0
        %2472 = vmatpush1.msra.mxu0 0.0
        %2473 = vmatprep.mubr.f32.mxu0 0.0
        %2474 = vmatmul.mubr.f32.gmra.mrb[0].mxu0 %v2314
        %v2475 = vpop.f32.mrb[0].mxu0
        %v2476 = vadd.f32 0.0, %v2475
        %v2477 = vpop.f32.mrb[0].mxu0
        %2478 = vmatprep.mubr.f32.mxu0 0.0
        %2479 = vmatmul.mubr.f32.gmra.mrb[0].mxu0 %v2317
        %v2480 = vpop.f32.mrb[0].mxu0
        %v2481 = vadd.f32 0.0, %v2480
        %v2482 = vpop.f32.mrb[0].mxu0
        %2483 = vmatprep.mubr.f32.mxu0 0.0
        %2484 = vmatmul.mubr.f32.gmra.mrb[0].mxu0 %v2320
        %v2485 = vpop.f32.mrb[0].mxu0
        %v2486 = vadd.f32 0.0, %v2485
        %v2487 = vpop.f32.mrb[0].mxu0
        %2488 = vmatprep.mubr.f32.mxu0 0.0
        %2489 = vmatmul.mubr.f32.gmra.mrb[0].mxu0 %v2323
        %v2490 = vpop.f32.mrb[0].mxu0
        %v2491 = vadd.f32 0.0, %v2490
        %v2492 = vpop.f32.mrb[0].mxu0
        %2493 = vmatprep.mubr.f32.mxu0 0.0
        %2494 = vmatmul.mubr.f32.gmra.mrb[0].mxu0 %v2326
        %v2495 = vpop.f32.mrb[0].mxu0
        %v2496 = vadd.f32 0.0, %v2495
        %v2497 = vpop.f32.mrb[0].mxu0
        %2498 = vmatprep.mubr.f32.mxu0 0.0
        %2499 = vmatmul.mubr.f32.gmra.mrb[0].mxu0 %v2329
        %v2500 = vpop.f32.mrb[0].mxu0
        %v2501 = vadd.f32 0.0, %v2500
        %v2502 = vpop.f32.mrb[0].mxu0
        %2503 = vmatprep.mubr.f32.mxu0 0.0
        %2504 = vmatmul.mubr.f32.gmra.mrb[0].mxu0 %v2332
        %v2505 = vpop.f32.mrb[0].mxu0
        %v2506 = vadd.f32 0.0, %v2505
        %v2507 = vpop.f32.mrb[0].mxu0
        %2508 = vmatprep.mubr.f32.mxu0 0.0
        %2509 = vmatmul.mubr.f32.gmra.mrb[0].mxu0 %v2335
        %v2510 = vpop.f32.mrb[0].mxu0
        %v2511 = vadd.f32 0.0, %v2510
        %v2512 = vpop.f32.mrb[0].mxu0
        %2513 = vmatprep.mubr.f32.mxu0 0.0
        %2514 = vmatmul.mubr.f32.gmra.mrb[0].mxu0 %v2338
        %v2515 = vpop.f32.mrb[0].mxu0
        %v2516 = vadd.f32 0.0, %v2515
        %v2517 = vpop.f32.mrb[0].mxu0
        %2518 = vmatprep.mubr.f32.mxu0 0.0
        %2519 = vmatmul.mubr.f32.gmra.mrb[0].mxu0 %v2341
        %v2520 = vpop.f32.mrb[0].mxu0
        %v2521 = vadd.f32 0.0, %v2520
        %v2522 = vpop.f32.mrb[0].mxu0
        %2523 = vmatprep.mubr.f32.mxu0 0.0
        %2524 = vmatmul.mubr.f32.gmra.mrb[0].mxu0 %v2344
        %v2525 = vpop.f32.mrb[0].mxu0
        %v2526 = vadd.f32 0.0, %v2525
        %v2527 = vpop.f32.mrb[0].mxu0
        %2528 = vmatprep.mubr.f32.mxu0 0.0
        %2529 = vmatmul.mubr.f32.gmra.mrb[0].mxu0 %v2347
        %v2530 = vpop.f32.mrb[0].mxu0
        %v2531 = vadd.f32 0.0, %v2530
        %v2532 = vpop.f32.mrb[0].mxu0
        %2533 = vmatprep.mubr.f32.mxu0 0.0
        %2534 = vmatmul.mubr.f32.gmra.mrb[0].mxu0 %v2350
        %v2535 = vpop.f32.mrb[0].mxu0
        %v2536 = vadd.f32 0.0, %v2535
        %v2537 = vpop.f32.mrb[0].mxu0
        %2538 = vmatprep.mubr.f32.mxu0 0.0
        %2539 = vmatmul.mubr.f32.gmra.mrb[0].mxu0 %v2353
        %v2540 = vpop.f32.mrb[0].mxu0
        %v2541 = vadd.f32 0.0, %v2540
        %v2542 = vpop.f32.mrb[0].mxu0
        %2543 = vmatprep.mubr.f32.mxu0 0.0
        %2544 = vmatmul.mubr.f32.gmra.mrb[0].mxu0 %v2356
        %v2545 = vpop.f32.mrb[0].mxu0
        %v2546 = vadd.f32 0.0, %v2545
        %v2547 = vpop.f32.mrb[0].mxu0
        %2548 = vmatprep.mubr.f32.mxu0 0.0
        %2549 = vmatmul.mubr.f32.gmra.mrb[0].mxu0 %v2359
        %v2550 = vpop.f32.mrb[0].mxu0
        %v2551 = vadd.f32 0.0, %v2550
        %v2552 = vpop.f32.mrb[0].mxu0
        %2553 = vmatprep.mubr.f32.mxu0 0.0
        %2554 = vmatmul.mubr.f32.gmra.mrb[0].mxu0 %v2362
        %v2555 = vpop.f32.mrb[0].mxu0
        %v2556 = vadd.f32 0.0, %v2555
        %v2557 = vpop.f32.mrb[0].mxu0
        %2558 = vmatprep.mubr.f32.mxu0 0.0
        %2559 = vmatmul.mubr.f32.gmra.mrb[0].mxu0 %v2365
        %v2560 = vpop.f32.mrb[0].mxu0
        %v2561 = vadd.f32 0.0, %v2560
        %v2562 = vpop.f32.mrb[0].mxu0
        %2563 = vmatprep.mubr.f32.mxu0 0.0
        %2564 = vmatmul.mubr.f32.gmra.mrb[0].mxu0 %v2368
        %v2565 = vpop.f32.mrb[0].mxu0
        %v2566 = vadd.f32 0.0, %v2565
        %v2567 = vpop.f32.mrb[0].mxu0
        %2568 = vmatprep.mubr.f32.mxu0 0.0
        %2569 = vmatmul.mubr.f32.gmra.mrb[0].mxu0 %v2371
        %v2570 = vpop.f32.mrb[0].mxu0
        %v2571 = vadd.f32 0.0, %v2570
        %v2572 = vpop.f32.mrb[0].mxu0
        %2573 = vmatprep.mubr.f32.mxu0 0.0
        %2574 = vmatmul.mubr.f32.gmra.mrb[0].mxu0 %v2374
        %v2575 = vpop.f32.mrb[0].mxu0
        %v2576 = vadd.f32 0.0, %v2575
        %v2577 = vpop.f32.mrb[0].mxu0
        %2578 = vmatprep.mubr.f32.mxu0 0.0
        %2579 = vmatmul.mubr.f32.gmra.mrb[0].mxu0 %v2377
        %v2580 = vpop.f32.mrb[0].mxu0
        %v2581 = vadd.f32 0.0, %v2580
        %v2582 = vpop.f32.mrb[0].mxu0
        %2583 = vmatprep.mubr.f32.mxu0 0.0
        %2584 = vmatmul.mubr.f32.gmra.mrb[0].mxu0 %v2380
        %v2585 = vpop.f32.mrb[0].mxu0
        %v2586 = vadd.f32 0.0, %v2585
        %v2587 = vpop.f32.mrb[0].mxu0
        %2588 = vmatprep.mubr.f32.mxu0 0.0
        %2589 = vmatmul.mubr.f32.gmra.mrb[0].mxu0 %v2383
        %v2590 = vpop.f32.mrb[0].mxu0
        %v2591 = vadd.f32 0.0, %v2590
        %v2592 = vpop.f32.mrb[0].mxu0
        %2593 = vmatprep.mubr.f32.mxu0 0.0
        %2594 = vmatmul.mubr.f32.gmra.mrb[0].mxu0 %v2386
        %v2595 = vpop.f32.mrb[0].mxu0
        %v2596 = vadd.f32 0.0, %v2595
        %v2597 = vpop.f32.mrb[0].mxu0
        %2598 = vmatprep.mubr.f32.mxu0 0.0
        %2599 = vmatmul.mubr.f32.gmra.mrb[0].mxu0 %v2389
        %v2600 = vpop.f32.mrb[0].mxu0
        %v2601 = vadd.f32 0.0, %v2600
        %v2602 = vpop.f32.mrb[0].mxu0
        %2603 = vmatprep.mubr.f32.mxu0 0.0
        %2604 = vmatmul.mubr.f32.gmra.mrb[0].mxu0 %v2392
        %v2605 = vpop.f32.mrb[0].mxu0
        %v2606 = vadd.f32 0.0, %v2605
        %v2607 = vpop.f32.mrb[0].mxu0
        %2608 = vmatprep.mubr.f32.mxu0 0.0
        %2609 = vmatmul.mubr.f32.gmra.mrb[0].mxu0 %v2395
        %v2610 = vpop.f32.mrb[0].mxu0
        %v2611 = vadd.f32 0.0, %v2610
        %v2612 = vpop.f32.mrb[0].mxu0
        %2613 = vmatprep.mubr.f32.mxu0 0.0
        %2614 = vmatmul.mubr.f32.gmra.mrb[0].mxu0 %v2398
        %v2615 = vpop.f32.mrb[0].mxu0
        %v2616 = vadd.f32 0.0, %v2615
        %v2617 = vpop.f32.mrb[0].mxu0
        %2618 = vmatprep.mubr.f32.mxu0 0.0
        %2619 = vmatmul.mubr.f32.gmra.mrb[0].mxu0 %v2401
        %v2620 = vpop.f32.mrb[0].mxu0
        %v2621 = vadd.f32 0.0, %v2620
        %v2622 = vpop.f32.mrb[0].mxu0
        %2623 = vmatprep.mubr.f32.mxu0 0.0
        %2624 = vmatmul.mubr.f32.gmra.mrb[0].mxu0 %v2404
        %v2625 = vpop.f32.mrb[0].mxu0
        %v2626 = vadd.f32 0.0, %v2625
        %v2627 = vpop.f32.mrb[0].mxu0
        %2628 = vmatprep.mubr.f32.mxu0 0.0
        %2629 = vmatmul.mubr.f32.gmra.mrb[0].mxu0 %v2407
        %v2630 = vpop.f32.mrb[0].mxu0
        %v2631 = vadd.f32 0.0, %v2630
        %v2632 = vpop.f32.mrb[0].mxu0
        %2633 = vdwg.mxu0
        %s2634 = scalar_lea.vmem %s1297, 256 [#allocation2]
        %v2635 = vld [vmem:[%s2634] sm:$0xf]
        %v2636 = vld [vmem:[%s2634 + $0x4] sm:$0xf]
        %v2637 = vld [vmem:[%s2634 + $0x8] sm:$0xf]
        %v2638 = vld [vmem:[%s2634 + $0xc] sm:$0xf]
        %v2639 = vld [vmem:[%s2634 + $0x10] sm:$0xf]
        %v2640 = vld [vmem:[%s2634 + $0x14] sm:$0xf]
        %v2641 = vld [vmem:[%s2634 + $0x18] sm:$0xf]
        %v2642 = vld [vmem:[%s2634 + $0x1c] sm:$0xf]
        %v2643 = vld [vmem:[%s2634 + $0x20] sm:$0xf]
        %v2644 = vld [vmem:[%s2634 + $0x24] sm:$0xf]
        %v2645 = vld [vmem:[%s2634 + $0x28] sm:$0xf]
        %v2646 = vld [vmem:[%s2634 + $0x2c] sm:$0xf]
        %v2647 = vld [vmem:[%s2634 + $0x30] sm:$0xf]
        %v2648 = vld [vmem:[%s2634 + $0x34] sm:$0xf]
        %v2649 = vld [vmem:[%s2634 + $0x38] sm:$0xf]
        %v2650 = vld [vmem:[%s2634 + $0x3c] sm:$0xf]
        %v2651 = vld [vmem:[%s2634 + $0x40] sm:$0xf]
        %v2652 = vld [vmem:[%s2634 + $0x44] sm:$0xf]
        %v2653 = vld [vmem:[%s2634 + $0x48] sm:$0xf]
        %v2654 = vld [vmem:[%s2634 + $0x4c] sm:$0xf]
        %v2655 = vld [vmem:[%s2634 + $0x50] sm:$0xf]
        %v2656 = vld [vmem:[%s2634 + $0x54] sm:$0xf]
        %v2657 = vld [vmem:[%s2634 + $0x58] sm:$0xf]
        %v2658 = vld [vmem:[%s2634 + $0x5c] sm:$0xf]
        %v2659 = vld [vmem:[%s2634 + $0x60] sm:$0xf]
        %v2660 = vld [vmem:[%s2634 + $0x64] sm:$0xf]
        %v2661 = vld [vmem:[%s2634 + $0x68] sm:$0xf]
        %v2662 = vld [vmem:[%s2634 + $0x6c] sm:$0xf]
        %v2663 = vld [vmem:[%s2634 + $0x70] sm:$0xf]
        %v2664 = vld [vmem:[%s2634 + $0x74] sm:$0xf]
        %v2665 = vld [vmem:[%s2634 + $0x78] sm:$0xf]
        %v2666 = vld [vmem:[%s2634 + $0x7c] sm:$0xf]
        %v2667 = vunpack.c.l.bf16 %v2635
        %v2668 = vunpack.c.l.bf16 %v2636
        %v2669 = vunpack.c.l.bf16 %v2637
        %v2670 = vunpack.c.l.bf16 %v2638
        %v2671 = vunpack.c.l.bf16 %v2639
        %v2672 = vunpack.c.l.bf16 %v2640
        %v2673 = vunpack.c.l.bf16 %v2641
        %v2674 = vunpack.c.l.bf16 %v2642
        %v2675 = vunpack.c.l.bf16 %v2643
        %v2676 = vunpack.c.l.bf16 %v2644
        %v2677 = vunpack.c.l.bf16 %v2645
        %v2678 = vunpack.c.l.bf16 %v2646
        %v2679 = vunpack.c.l.bf16 %v2647
        %v2680 = vunpack.c.l.bf16 %v2648
        %v2681 = vunpack.c.l.bf16 %v2649
        %v2682 = vunpack.c.l.bf16 %v2650
        %v2683 = vunpack.c.l.bf16 %v2651
        %v2684 = vunpack.c.l.bf16 %v2652
        %v2685 = vunpack.c.l.bf16 %v2653
        %v2686 = vunpack.c.l.bf16 %v2654
        %v2687 = vunpack.c.l.bf16 %v2655
        %v2688 = vunpack.c.l.bf16 %v2656
        %v2689 = vunpack.c.l.bf16 %v2657
        %v2690 = vunpack.c.l.bf16 %v2658
        %v2691 = vunpack.c.l.bf16 %v2659
        %v2692 = vunpack.c.l.bf16 %v2660
        %v2693 = vunpack.c.l.bf16 %v2661
        %v2694 = vunpack.c.l.bf16 %v2662
        %v2695 = vunpack.c.l.bf16 %v2663
        %v2696 = vunpack.c.l.bf16 %v2664
        %v2697 = vunpack.c.l.bf16 %v2665
        %v2698 = vunpack.c.l.bf16 %v2666
        %v2699 = vmul.f32 %v2476, %v2667
        %v2700 = vmul.f32 %v2481, %v2668
        %v2701 = vmul.f32 %v2486, %v2669
        %v2702 = vmul.f32 %v2491, %v2670
        %v2703 = vmul.f32 %v2496, %v2671
        %v2704 = vmul.f32 %v2501, %v2672
        %v2705 = vmul.f32 %v2506, %v2673
        %v2706 = vmul.f32 %v2511, %v2674
        %v2707 = vmul.f32 %v2516, %v2675
        %v2708 = vmul.f32 %v2521, %v2676
        %v2709 = vmul.f32 %v2526, %v2677
        %v2710 = vmul.f32 %v2531, %v2678
        %v2711 = vmul.f32 %v2536, %v2679
        %v2712 = vmul.f32 %v2541, %v2680
        %v2713 = vmul.f32 %v2546, %v2681
        %v2714 = vmul.f32 %v2551, %v2682
        %v2715 = vmul.f32 %v2556, %v2683
        %v2716 = vmul.f32 %v2561, %v2684
        %v2717 = vmul.f32 %v2566, %v2685
        %v2718 = vmul.f32 %v2571, %v2686
        %v2719 = vmul.f32 %v2576, %v2687
        %v2720 = vmul.f32 %v2581, %v2688
        %v2721 = vmul.f32 %v2586, %v2689
        %v2722 = vmul.f32 %v2591, %v2690
        %v2723 = vmul.f32 %v2596, %v2691
        %v2724 = vmul.f32 %v2601, %v2692
        %v2725 = vmul.f32 %v2606, %v2693
        %v2726 = vmul.f32 %v2611, %v2694
        %v2727 = vmul.f32 %v2616, %v2695
        %v2728 = vmul.f32 %v2621, %v2696
        %v2729 = vmul.f32 %v2626, %v2697
        %v2730 = vmul.f32 %v2631, %v2698
        %v2731 = vadd.f32 %v2248, %v2699
        %v2732 = vadd.f32 %v2249, %v2700
        %v2733 = vadd.f32 %v2250, %v2701
        %v2734 = vadd.f32 %v2251, %v2702
        %v2735 = vadd.f32 %v2252, %v2703
        %v2736 = vadd.f32 %v2253, %v2704
        %v2737 = vadd.f32 %v2254, %v2705
        %v2738 = vadd.f32 %v2255, %v2706
        %v2739 = vadd.f32 %v2256, %v2707
        %v2740 = vadd.f32 %v2257, %v2708
        %v2741 = vadd.f32 %v2258, %v2709
        %v2742 = vadd.f32 %v2259, %v2710
        %v2743 = vadd.f32 %v2260, %v2711
        %v2744 = vadd.f32 %v2261, %v2712
        %v2745 = vadd.f32 %v2262, %v2713
        %v2746 = vadd.f32 %v2263, %v2714
        %v2747 = vadd.f32 %v2264, %v2715
        %v2748 = vadd.f32 %v2265, %v2716
        %v2749 = vadd.f32 %v2266, %v2717
        %v2750 = vadd.f32 %v2267, %v2718
        %v2751 = vadd.f32 %v2268, %v2719
        %v2752 = vadd.f32 %v2269, %v2720
        %v2753 = vadd.f32 %v2270, %v2721
        %v2754 = vadd.f32 %v2271, %v2722
        %v2755 = vadd.f32 %v2272, %v2723
        %v2756 = vadd.f32 %v2273, %v2724
        %v2757 = vadd.f32 %v2274, %v2725
        %v2758 = vadd.f32 %v2275, %v2726
        %v2759 = vadd.f32 %v2276, %v2727
        %v2760 = vadd.f32 %v2277, %v2728
        %v2761 = vadd.f32 %v2278, %v2729
        %v2762 = vadd.f32 %v2279, %v2730
        %s2763 = scalar_lea.vmem %s1304, 768 [#allocation3]
        %v2764 = vld [vmem:[%s2763] sm:$0xff]
        %v2765 = vld [vmem:[%s2763 + $0x8] sm:$0xff]
        %v2766 = vld [vmem:[%s2763 + $0x10] sm:$0xff]
        %v2767 = vld [vmem:[%s2763 + $0x18] sm:$0xff]
        %v2768 = vld [vmem:[%s2763 + $0x20] sm:$0xff]
        %v2769 = vld [vmem:[%s2763 + $0x28] sm:$0xff]
        %v2770 = vld [vmem:[%s2763 + $0x30] sm:$0xff]
        %v2771 = vld [vmem:[%s2763 + $0x38] sm:$0xff]
        %v2772 = vld [vmem:[%s2763 + $0x40] sm:$0xff]
        %v2773 = vld [vmem:[%s2763 + $0x48] sm:$0xff]
        %v2774 = vld [vmem:[%s2763 + $0x50] sm:$0xff]
        %v2775 = vld [vmem:[%s2763 + $0x58] sm:$0xff]
        %v2776 = vld [vmem:[%s2763 + $0x60] sm:$0xff]
        %v2777 = vld [vmem:[%s2763 + $0x68] sm:$0xff]
        %v2778 = vld [vmem:[%s2763 + $0x70] sm:$0xff]
        %v2779 = vld [vmem:[%s2763 + $0x78] sm:$0xff]
        %v2780 = vld [vmem:[%s2763 + $0x80] sm:$0xff]
        %v2781 = vld [vmem:[%s2763 + $0x88] sm:$0xff]
        %v2782 = vld [vmem:[%s2763 + $0x90] sm:$0xff]
        %v2783 = vld [vmem:[%s2763 + $0x98] sm:$0xff]
        %v2784 = vld [vmem:[%s2763 + $0xa0] sm:$0xff]
        %v2785 = vld [vmem:[%s2763 + $0xa8] sm:$0xff]
        %v2786 = vld [vmem:[%s2763 + $0xb0] sm:$0xff]
        %v2787 = vld [vmem:[%s2763 + $0xb8] sm:$0xff]
        %v2788 = vld [vmem:[%s2763 + $0xc0] sm:$0xff]
        %v2789 = vld [vmem:[%s2763 + $0xc8] sm:$0xff]
        %v2790 = vld [vmem:[%s2763 + $0xd0] sm:$0xff]
        %v2791 = vld [vmem:[%s2763 + $0xd8] sm:$0xff]
        %v2792 = vld [vmem:[%s2763 + $0xe0] sm:$0xff]
        %v2793 = vld [vmem:[%s2763 + $0xe8] sm:$0xff]
        %v2794 = vld [vmem:[%s2763 + $0xf0] sm:$0xff]
        %v2795 = vld [vmem:[%s2763 + $0xf8] sm:$0xff]
        %v2797 = vsel %vm1375, %v2764, 0
        %v2800 = vsel %vm1375, %v2765, 0
        %v2803 = vsel %vm1375, %v2766, 0
        %v2806 = vsel %vm1375, %v2767, 0
        %v2809 = vsel %vm1375, %v2768, 0
        %v2812 = vsel %vm1375, %v2769, 0
        %v2815 = vsel %vm1375, %v2770, 0
        %v2818 = vsel %vm1375, %v2771, 0
        %v2821 = vsel %vm1375, %v2772, 0
        %v2824 = vsel %vm1375, %v2773, 0
        %v2827 = vsel %vm1375, %v2774, 0
        %v2830 = vsel %vm1375, %v2775, 0
        %v2833 = vsel %vm1375, %v2776, 0
        %v2836 = vsel %vm1375, %v2777, 0
        %v2839 = vsel %vm1375, %v2778, 0
        %v2842 = vsel %vm1375, %v2779, 0
        %v2845 = vsel %vm1375, %v2780, 0
        %v2848 = vsel %vm1375, %v2781, 0
        %v2851 = vsel %vm1375, %v2782, 0
        %v2854 = vsel %vm1375, %v2783, 0
        %v2857 = vsel %vm1375, %v2784, 0
        %v2860 = vsel %vm1375, %v2785, 0
        %v2863 = vsel %vm1375, %v2786, 0
        %v2866 = vsel %vm1375, %v2787, 0
        %v2869 = vsel %vm1375, %v2788, 0
        %v2872 = vsel %vm1375, %v2789, 0
        %v2875 = vsel %vm1375, %v2790, 0
        %v2878 = vsel %vm1375, %v2791, 0
        %v2881 = vsel %vm1375, %v2792, 0
        %v2884 = vsel %vm1375, %v2793, 0
        %v2887 = vsel %vm1375, %v2794, 0
        %v2890 = vsel %vm1375, %v2795, 0
        %2892 = vmatprep.subr.mxu0 0.0
        %2893 = vmatpush1.msra.mxu0 %v1373
        %2894 = vmatprep.subr.mxu0 0.0
        %2895 = vmatpush1.msra.mxu0 %v1474
        %2896 = vmatprep.subr.mxu0 0.0
        %2897 = vmatpush1.msra.mxu0 0.0
        %2898 = vmatprep.subr.mxu0 0.0
        %2899 = vmatpush1.msra.mxu0 0.0
        %2900 = vmatprep.subr.mxu0 0.0
        %2901 = vmatpush1.msra.mxu0 0.0
        %2902 = vmatprep.subr.mxu0 0.0
        %2903 = vmatpush1.msra.mxu0 0.0
        %2904 = vmatprep.subr.mxu0 0.0
        %2905 = vmatpush1.msra.mxu0 0.0
        %2906 = vmatprep.subr.mxu0 0.0
        %2907 = vmatpush1.msra.mxu0 0.0
        %2908 = vmatprep.subr.mxu0 0.0
        %2909 = vmatpush1.msra.mxu0 0.0
        %2910 = vmatprep.subr.mxu0 0.0
        %2911 = vmatpush1.msra.mxu0 0.0
        %2912 = vmatprep.subr.mxu0 0.0
        %2913 = vmatpush1.msra.mxu0 0.0
        %2914 = vmatprep.subr.mxu0 0.0
        %2915 = vmatpush1.msra.mxu0 0.0
        %2916 = vmatprep.subr.mxu0 0.0
        %2917 = vmatpush1.msra.mxu0 0.0
        %2918 = vmatprep.subr.mxu0 0.0
        %2919 = vmatpush1.msra.mxu0 0.0
        %2920 = vmatprep.subr.mxu0 0.0
        %2921 = vmatpush1.msra.mxu0 0.0
        %2922 = vmatprep.subr.mxu0 0.0
        %2923 = vmatpush1.msra.mxu0 0.0
        %2924 = vmatprep.subr.mxu0 0.0
        %2925 = vmatpush1.msra.mxu0 0.0
        %2926 = vmatprep.subr.mxu0 0.0
        %2927 = vmatpush1.msra.mxu0 0.0
        %2928 = vmatprep.subr.mxu0 0.0
        %2929 = vmatpush1.msra.mxu0 0.0
        %2930 = vmatprep.subr.mxu0 0.0
        %2931 = vmatpush1.msra.mxu0 0.0
        %2932 = vmatprep.subr.mxu0 0.0
        %2933 = vmatpush1.msra.mxu0 0.0
        %2934 = vmatprep.subr.mxu0 0.0
        %2935 = vmatpush1.msra.mxu0 0.0
        %2936 = vmatprep.subr.mxu0 0.0
        %2937 = vmatpush1.msra.mxu0 0.0
        %2938 = vmatprep.subr.mxu0 0.0
        %2939 = vmatpush1.msra.mxu0 0.0
        %2940 = vmatprep.subr.mxu0 0.0
        %2941 = vmatpush1.msra.mxu0 0.0
        %2942 = vmatprep.subr.mxu0 0.0
        %2943 = vmatpush1.msra.mxu0 0.0
        %2944 = vmatprep.subr.mxu0 0.0
        %2945 = vmatpush1.msra.mxu0 0.0
        %2946 = vmatprep.subr.mxu0 0.0
        %2947 = vmatpush1.msra.mxu0 0.0
        %2948 = vmatprep.subr.mxu0 0.0
        %2949 = vmatpush1.msra.mxu0 0.0
        %2950 = vmatprep.subr.mxu0 0.0
        %2951 = vmatpush1.msra.mxu0 0.0
        %2952 = vmatprep.subr.mxu0 0.0
        %2953 = vmatpush1.msra.mxu0 0.0
        %2954 = vmatprep.subr.mxu0 0.0
        %2955 = vmatpush1.msra.mxu0 0.0
        %2956 = vmatprep.mubr.f32.mxu0 0.0
        %2957 = vmatmul.mubr.f32.gmra.mrb[0].mxu0 %v2797
        %v2958 = vpop.f32.mrb[0].mxu0
        %v2959 = vadd.f32 0.0, %v2958
        %v2960 = vpop.f32.mrb[0].mxu0
        %2961 = vmatprep.mubr.f32.mxu0 0.0
        %2962 = vmatmul.mubr.f32.gmra.mrb[0].mxu0 %v2800
        %v2963 = vpop.f32.mrb[0].mxu0
        %v2964 = vadd.f32 0.0, %v2963
        %v2965 = vpop.f32.mrb[0].mxu0
        %2966 = vmatprep.mubr.f32.mxu0 0.0
        %2967 = vmatmul.mubr.f32.gmra.mrb[0].mxu0 %v2803
        %v2968 = vpop.f32.mrb[0].mxu0
        %v2969 = vadd.f32 0.0, %v2968
        %v2970 = vpop.f32.mrb[0].mxu0
        %2971 = vmatprep.mubr.f32.mxu0 0.0
        %2972 = vmatmul.mubr.f32.gmra.mrb[0].mxu0 %v2806
        %v2973 = vpop.f32.mrb[0].mxu0
        %v2974 = vadd.f32 0.0, %v2973
        %v2975 = vpop.f32.mrb[0].mxu0
        %2976 = vmatprep.mubr.f32.mxu0 0.0
        %2977 = vmatmul.mubr.f32.gmra.mrb[0].mxu0 %v2809
        %v2978 = vpop.f32.mrb[0].mxu0
        %v2979 = vadd.f32 0.0, %v2978
        %v2980 = vpop.f32.mrb[0].mxu0
        %2981 = vmatprep.mubr.f32.mxu0 0.0
        %2982 = vmatmul.mubr.f32.gmra.mrb[0].mxu0 %v2812
        %v2983 = vpop.f32.mrb[0].mxu0
        %v2984 = vadd.f32 0.0, %v2983
        %v2985 = vpop.f32.mrb[0].mxu0
        %2986 = vmatprep.mubr.f32.mxu0 0.0
        %2987 = vmatmul.mubr.f32.gmra.mrb[0].mxu0 %v2815
        %v2988 = vpop.f32.mrb[0].mxu0
        %v2989 = vadd.f32 0.0, %v2988
        %v2990 = vpop.f32.mrb[0].mxu0
        %2991 = vmatprep.mubr.f32.mxu0 0.0
        %2992 = vmatmul.mubr.f32.gmra.mrb[0].mxu0 %v2818
        %v2993 = vpop.f32.mrb[0].mxu0
        %v2994 = vadd.f32 0.0, %v2993
        %v2995 = vpop.f32.mrb[0].mxu0
        %2996 = vmatprep.mubr.f32.mxu0 0.0
        %2997 = vmatmul.mubr.f32.gmra.mrb[0].mxu0 %v2821
        %v2998 = vpop.f32.mrb[0].mxu0
        %v2999 = vadd.f32 0.0, %v2998
        %v3000 = vpop.f32.mrb[0].mxu0
        %3001 = vmatprep.mubr.f32.mxu0 0.0
        %3002 = vmatmul.mubr.f32.gmra.mrb[0].mxu0 %v2824
        %v3003 = vpop.f32.mrb[0].mxu0
        %v3004 = vadd.f32 0.0, %v3003
        %v3005 = vpop.f32.mrb[0].mxu0
        %3006 = vmatprep.mubr.f32.mxu0 0.0
        %3007 = vmatmul.mubr.f32.gmra.mrb[0].mxu0 %v2827
        %v3008 = vpop.f32.mrb[0].mxu0
        %v3009 = vadd.f32 0.0, %v3008
        %v3010 = vpop.f32.mrb[0].mxu0
        %3011 = vmatprep.mubr.f32.mxu0 0.0
        %3012 = vmatmul.mubr.f32.gmra.mrb[0].mxu0 %v2830
        %v3013 = vpop.f32.mrb[0].mxu0
        %v3014 = vadd.f32 0.0, %v3013
        %v3015 = vpop.f32.mrb[0].mxu0
        %3016 = vmatprep.mubr.f32.mxu0 0.0
        %3017 = vmatmul.mubr.f32.gmra.mrb[0].mxu0 %v2833
        %v3018 = vpop.f32.mrb[0].mxu0
        %v3019 = vadd.f32 0.0, %v3018
        %v3020 = vpop.f32.mrb[0].mxu0
        %3021 = vmatprep.mubr.f32.mxu0 0.0
        %3022 = vmatmul.mubr.f32.gmra.mrb[0].mxu0 %v2836
        %v3023 = vpop.f32.mrb[0].mxu0
        %v3024 = vadd.f32 0.0, %v3023
        %v3025 = vpop.f32.mrb[0].mxu0
        %3026 = vmatprep.mubr.f32.mxu0 0.0
        %3027 = vmatmul.mubr.f32.gmra.mrb[0].mxu0 %v2839
        %v3028 = vpop.f32.mrb[0].mxu0
        %v3029 = vadd.f32 0.0, %v3028
        %v3030 = vpop.f32.mrb[0].mxu0
        %3031 = vmatprep.mubr.f32.mxu0 0.0
        %3032 = vmatmul.mubr.f32.gmra.mrb[0].mxu0 %v2842
        %v3033 = vpop.f32.mrb[0].mxu0
        %v3034 = vadd.f32 0.0, %v3033
        %v3035 = vpop.f32.mrb[0].mxu0
        %3036 = vmatprep.mubr.f32.mxu0 0.0
        %3037 = vmatmul.mubr.f32.gmra.mrb[0].mxu0 %v2845
        %v3038 = vpop.f32.mrb[0].mxu0
        %v3039 = vadd.f32 0.0, %v3038
        %v3040 = vpop.f32.mrb[0].mxu0
        %3041 = vmatprep.mubr.f32.mxu0 0.0
        %3042 = vmatmul.mubr.f32.gmra.mrb[0].mxu0 %v2848
        %v3043 = vpop.f32.mrb[0].mxu0
        %v3044 = vadd.f32 0.0, %v3043
        %v3045 = vpop.f32.mrb[0].mxu0
        %3046 = vmatprep.mubr.f32.mxu0 0.0
        %3047 = vmatmul.mubr.f32.gmra.mrb[0].mxu0 %v2851
        %v3048 = vpop.f32.mrb[0].mxu0
        %v3049 = vadd.f32 0.0, %v3048
        %v3050 = vpop.f32.mrb[0].mxu0
        %3051 = vmatprep.mubr.f32.mxu0 0.0
        %3052 = vmatmul.mubr.f32.gmra.mrb[0].mxu0 %v2854
        %v3053 = vpop.f32.mrb[0].mxu0
        %v3054 = vadd.f32 0.0, %v3053
        %v3055 = vpop.f32.mrb[0].mxu0
        %3056 = vmatprep.mubr.f32.mxu0 0.0
        %3057 = vmatmul.mubr.f32.gmra.mrb[0].mxu0 %v2857
        %v3058 = vpop.f32.mrb[0].mxu0
        %v3059 = vadd.f32 0.0, %v3058
        %v3060 = vpop.f32.mrb[0].mxu0
        %3061 = vmatprep.mubr.f32.mxu0 0.0
        %3062 = vmatmul.mubr.f32.gmra.mrb[0].mxu0 %v2860
        %v3063 = vpop.f32.mrb[0].mxu0
        %v3064 = vadd.f32 0.0, %v3063
        %v3065 = vpop.f32.mrb[0].mxu0
        %3066 = vmatprep.mubr.f32.mxu0 0.0
        %3067 = vmatmul.mubr.f32.gmra.mrb[0].mxu0 %v2863
        %v3068 = vpop.f32.mrb[0].mxu0
        %v3069 = vadd.f32 0.0, %v3068
        %v3070 = vpop.f32.mrb[0].mxu0
        %3071 = vmatprep.mubr.f32.mxu0 0.0
        %3072 = vmatmul.mubr.f32.gmra.mrb[0].mxu0 %v2866
        %v3073 = vpop.f32.mrb[0].mxu0
        %v3074 = vadd.f32 0.0, %v3073
        %v3075 = vpop.f32.mrb[0].mxu0
        %3076 = vmatprep.mubr.f32.mxu0 0.0
        %3077 = vmatmul.mubr.f32.gmra.mrb[0].mxu0 %v2869
        %v3078 = vpop.f32.mrb[0].mxu0
        %v3079 = vadd.f32 0.0, %v3078
        %v3080 = vpop.f32.mrb[0].mxu0
        %3081 = vmatprep.mubr.f32.mxu0 0.0
        %3082 = vmatmul.mubr.f32.gmra.mrb[0].mxu0 %v2872
        %v3083 = vpop.f32.mrb[0].mxu0
        %v3084 = vadd.f32 0.0, %v3083
        %v3085 = vpop.f32.mrb[0].mxu0
        %3086 = vmatprep.mubr.f32.mxu0 0.0
        %3087 = vmatmul.mubr.f32.gmra.mrb[0].mxu0 %v2875
        %v3088 = vpop.f32.mrb[0].mxu0
        %v3089 = vadd.f32 0.0, %v3088
        %v3090 = vpop.f32.mrb[0].mxu0
        %3091 = vmatprep.mubr.f32.mxu0 0.0
        %3092 = vmatmul.mubr.f32.gmra.mrb[0].mxu0 %v2878
        %v3093 = vpop.f32.mrb[0].mxu0
        %v3094 = vadd.f32 0.0, %v3093
        %v3095 = vpop.f32.mrb[0].mxu0
        %3096 = vmatprep.mubr.f32.mxu0 0.0
        %3097 = vmatmul.mubr.f32.gmra.mrb[0].mxu0 %v2881
        %v3098 = vpop.f32.mrb[0].mxu0
        %v3099 = vadd.f32 0.0, %v3098
        %v3100 = vpop.f32.mrb[0].mxu0
        %3101 = vmatprep.mubr.f32.mxu0 0.0
        %3102 = vmatmul.mubr.f32.gmra.mrb[0].mxu0 %v2884
        %v3103 = vpop.f32.mrb[0].mxu0
        %v3104 = vadd.f32 0.0, %v3103
        %v3105 = vpop.f32.mrb[0].mxu0
        %3106 = vmatprep.mubr.f32.mxu0 0.0
        %3107 = vmatmul.mubr.f32.gmra.mrb[0].mxu0 %v2887
        %v3108 = vpop.f32.mrb[0].mxu0
        %v3109 = vadd.f32 0.0, %v3108
        %v3110 = vpop.f32.mrb[0].mxu0
        %3111 = vmatprep.mubr.f32.mxu0 0.0
        %3112 = vmatmul.mubr.f32.gmra.mrb[0].mxu0 %v2890
        %v3113 = vpop.f32.mrb[0].mxu0
        %v3114 = vadd.f32 0.0, %v3113
        %v3115 = vpop.f32.mrb[0].mxu0
        %3116 = vdwg.mxu0
        %s3117 = scalar_lea.vmem %s1297, 384 [#allocation2]
        %v3118 = vld [vmem:[%s3117] sm:$0xf]
        %v3119 = vld [vmem:[%s3117 + $0x4] sm:$0xf]
        %v3120 = vld [vmem:[%s3117 + $0x8] sm:$0xf]
        %v3121 = vld [vmem:[%s3117 + $0xc] sm:$0xf]
        %v3122 = vld [vmem:[%s3117 + $0x10] sm:$0xf]
        %v3123 = vld [vmem:[%s3117 + $0x14] sm:$0xf]
        %v3124 = vld [vmem:[%s3117 + $0x18] sm:$0xf]
        %v3125 = vld [vmem:[%s3117 + $0x1c] sm:$0xf]
        %v3126 = vld [vmem:[%s3117 + $0x20] sm:$0xf]
        %v3127 = vld [vmem:[%s3117 + $0x24] sm:$0xf]
        %v3128 = vld [vmem:[%s3117 + $0x28] sm:$0xf]
        %v3129 = vld [vmem:[%s3117 + $0x2c] sm:$0xf]
        %v3130 = vld [vmem:[%s3117 + $0x30] sm:$0xf]
        %v3131 = vld [vmem:[%s3117 + $0x34] sm:$0xf]
        %v3132 = vld [vmem:[%s3117 + $0x38] sm:$0xf]
        %v3133 = vld [vmem:[%s3117 + $0x3c] sm:$0xf]
        %v3134 = vld [vmem:[%s3117 + $0x40] sm:$0xf]
        %v3135 = vld [vmem:[%s3117 + $0x44] sm:$0xf]
        %v3136 = vld [vmem:[%s3117 + $0x48] sm:$0xf]
        %v3137 = vld [vmem:[%s3117 + $0x4c] sm:$0xf]
        %v3138 = vld [vmem:[%s3117 + $0x50] sm:$0xf]
        %v3139 = vld [vmem:[%s3117 + $0x54] sm:$0xf]
        %v3140 = vld [vmem:[%s3117 + $0x58] sm:$0xf]
        %v3141 = vld [vmem:[%s3117 + $0x5c] sm:$0xf]
        %v3142 = vld [vmem:[%s3117 + $0x60] sm:$0xf]
        %v3143 = vld [vmem:[%s3117 + $0x64] sm:$0xf]
        %v3144 = vld [vmem:[%s3117 + $0x68] sm:$0xf]
        %v3145 = vld [vmem:[%s3117 + $0x6c] sm:$0xf]
        %v3146 = vld [vmem:[%s3117 + $0x70] sm:$0xf]
        %v3147 = vld [vmem:[%s3117 + $0x74] sm:$0xf]
        %v3148 = vld [vmem:[%s3117 + $0x78] sm:$0xf]
        %v3149 = vld [vmem:[%s3117 + $0x7c] sm:$0xf]
        %v3150 = vunpack.c.l.bf16 %v3118
        %v3151 = vunpack.c.l.bf16 %v3119
        %v3152 = vunpack.c.l.bf16 %v3120
        %v3153 = vunpack.c.l.bf16 %v3121
        %v3154 = vunpack.c.l.bf16 %v3122
        %v3155 = vunpack.c.l.bf16 %v3123
        %v3156 = vunpack.c.l.bf16 %v3124
        %v3157 = vunpack.c.l.bf16 %v3125
        %v3158 = vunpack.c.l.bf16 %v3126
        %v3159 = vunpack.c.l.bf16 %v3127
        %v3160 = vunpack.c.l.bf16 %v3128
        %v3161 = vunpack.c.l.bf16 %v3129
        %v3162 = vunpack.c.l.bf16 %v3130
        %v3163 = vunpack.c.l.bf16 %v3131
        %v3164 = vunpack.c.l.bf16 %v3132
        %v3165 = vunpack.c.l.bf16 %v3133
        %v3166 = vunpack.c.l.bf16 %v3134
        %v3167 = vunpack.c.l.bf16 %v3135
        %v3168 = vunpack.c.l.bf16 %v3136
        %v3169 = vunpack.c.l.bf16 %v3137
        %v3170 = vunpack.c.l.bf16 %v3138
        %v3171 = vunpack.c.l.bf16 %v3139
        %v3172 = vunpack.c.l.bf16 %v3140
        %v3173 = vunpack.c.l.bf16 %v3141
        %v3174 = vunpack.c.l.bf16 %v3142
        %v3175 = vunpack.c.l.bf16 %v3143
        %v3176 = vunpack.c.l.bf16 %v3144
        %v3177 = vunpack.c.l.bf16 %v3145
        %v3178 = vunpack.c.l.bf16 %v3146
        %v3179 = vunpack.c.l.bf16 %v3147
        %v3180 = vunpack.c.l.bf16 %v3148
        %v3181 = vunpack.c.l.bf16 %v3149
        %v3182 = vmul.f32 %v2959, %v3150
        %v3183 = vmul.f32 %v2964, %v3151
        %v3184 = vmul.f32 %v2969, %v3152
        %v3185 = vmul.f32 %v2974, %v3153
        %v3186 = vmul.f32 %v2979, %v3154
        %v3187 = vmul.f32 %v2984, %v3155
        %v3188 = vmul.f32 %v2989, %v3156
        %v3189 = vmul.f32 %v2994, %v3157
        %v3190 = vmul.f32 %v2999, %v3158
        %v3191 = vmul.f32 %v3004, %v3159
        %v3192 = vmul.f32 %v3009, %v3160
        %v3193 = vmul.f32 %v3014, %v3161
        %v3194 = vmul.f32 %v3019, %v3162
        %v3195 = vmul.f32 %v3024, %v3163
        %v3196 = vmul.f32 %v3029, %v3164
        %v3197 = vmul.f32 %v3034, %v3165
        %v3198 = vmul.f32 %v3039, %v3166
        %v3199 = vmul.f32 %v3044, %v3167
        %v3200 = vmul.f32 %v3049, %v3168
        %v3201 = vmul.f32 %v3054, %v3169
        %v3202 = vmul.f32 %v3059, %v3170
        %v3203 = vmul.f32 %v3064, %v3171
        %v3204 = vmul.f32 %v3069, %v3172
        %v3205 = vmul.f32 %v3074, %v3173
        %v3206 = vmul.f32 %v3079, %v3174
        %v3207 = vmul.f32 %v3084, %v3175
        %v3208 = vmul.f32 %v3089, %v3176
        %v3209 = vmul.f32 %v3094, %v3177
        %v3210 = vmul.f32 %v3099, %v3178
        %v3211 = vmul.f32 %v3104, %v3179
        %v3212 = vmul.f32 %v3109, %v3180
        %v3213 = vmul.f32 %v3114, %v3181
        %v3214 = vadd.f32 %v2731, %v3182
        %v3215 = vadd.f32 %v2732, %v3183
        %v3216 = vadd.f32 %v2733, %v3184
        %v3217 = vadd.f32 %v2734, %v3185
        %v3218 = vadd.f32 %v2735, %v3186
        %v3219 = vadd.f32 %v2736, %v3187
        %v3220 = vadd.f32 %v2737, %v3188
        %v3221 = vadd.f32 %v2738, %v3189
        %v3222 = vadd.f32 %v2739, %v3190
        %v3223 = vadd.f32 %v2740, %v3191
        %v3224 = vadd.f32 %v2741, %v3192
        %v3225 = vadd.f32 %v2742, %v3193
        %v3226 = vadd.f32 %v2743, %v3194
        %v3227 = vadd.f32 %v2744, %v3195
        %v3228 = vadd.f32 %v2745, %v3196
        %v3229 = vadd.f32 %v2746, %v3197
        %v3230 = vadd.f32 %v2747, %v3198
        %v3231 = vadd.f32 %v2748, %v3199
        %v3232 = vadd.f32 %v2749, %v3200
        %v3233 = vadd.f32 %v2750, %v3201
        %v3234 = vadd.f32 %v2751, %v3202
        %v3235 = vadd.f32 %v2752, %v3203
        %v3236 = vadd.f32 %v2753, %v3204
        %v3237 = vadd.f32 %v2754, %v3205
        %v3238 = vadd.f32 %v2755, %v3206
        %v3239 = vadd.f32 %v2756, %v3207
        %v3240 = vadd.f32 %v2757, %v3208
        %v3241 = vadd.f32 %v2758, %v3209
        %v3242 = vadd.f32 %v2759, %v3210
        %v3243 = vadd.f32 %v2760, %v3211
        %v3244 = vadd.f32 %v2761, %v3212
        %v3245 = vadd.f32 %v2762, %v3213
        %v3246 = vld [vmem:[%s3] sm:$0xff]
        %v3247 = vld [vmem:[%s3 + $0x8] sm:$0xff]
        %v3248 = vld [vmem:[%s3 + $0x10] sm:$0xff]
        %v3249 = vld [vmem:[%s3 + $0x18] sm:$0xff]
        %v3250 = vld [vmem:[%s3 + $0x20] sm:$0xf]
        %v3251 = vld [vmem:[%s4] sm:$0x1]
        %v3253 = vlaneseq
        %v3254 = vshrl.u32 %v3253, 7
        %v3255 = vsub.s32 0, %v3254
        %v3256 = vrot.slane %v3251, %v3255
        %vm3258 = vcmask 293888
        %v3260 = vsel %vm3258, %v3214, 0
        %v3263 = vsel %vm3258, %v3215, 0
        %v3266 = vsel %vm3258, %v3216, 0
        %v3269 = vsel %vm3258, %v3217, 0
        %v3272 = vsel %vm3258, %v3218, 0
        %v3275 = vsel %vm3258, %v3219, 0
        %v3278 = vsel %vm3258, %v3220, 0
        %v3281 = vsel %vm3258, %v3221, 0
        %v3284 = vsel %vm3258, %v3222, 0
        %v3287 = vsel %vm3258, %v3223, 0
        %v3290 = vsel %vm3258, %v3224, 0
        %v3293 = vsel %vm3258, %v3225, 0
        %v3296 = vsel %vm3258, %v3226, 0
        %v3299 = vsel %vm3258, %v3227, 0
        %v3302 = vsel %vm3258, %v3228, 0
        %v3305 = vsel %vm3258, %v3229, 0
        %v3308 = vsel %vm3258, %v3230, 0
        %v3311 = vsel %vm3258, %v3231, 0
        %v3314 = vsel %vm3258, %v3232, 0
        %v3317 = vsel %vm3258, %v3233, 0
        %v3320 = vsel %vm3258, %v3234, 0
        %v3323 = vsel %vm3258, %v3235, 0
        %v3326 = vsel %vm3258, %v3236, 0
        %v3329 = vsel %vm3258, %v3237, 0
        %v3332 = vsel %vm3258, %v3238, 0
        %v3335 = vsel %vm3258, %v3239, 0
        %v3338 = vsel %vm3258, %v3240, 0
        %v3341 = vsel %vm3258, %v3241, 0
        %v3344 = vsel %vm3258, %v3242, 0
        %v3347 = vsel %vm3258, %v3243, 0
        %v3350 = vsel %vm3258, %v3244, 0
        %v3353 = vsel %vm3258, %v3245, 0
        %vm3355 = vcmask 1043456
        %v3357 = vsel %vm3355, %v3250, 0
        %3359 = vmatprep.subr.mxu0 0.0
        %3360 = vmatpush1.msra.mxu0 %v3246
        %3361 = vmatprep.subr.mxu0 0.0
        %3362 = vmatpush1.msra.mxu0 %v3247
        %3363 = vmatprep.subr.mxu0 0.0
        %3364 = vmatpush1.msra.mxu0 %v3248
        %3365 = vmatprep.subr.mxu0 0.0
        %3366 = vmatpush1.msra.mxu0 %v3249
        %3367 = vmatprep.subr.mxu0 0.0
        %3368 = vmatpush1.msra.mxu0 %v3357
        %3369 = vmatprep.subr.mxu0 0.0
        %3370 = vmatpush1.msra.mxu0 0.0
        %3371 = vmatprep.subr.mxu0 0.0
        %3372 = vmatpush1.msra.mxu0 0.0
        %3373 = vmatprep.subr.mxu0 0.0
        %3374 = vmatpush1.msra.mxu0 0.0
        %3375 = vmatprep.subr.mxu0 0.0
        %3376 = vmatpush1.msra.mxu0 0.0
        %3377 = vmatprep.subr.mxu0 0.0
        %3378 = vmatpush1.msra.mxu0 0.0
        %3379 = vmatprep.subr.mxu0 0.0
        %3380 = vmatpush1.msra.mxu0 0.0
        %3381 = vmatprep.subr.mxu0 0.0
        %3382 = vmatpush1.msra.mxu0 0.0
        %3383 = vmatprep.subr.mxu0 0.0
        %3384 = vmatpush1.msra.mxu0 0.0
        %3385 = vmatprep.subr.mxu0 0.0
        %3386 = vmatpush1.msra.mxu0 0.0
        %3387 = vmatprep.subr.mxu0 0.0
        %3388 = vmatpush1.msra.mxu0 0.0
        %3389 = vmatprep.subr.mxu0 0.0
        %3390 = vmatpush1.msra.mxu0 0.0
        %3391 = vmatprep.subr.mxu0 0.0
        %3392 = vmatpush1.msra.mxu0 0.0
        %3393 = vmatprep.subr.mxu0 0.0
        %3394 = vmatpush1.msra.mxu0 0.0
        %3395 = vmatprep.subr.mxu0 0.0
        %3396 = vmatpush1.msra.mxu0 0.0
        %3397 = vmatprep.subr.mxu0 0.0
        %3398 = vmatpush1.msra.mxu0 0.0
        %3399 = vmatprep.subr.mxu0 0.0
        %3400 = vmatpush1.msra.mxu0 0.0
        %3401 = vmatprep.subr.mxu0 0.0
        %3402 = vmatpush1.msra.mxu0 0.0
        %3403 = vmatprep.subr.mxu0 0.0
        %3404 = vmatpush1.msra.mxu0 0.0
        %3405 = vmatprep.subr.mxu0 0.0
        %3406 = vmatpush1.msra.mxu0 0.0
        %3407 = vmatprep.subr.mxu0 0.0
        %3408 = vmatpush1.msra.mxu0 0.0
        %3409 = vmatprep.subr.mxu0 0.0
        %3410 = vmatpush1.msra.mxu0 0.0
        %3411 = vmatprep.subr.mxu0 0.0
        %3412 = vmatpush1.msra.mxu0 0.0
        %3413 = vmatprep.subr.mxu0 0.0
        %3414 = vmatpush1.msra.mxu0 0.0
        %3415 = vmatprep.subr.mxu0 0.0
        %3416 = vmatpush1.msra.mxu0 0.0
        %3417 = vmatprep.subr.mxu0 0.0
        %3418 = vmatpush1.msra.mxu0 0.0
        %3419 = vmatprep.subr.mxu0 0.0
        %3420 = vmatpush1.msra.mxu0 0.0
        %3421 = vmatprep.subr.mxu0 0.0
        %3422 = vmatpush1.msra.mxu0 0.0
        %3423 = vmatprep.mubr.f32.mxu0 0.0
        %3424 = vmatmul.mubr.f32.gmra.mrb[0].mxu0 %v3260
        %v3425 = vpop.f32.mrb[0].mxu0
        %v3426 = vadd.f32 %v3256, %v3425
        %v3427 = vpop.f32.mrb[0].mxu0
        %3428 = vmatprep.mubr.f32.mxu0 0.0
        %3429 = vmatmul.mubr.f32.gmra.mrb[0].mxu0 %v3263
        %v3430 = vpop.f32.mrb[0].mxu0
        %v3431 = vadd.f32 %v3256, %v3430
        %v3432 = vpop.f32.mrb[0].mxu0
        %3433 = vmatprep.mubr.f32.mxu0 0.0
        %3434 = vmatmul.mubr.f32.gmra.mrb[0].mxu0 %v3266
        %v3435 = vpop.f32.mrb[0].mxu0
        %v3436 = vadd.f32 %v3256, %v3435
        %v3437 = vpop.f32.mrb[0].mxu0
        %3438 = vmatprep.mubr.f32.mxu0 0.0
        %3439 = vmatmul.mubr.f32.gmra.mrb[0].mxu0 %v3269
        %v3440 = vpop.f32.mrb[0].mxu0
        %v3441 = vadd.f32 %v3256, %v3440
        %v3442 = vpop.f32.mrb[0].mxu0
        %3443 = vmatprep.mubr.f32.mxu0 0.0
        %3444 = vmatmul.mubr.f32.gmra.mrb[0].mxu0 %v3272
        %v3445 = vpop.f32.mrb[0].mxu0
        %v3446 = vadd.f32 %v3256, %v3445
        %v3447 = vpop.f32.mrb[0].mxu0
        %3448 = vmatprep.mubr.f32.mxu0 0.0
        %3449 = vmatmul.mubr.f32.gmra.mrb[0].mxu0 %v3275
        %v3450 = vpop.f32.mrb[0].mxu0
        %v3451 = vadd.f32 %v3256, %v3450
        %v3452 = vpop.f32.mrb[0].mxu0
        %3453 = vmatprep.mubr.f32.mxu0 0.0
        %3454 = vmatmul.mubr.f32.gmra.mrb[0].mxu0 %v3278
        %v3455 = vpop.f32.mrb[0].mxu0
        %v3456 = vadd.f32 %v3256, %v3455
        %v3457 = vpop.f32.mrb[0].mxu0
        %3458 = vmatprep.mubr.f32.mxu0 0.0
        %3459 = vmatmul.mubr.f32.gmra.mrb[0].mxu0 %v3281
        %v3460 = vpop.f32.mrb[0].mxu0
        %v3461 = vadd.f32 %v3256, %v3460
        %v3462 = vpop.f32.mrb[0].mxu0
        %3463 = vmatprep.mubr.f32.mxu0 0.0
        %3464 = vmatmul.mubr.f32.gmra.mrb[0].mxu0 %v3284
        %v3465 = vpop.f32.mrb[0].mxu0
        %v3466 = vadd.f32 %v3256, %v3465
        %v3467 = vpop.f32.mrb[0].mxu0
        %3468 = vmatprep.mubr.f32.mxu0 0.0
        %3469 = vmatmul.mubr.f32.gmra.mrb[0].mxu0 %v3287
        %v3470 = vpop.f32.mrb[0].mxu0
        %v3471 = vadd.f32 %v3256, %v3470
        %v3472 = vpop.f32.mrb[0].mxu0
        %3473 = vmatprep.mubr.f32.mxu0 0.0
        %3474 = vmatmul.mubr.f32.gmra.mrb[0].mxu0 %v3290
        %v3475 = vpop.f32.mrb[0].mxu0
        %v3476 = vadd.f32 %v3256, %v3475
        %v3477 = vpop.f32.mrb[0].mxu0
        %3478 = vmatprep.mubr.f32.mxu0 0.0
        %3479 = vmatmul.mubr.f32.gmra.mrb[0].mxu0 %v3293
        %v3480 = vpop.f32.mrb[0].mxu0
        %v3481 = vadd.f32 %v3256, %v3480
        %v3482 = vpop.f32.mrb[0].mxu0
        %3483 = vmatprep.mubr.f32.mxu0 0.0
        %3484 = vmatmul.mubr.f32.gmra.mrb[0].mxu0 %v3296
        %v3485 = vpop.f32.mrb[0].mxu0
        %v3486 = vadd.f32 %v3256, %v3485
        %v3487 = vpop.f32.mrb[0].mxu0
        %3488 = vmatprep.mubr.f32.mxu0 0.0
        %3489 = vmatmul.mubr.f32.gmra.mrb[0].mxu0 %v3299
        %v3490 = vpop.f32.mrb[0].mxu0
        %v3491 = vadd.f32 %v3256, %v3490
        %v3492 = vpop.f32.mrb[0].mxu0
        %3493 = vmatprep.mubr.f32.mxu0 0.0
        %3494 = vmatmul.mubr.f32.gmra.mrb[0].mxu0 %v3302
        %v3495 = vpop.f32.mrb[0].mxu0
        %v3496 = vadd.f32 %v3256, %v3495
        %v3497 = vpop.f32.mrb[0].mxu0
        %3498 = vmatprep.mubr.f32.mxu0 0.0
        %3499 = vmatmul.mubr.f32.gmra.mrb[0].mxu0 %v3305
        %v3500 = vpop.f32.mrb[0].mxu0
        %v3501 = vadd.f32 %v3256, %v3500
        %v3502 = vpop.f32.mrb[0].mxu0
        %3503 = vmatprep.mubr.f32.mxu0 0.0
        %3504 = vmatmul.mubr.f32.gmra.mrb[0].mxu0 %v3308
        %v3505 = vpop.f32.mrb[0].mxu0
        %v3506 = vadd.f32 %v3256, %v3505
        %v3507 = vpop.f32.mrb[0].mxu0
        %3508 = vmatprep.mubr.f32.mxu0 0.0
        %3509 = vmatmul.mubr.f32.gmra.mrb[0].mxu0 %v3311
        %v3510 = vpop.f32.mrb[0].mxu0
        %v3511 = vadd.f32 %v3256, %v3510
        %v3512 = vpop.f32.mrb[0].mxu0
        %3513 = vmatprep.mubr.f32.mxu0 0.0
        %3514 = vmatmul.mubr.f32.gmra.mrb[0].mxu0 %v3314
        %v3515 = vpop.f32.mrb[0].mxu0
        %v3516 = vadd.f32 %v3256, %v3515
        %v3517 = vpop.f32.mrb[0].mxu0
        %3518 = vmatprep.mubr.f32.mxu0 0.0
        %3519 = vmatmul.mubr.f32.gmra.mrb[0].mxu0 %v3317
        %v3520 = vpop.f32.mrb[0].mxu0
        %v3521 = vadd.f32 %v3256, %v3520
        %v3522 = vpop.f32.mrb[0].mxu0
        %3523 = vmatprep.mubr.f32.mxu0 0.0
        %3524 = vmatmul.mubr.f32.gmra.mrb[0].mxu0 %v3320
        %v3525 = vpop.f32.mrb[0].mxu0
        %v3526 = vadd.f32 %v3256, %v3525
        %v3527 = vpop.f32.mrb[0].mxu0
        %3528 = vmatprep.mubr.f32.mxu0 0.0
        %3529 = vmatmul.mubr.f32.gmra.mrb[0].mxu0 %v3323
        %v3530 = vpop.f32.mrb[0].mxu0
        %v3531 = vadd.f32 %v3256, %v3530
        %v3532 = vpop.f32.mrb[0].mxu0
        %3533 = vmatprep.mubr.f32.mxu0 0.0
        %3534 = vmatmul.mubr.f32.gmra.mrb[0].mxu0 %v3326
        %v3535 = vpop.f32.mrb[0].mxu0
        %v3536 = vadd.f32 %v3256, %v3535
        %v3537 = vpop.f32.mrb[0].mxu0
        %3538 = vmatprep.mubr.f32.mxu0 0.0
        %3539 = vmatmul.mubr.f32.gmra.mrb[0].mxu0 %v3329
        %v3540 = vpop.f32.mrb[0].mxu0
        %v3541 = vadd.f32 %v3256, %v3540
        %v3542 = vpop.f32.mrb[0].mxu0
        %3543 = vmatprep.mubr.f32.mxu0 0.0
        %3544 = vmatmul.mubr.f32.gmra.mrb[0].mxu0 %v3332
        %v3545 = vpop.f32.mrb[0].mxu0
        %v3546 = vadd.f32 %v3256, %v3545
        %v3547 = vpop.f32.mrb[0].mxu0
        %3548 = vmatprep.mubr.f32.mxu0 0.0
        %3549 = vmatmul.mubr.f32.gmra.mrb[0].mxu0 %v3335
        %v3550 = vpop.f32.mrb[0].mxu0
        %v3551 = vadd.f32 %v3256, %v3550
        %v3552 = vpop.f32.mrb[0].mxu0
        %3553 = vmatprep.mubr.f32.mxu0 0.0
        %3554 = vmatmul.mubr.f32.gmra.mrb[0].mxu0 %v3338
        %v3555 = vpop.f32.mrb[0].mxu0
        %v3556 = vadd.f32 %v3256, %v3555
        %v3557 = vpop.f32.mrb[0].mxu0
        %3558 = vmatprep.mubr.f32.mxu0 0.0
        %3559 = vmatmul.mubr.f32.gmra.mrb[0].mxu0 %v3341
        %v3560 = vpop.f32.mrb[0].mxu0
        %v3561 = vadd.f32 %v3256, %v3560
        %v3562 = vpop.f32.mrb[0].mxu0
        %3563 = vmatprep.mubr.f32.mxu0 0.0
        %3564 = vmatmul.mubr.f32.gmra.mrb[0].mxu0 %v3344
        %v3565 = vpop.f32.mrb[0].mxu0
        %v3566 = vadd.f32 %v3256, %v3565
        %v3567 = vpop.f32.mrb[0].mxu0
        %3568 = vmatprep.mubr.f32.mxu0 0.0
        %3569 = vmatmul.mubr.f32.gmra.mrb[0].mxu0 %v3347
        %v3570 = vpop.f32.mrb[0].mxu0
        %v3571 = vadd.f32 %v3256, %v3570
        %v3572 = vpop.f32.mrb[0].mxu0
        %3573 = vmatprep.mubr.f32.mxu0 0.0
        %3574 = vmatmul.mubr.f32.gmra.mrb[0].mxu0 %v3350
        %v3575 = vpop.f32.mrb[0].mxu0
        %v3576 = vadd.f32 %v3256, %v3575
        %v3577 = vpop.f32.mrb[0].mxu0
        %3578 = vmatprep.mubr.f32.mxu0 0.0
        %3579 = vmatmul.mubr.f32.gmra.mrb[0].mxu0 %v3353
        %v3580 = vpop.f32.mrb[0].mxu0
        %v3581 = vadd.f32 %v3256, %v3580
        %v3582 = vpop.f32.mrb[0].mxu0
        %3583 = vdwg.mxu0
        %v3584 = vmax.f32 %v3426, 0.0
        %v3585 = vmax.f32 %v3431, 0.0
        %v3586 = vmax.f32 %v3436, 0.0
        %v3587 = vmax.f32 %v3441, 0.0
        %v3588 = vmax.f32 %v3446, 0.0
        %v3589 = vmax.f32 %v3451, 0.0
        %v3590 = vmax.f32 %v3456, 0.0
        %v3591 = vmax.f32 %v3461, 0.0
        %v3592 = vmax.f32 %v3466, 0.0
        %v3593 = vmax.f32 %v3471, 0.0
        %v3594 = vmax.f32 %v3476, 0.0
        %v3595 = vmax.f32 %v3481, 0.0
        %v3596 = vmax.f32 %v3486, 0.0
        %v3597 = vmax.f32 %v3491, 0.0
        %v3598 = vmax.f32 %v3496, 0.0
        %v3599 = vmax.f32 %v3501, 0.0
        %v3600 = vmax.f32 %v3506, 0.0
        %v3601 = vmax.f32 %v3511, 0.0
        %v3602 = vmax.f32 %v3516, 0.0
        %v3603 = vmax.f32 %v3521, 0.0
        %v3604 = vmax.f32 %v3526, 0.0
        %v3605 = vmax.f32 %v3531, 0.0
        %v3606 = vmax.f32 %v3536, 0.0
        %v3607 = vmax.f32 %v3541, 0.0
        %v3608 = vmax.f32 %v3546, 0.0
        %v3609 = vmax.f32 %v3551, 0.0
        %v3610 = vmax.f32 %v3556, 0.0
        %v3611 = vmax.f32 %v3561, 0.0
        %v3612 = vmax.f32 %v3566, 0.0
        %v3613 = vmax.f32 %v3571, 0.0
        %v3614 = vmax.f32 %v3576, 0.0
        %v3615 = vmax.f32 %v3581, 0.0
        %vm3616 = vcmask 64512
        %3617 = vst.msk [vmem:[%s1339] sm:$0xff] %vm3616, %v3584
        %3618 = vst.msk [vmem:[%s1339 + $0x8] sm:$0xff] %vm3616, %v3585
        %3619 = vst.msk [vmem:[%s1339 + $0x10] sm:$0xff] %vm3616, %v3586
        %3620 = vst.msk [vmem:[%s1339 + $0x18] sm:$0xff] %vm3616, %v3587
        %3621 = vst.msk [vmem:[%s1339 + $0x20] sm:$0xff] %vm3616, %v3588
        %3622 = vst.msk [vmem:[%s1339 + $0x28] sm:$0xff] %vm3616, %v3589
        %3623 = vst.msk [vmem:[%s1339 + $0x30] sm:$0xff] %vm3616, %v3590
        %3624 = vst.msk [vmem:[%s1339 + $0x38] sm:$0xff] %vm3616, %v3591
        %3625 = vst.msk [vmem:[%s1339 + $0x40] sm:$0xff] %vm3616, %v3592
        %3626 = vst.msk [vmem:[%s1339 + $0x48] sm:$0xff] %vm3616, %v3593
        %3627 = vst.msk [vmem:[%s1339 + $0x50] sm:$0xff] %vm3616, %v3594
        %3628 = vst.msk [vmem:[%s1339 + $0x58] sm:$0xff] %vm3616, %v3595
        %3629 = vst.msk [vmem:[%s1339 + $0x60] sm:$0xff] %vm3616, %v3596
        %3630 = vst.msk [vmem:[%s1339 + $0x68] sm:$0xff] %vm3616, %v3597
        %3631 = vst.msk [vmem:[%s1339 + $0x70] sm:$0xff] %vm3616, %v3598
        %3632 = vst.msk [vmem:[%s1339 + $0x78] sm:$0xff] %vm3616, %v3599
        %3633 = vst.msk [vmem:[%s1339 + $0x80] sm:$0xff] %vm3616, %v3600
        %3634 = vst.msk [vmem:[%s1339 + $0x88] sm:$0xff] %vm3616, %v3601
        %3635 = vst.msk [vmem:[%s1339 + $0x90] sm:$0xff] %vm3616, %v3602
        %3636 = vst.msk [vmem:[%s1339 + $0x98] sm:$0xff] %vm3616, %v3603
        %3637 = vst.msk [vmem:[%s1339 + $0xa0] sm:$0xff] %vm3616, %v3604
        %3638 = vst.msk [vmem:[%s1339 + $0xa8] sm:$0xff] %vm3616, %v3605
        %3639 = vst.msk [vmem:[%s1339 + $0xb0] sm:$0xff] %vm3616, %v3606
        %3640 = vst.msk [vmem:[%s1339 + $0xb8] sm:$0xff] %vm3616, %v3607
        %3641 = vst.msk [vmem:[%s1339 + $0xc0] sm:$0xff] %vm3616, %v3608
        %3642 = vst.msk [vmem:[%s1339 + $0xc8] sm:$0xff] %vm3616, %v3609
        %3643 = vst.msk [vmem:[%s1339 + $0xd0] sm:$0xff] %vm3616, %v3610
        %3644 = vst.msk [vmem:[%s1339 + $0xd8] sm:$0xff] %vm3616, %v3611
        %3645 = vst.msk [vmem:[%s1339 + $0xe0] sm:$0xff] %vm3616, %v3612
        %3646 = vst.msk [vmem:[%s1339 + $0xe8] sm:$0xff] %vm3616, %v3613
        %3647 = vst.msk [vmem:[%s1339 + $0xf0] sm:$0xff] %vm3616, %v3614
        %3648 = vst.msk [vmem:[%s1339 + $0xf8] sm:$0xff] %vm3616, %v3615
        %s3649 = smul.u32 32, %s16
        %p3650 = scmp.lt.s32.totalorder %s3649, 63
        %s3651 = scalar_select %p3650, %s3649, 63
        %s3652 = smul.addr %s3651, 8
        %s3653 = scalar_lea.vmem %s5, %s3652
        // Predicated region
        $region120: #{_lambda_.3} parent=110 // pred_check
          %p3654 = pneg %p149
        $region121: #{_lambda_.3} parent=110 // pred_check_branch
          %3656 = sbr.rel (%p3654) target = $region123
        $region122: #{_lambda_.3} parent=110 // pred_region
          %s3657 = smul.u32 32, %s16
        $region123: #{_lambda_.3} parent=110 // pred_fallthru
          _
      $region111: #{_lambda_.3} parent=5 // pred_fallthru
        _
      %p3658 = scmp.le.s32.totalorder 2, %s11
      // Predicated region
      $region124: #{_lambda_.3} parent=5 // pred_check
        %p3659 = pneg %p3658
      $region125: #{_lambda_.3} parent=5 // pred_check_branch
        %3661 = sbr.rel (%p3659) target = $region127
      $region126: #{_lambda_.3} parent=5 // pred_region
        %s3662 = ssub.s32 %s11, 2
        // Predicated region
        $region128: #{_lambda_.3} parent=126 // pred_check
          %p3663 = pneg %p155
        $region129: #{_lambda_.3} parent=126 // pred_check_branch
          %3665 = sbr.rel (%p3663) target = $region131
        $region130: #{_lambda_.3} parent=126 // pred_region
          %s3666 = smul.u32 32, %s17
          %p3667 = scmp.lt.s32.totalorder %s3666, 63
          %s3668 = scalar_select %p3667, %s3666, 63
          %s3669 = smul.addr %s3668, 8
          %s3670 = scalar_lea.vmem %s5, %s3669
        $region131: #{_lambda_.3} parent=126 // pred_fallthru
          _
      $region127: #{_lambda_.3} parent=5 // pred_fallthru
        _
    $region6: #{_lambda_.3} parent=1 // loop_footer
      %s15 = sadd.s32 1, %s11
    $region7: #{_lambda_.3} parent=1 // loop_footer_branch
      %10 = sbr.rel target = $region3
    $region8: #{_lambda_.3} parent=1 // loop_exit
      _

</llo_original>
